<compile_context>
chip_gen: v7x
topology: tpu7x:2x2x1
jax: 0.10.0
libtpu: 0.0.40
codegen_flags: <defaults>
</compile_context>

<pallas_src>
import functools

import jax
import jax.numpy as jnp
from jax import lax
from jax.experimental import pallas as pl
from jax.experimental.pallas import tpu as pltpu


def _ml1d_kernel(cw_ref, x_ref, u_ref, v_ref, out_ref, *,
                 nblocks, n_valid, precision):
    """Whole ML1d forward (all nblocks) in a single invocation.

    cw_ref : SMEM (7W+1,) = [w1 (W,3) row-major | b1 (W,) | w2 (W,3) | b2]
    x_ref  : VMEM (B, Lp) zero-padded input (aliased with out_ref's HBM)
    u_ref  : VMEM (Lp, W) = Phi B^T        (zero rows for l >= n_valid)
    v_ref  : VMEM (W, Lp) = A^T Phi^T / L  (zero cols for l >= n_valid)
    """
    B, Lp = x_ref.shape
    W = u_ref.shape[1]
    padded = n_valid < Lp  # static

    # ---- hoist all conv scalars out of the per-width / per-block loops ----
    w1 = [[cw_ref[3 * w + j] for j in range(3)] for w in range(W)]
    b1 = [cw_ref[3 * W + w] for w in range(W)]
    w2 = [[cw_ref[4 * W + 3 * w + j] for j in range(3)] for w in range(W)]
    b2 = cw_ref[7 * W]

    lane = lax.broadcasted_iota(jnp.int32, (B, Lp), 1)
    valid = lane < n_valid

    # Zero-'same'-padded neighbor shifts via XLU lane rotation.  When the
    # sequence is padded, the wrapped lane is zero by the pad-lane invariant
    # (all lanes >= n_valid are kept at 0); otherwise zero it explicitly.
    def shift_right_zero(t):           # t[:, l-1], zero at l = 0
        r = pltpu.roll(t, 1, axis=1)
        return r if padded else jnp.where(lane == 0, 0.0, r)

    def shift_left_zero(t):            # t[:, l+1], zero at l = n_valid-1
        r = pltpu.roll(t, Lp - 1, axis=1)
        return r if padded else jnp.where(lane == Lp - 1, 0.0, r)

    u = u_ref[...]                     # (Lp, W) resident, read once
    v = v_ref[...]                     # (W, Lp) resident, read once
    x = x_ref[...]                     # (B, Lp)
    if padded:
        x = jnp.where(valid, x, 0.0)   # establish pad-lane == 0 invariant

    # Static unrolled block recurrence (nblocks is small and static).
    for _ in range(nblocks):
        x_m1 = shift_right_zero(x)
        x_p1 = shift_left_zero(x)

        # --- local correction: conv(1->W,k3) + ReLU + conv(W->1,k3), fused.
        # Width is reduced on the fly: no (B, W, Lp) temporary; the second
        # conv's boundary shifts act on three (B, Lp) partial sums only.
        h = jnp.maximum(w1[0][0] * x_m1 + w1[0][1] * x + w1[0][2] * x_p1
                        + b1[0], 0.0)
        s0 = w2[0][0] * h
        s1 = w2[0][1] * h
        s2 = w2[0][2] * h
        for w in range(1, W):
            h = jnp.maximum(w1[w][0] * x_m1 + w1[w][1] * x + w1[w][2] * x_p1
                            + b1[w], 0.0)
            s0 = s0 + w2[w][0] * h
            s1 = s1 + w2[w][1] * h
            s2 = s2 + w2[w][2] * h
        if padded:
            # Zero the pad region so the halo of the second conv (s0[l-1] at
            # l=0 via wrap, s2[l+1] at l=n_valid-1) is the reference's zero pad.
            s0 = jnp.where(valid, s0, 0.0)
            s2 = jnp.where(valid, s2, 0.0)
        y1 = shift_right_zero(s0) + s1 + shift_left_zero(s2) + b2

        # --- smooth kernel integral, low rank: y2 = (1/L) x K^T = (x @ U) @ V
        xu = jnp.dot(x, u, preferred_element_type=jnp.float32,
                     precision=precision)                       # (B, W)
        y2 = jnp.dot(xu, v, preferred_element_type=jnp.float32,
                     precision=precision)                       # (B, Lp)

        x = y1 + y2
        if padded:
            x = jnp.where(valid, x, 0.0)   # re-establish pad-lane invariant

    out_ref[...] = x.astype(out_ref.dtype)


@functools.partial(jax.jit, static_argnames=("nblocks",))
def ml1d_forward(x, a, params, *, nblocks):
    """x: (B, L) f32; a accepted but unused (as in the PyTorch forward).

    Returns (B, 1, L), matching the PyTorch module output layout.
    """
    del a  # never used in the PyTorch forward()
    u, v = params["u"], params["v"]
    w1, b1, w2, b2 = params["w1"], params["b1"], params["w2"], params["b2"]
    B, L = x.shape
    W = u.shape[1]

    # Lane-dense padded length (multiple of 128 -> unmasked vst, full vregs).
    Lp = ((L + 127) // 128) * 128
    x_p = jnp.pad(x.astype(jnp.float32), ((0, 0), (0, Lp - L)))
    u_p = jnp.pad(u.astype(jnp.float32), ((0, Lp - L), (0, 0)))
    v_p = jnp.pad(v.astype(jnp.float32), ((0, 0), (0, Lp - L)))
    # One flat SMEM word vector (avoids 2-D SMEM padding to [8,128] words).
    cw = jnp.concatenate([w1.reshape(-1), b1, w2.reshape(-1), b2]
                         ).astype(jnp.float32)                    # (7W+1,)

    # HIGHEST keeps the toy-shape validation tight; at realistic L use the
    # native single-pass MXU path (and ideally bf16 U/V -- see TODO above).
    precision = (lax.Precision.HIGHEST if L <= 512
                 else lax.Precision.DEFAULT)

    # Explicit VMEM budget: resident x/out/U/V, never below the 32 MiB default.
    resident = 4 * (2 * B * Lp + 2 * W * Lp)
    vmem_bytes = int(min(64 << 20, max(32 << 20, 2 * resident)))

    kernel = functools.partial(_ml1d_kernel, nblocks=nblocks, n_valid=L,
                               precision=precision)

    out = pl.pallas_call(
        kernel,
        out_shape=jax.ShapeDtypeStruct((B, Lp), jnp.float32),
        # No grid: single invocation, whole arrays resident (single-buffered).
        in_specs=[
            pl.BlockSpec(memory_space=pltpu.MemorySpace.SMEM),   # cw (7W+1,)
            pl.BlockSpec(memory_space=pltpu.MemorySpace.VMEM),   # x  (B, Lp)
            pl.BlockSpec(memory_space=pltpu.MemorySpace.VMEM),   # U  (Lp, W)
            pl.BlockSpec(memory_space=pltpu.MemorySpace.VMEM),   # V  (W, Lp)
        ],
        out_specs=pl.BlockSpec(memory_space=pltpu.MemorySpace.VMEM),
        # x_p (input index 1) shares its HBM buffer with the output.
        input_output_aliases={1: 0},
        compiler_params=pltpu.CompilerParams(vmem_limit_bytes=vmem_bytes),
    )(cw, x_p, u_p, v_p)
    return out[:, :L][:, None, :]                                # (B, 1, L)


def make_params(key, L, modes, width):
    """Deterministic parameters. deepcopy => identical per block, stored once.

    NOTE: if per-block kernels/convs ever differ (trained independently), the
    dedup here must be replaced by per-block parameter arrays.
    """
    k_a, k_b, k_w1, k_b1, k_w2, k_b2 = jax.random.split(key, 6)

    # SmoothKernel1d: K = Phi @ A @ B @ Phi^T, Phi = [1, cos(pi k t), sin(pi k t)]
    t = (jnp.arange(L, dtype=jnp.float32) + 0.5) / L
    feats = [jnp.ones_like(t)]
    for k in range(1, modes + 1):
        feats += [jnp.cos(jnp.pi * k * t), jnp.sin(jnp.pi * k * t)]
    phi = jnp.stack(feats, axis=1)                      # (L, F), F = 2*modes+1
    F = phi.shape[1]
    A = 0.3 * jax.random.normal(k_a, (F, width), jnp.float32)
    Bm = 0.3 * jax.random.normal(k_b, (width, F), jnp.float32)
    # y2 = (1/L) x @ K^T = x @ (Phi B^T) @ (A^T Phi^T / L) -- keep the factors.
    u = phi @ Bm.T                                      # (L, width)
    v = (A.T @ phi.T) / L                               # (width, L), 1/L folded

    # MultiLevelLayer1d (mlevel=0): conv(1->W,k3) + ReLU + conv(W->1,k3)
    w1 = 0.4 * jax.random.normal(k_w1, (width, 3), jnp.float32)
    b1 = 0.1 * jax.random.normal(k_b1, (width,), jnp.float32)
    w2 = 0.4 * jax.random.normal(k_w2, (width, 3), jnp.float32)
    b2 = 0.1 * jax.random.normal(k_b2, (1,), jnp.float32)
    return {"u": u, "v": v, "w1": w1, "b1": b1, "w2": w2, "b2": b2}


def ml1d_reference(x, params, nblocks):
    """Pure-JAX reference (dense K, HIGHEST precision) for validation."""
    w1, b1, w2, b2 = params["w1"], params["b1"], params["w2"], params["b2"]
    kt = jnp.dot(params["u"], params["v"],
                 precision=lax.Precision.HIGHEST)       # (L, L) = K^T / L
    B, L = x.shape
    cur = x
    for _ in range(nblocks):
        xp = jnp.pad(cur, ((0, 0), (1, 1)))
        x_m1, x_p1 = xp[:, :L], xp[:, 2:]
        h = (x_m1[:, None, :] * w1[:, 0:1]
             + cur[:, None, :] * w1[:, 1:2]
             + x_p1[:, None, :] * w1[:, 2:3]
             + b1[:, None])
        h = jnp.maximum(h, 0.0)
        hp = jnp.pad(h, ((0, 0), (0, 0), (1, 1)))
        h_m1, h_p1 = hp[:, :, :L], hp[:, :, 2:]
        y1 = jnp.sum(h_m1 * w2[:, 0:1] + h * w2[:, 1:2] + h_p1 * w2[:, 2:3],
                     axis=1) + b2[0]
        y2 = jnp.dot(cur, kt, precision=lax.Precision.HIGHEST)
        cur = y1 + y2
    return cur[:, None, :]


if __name__ == "__main__":
    # Small shapes consistent with ML1d(modes=4, width=8, clevel=0, mlevel=0, nblocks=4)
    B, L, modes, width, nblocks = 2, 16, 4, 8, 4

    key = jax.random.PRNGKey(0)
    k_x, k_a, k_p = jax.random.split(key, 3)
    x = jax.random.normal(k_x, (B, L), jnp.float32)
    a = jax.random.normal(k_a, (B, L), jnp.float32)      # unused by forward()
    params = make_params(k_p, L, modes, width)

    out = ml1d_forward(x, a, params, nblocks=nblocks)
    out = jax.block_until_ready(out)

    ref = ml1d_reference(x, params, nblocks)
    assert out.shape == (B, 1, L), out.shape
    max_err = float(jnp.max(jnp.abs(out - ref)))
    assert jnp.allclose(out, ref, rtol=1e-3, atol=1e-3), max_err

    print("KERNEL_OK")
</pallas_src>

<mosaic_0001>
module attributes {stable_mosaic.version = 11 : i64} {
  func.func @_ml1d_kernel(%arg0: memref<57xf32, #tpu.memory_space<smem>>, %arg1: memref<2x128xf32, #tpu.memory_space<vmem>>, %arg2: memref<128x8xf32, #tpu.memory_space<vmem>>, %arg3: memref<8x128xf32, #tpu.memory_space<vmem>>, %arg4: memref<2x128xf32, #tpu.memory_space<vmem>>) attributes {dimension_semantics = [], scalar_prefetch = 0 : i64, scratch_operands = 0 : i64, tpu.core_type = #tpu.core_type<tc>} {
    %c0 = arith.constant 0 : index
    %0 = memref.load %arg0[%c0] : memref<57xf32, #tpu.memory_space<smem>>
    %c1 = arith.constant 1 : index
    %1 = memref.load %arg0[%c1] : memref<57xf32, #tpu.memory_space<smem>>
    %c2 = arith.constant 2 : index
    %2 = memref.load %arg0[%c2] : memref<57xf32, #tpu.memory_space<smem>>
    %c3 = arith.constant 3 : index
    %3 = memref.load %arg0[%c3] : memref<57xf32, #tpu.memory_space<smem>>
    %c4 = arith.constant 4 : index
    %4 = memref.load %arg0[%c4] : memref<57xf32, #tpu.memory_space<smem>>
    %c5 = arith.constant 5 : index
    %5 = memref.load %arg0[%c5] : memref<57xf32, #tpu.memory_space<smem>>
    %c6 = arith.constant 6 : index
    %6 = memref.load %arg0[%c6] : memref<57xf32, #tpu.memory_space<smem>>
    %c7 = arith.constant 7 : index
    %7 = memref.load %arg0[%c7] : memref<57xf32, #tpu.memory_space<smem>>
    %c8 = arith.constant 8 : index
    %8 = memref.load %arg0[%c8] : memref<57xf32, #tpu.memory_space<smem>>
    %c9 = arith.constant 9 : index
    %9 = memref.load %arg0[%c9] : memref<57xf32, #tpu.memory_space<smem>>
    %c10 = arith.constant 10 : index
    %10 = memref.load %arg0[%c10] : memref<57xf32, #tpu.memory_space<smem>>
    %c11 = arith.constant 11 : index
    %11 = memref.load %arg0[%c11] : memref<57xf32, #tpu.memory_space<smem>>
    %c12 = arith.constant 12 : index
    %12 = memref.load %arg0[%c12] : memref<57xf32, #tpu.memory_space<smem>>
    %c13 = arith.constant 13 : index
    %13 = memref.load %arg0[%c13] : memref<57xf32, #tpu.memory_space<smem>>
    %c14 = arith.constant 14 : index
    %14 = memref.load %arg0[%c14] : memref<57xf32, #tpu.memory_space<smem>>
    %c15 = arith.constant 15 : index
    %15 = memref.load %arg0[%c15] : memref<57xf32, #tpu.memory_space<smem>>
    %c16 = arith.constant 16 : index
    %16 = memref.load %arg0[%c16] : memref<57xf32, #tpu.memory_space<smem>>
    %c17 = arith.constant 17 : index
    %17 = memref.load %arg0[%c17] : memref<57xf32, #tpu.memory_space<smem>>
    %c18 = arith.constant 18 : index
    %18 = memref.load %arg0[%c18] : memref<57xf32, #tpu.memory_space<smem>>
    %c19 = arith.constant 19 : index
    %19 = memref.load %arg0[%c19] : memref<57xf32, #tpu.memory_space<smem>>
    %c20 = arith.constant 20 : index
    %20 = memref.load %arg0[%c20] : memref<57xf32, #tpu.memory_space<smem>>
    %c21 = arith.constant 21 : index
    %21 = memref.load %arg0[%c21] : memref<57xf32, #tpu.memory_space<smem>>
    %c22 = arith.constant 22 : index
    %22 = memref.load %arg0[%c22] : memref<57xf32, #tpu.memory_space<smem>>
    %c23 = arith.constant 23 : index
    %23 = memref.load %arg0[%c23] : memref<57xf32, #tpu.memory_space<smem>>
    %c24 = arith.constant 24 : index
    %24 = memref.load %arg0[%c24] : memref<57xf32, #tpu.memory_space<smem>>
    %c25 = arith.constant 25 : index
    %25 = memref.load %arg0[%c25] : memref<57xf32, #tpu.memory_space<smem>>
    %c26 = arith.constant 26 : index
    %26 = memref.load %arg0[%c26] : memref<57xf32, #tpu.memory_space<smem>>
    %c27 = arith.constant 27 : index
    %27 = memref.load %arg0[%c27] : memref<57xf32, #tpu.memory_space<smem>>
    %c28 = arith.constant 28 : index
    %28 = memref.load %arg0[%c28] : memref<57xf32, #tpu.memory_space<smem>>
    %c29 = arith.constant 29 : index
    %29 = memref.load %arg0[%c29] : memref<57xf32, #tpu.memory_space<smem>>
    %c30 = arith.constant 30 : index
    %30 = memref.load %arg0[%c30] : memref<57xf32, #tpu.memory_space<smem>>
    %c31 = arith.constant 31 : index
    %31 = memref.load %arg0[%c31] : memref<57xf32, #tpu.memory_space<smem>>
    %c32 = arith.constant 32 : index
    %32 = memref.load %arg0[%c32] : memref<57xf32, #tpu.memory_space<smem>>
    %c33 = arith.constant 33 : index
    %33 = memref.load %arg0[%c33] : memref<57xf32, #tpu.memory_space<smem>>
    %c34 = arith.constant 34 : index
    %34 = memref.load %arg0[%c34] : memref<57xf32, #tpu.memory_space<smem>>
    %c35 = arith.constant 35 : index
    %35 = memref.load %arg0[%c35] : memref<57xf32, #tpu.memory_space<smem>>
    %c36 = arith.constant 36 : index
    %36 = memref.load %arg0[%c36] : memref<57xf32, #tpu.memory_space<smem>>
    %c37 = arith.constant 37 : index
    %37 = memref.load %arg0[%c37] : memref<57xf32, #tpu.memory_space<smem>>
    %c38 = arith.constant 38 : index
    %38 = memref.load %arg0[%c38] : memref<57xf32, #tpu.memory_space<smem>>
    %c39 = arith.constant 39 : index
    %39 = memref.load %arg0[%c39] : memref<57xf32, #tpu.memory_space<smem>>
    %c40 = arith.constant 40 : index
    %40 = memref.load %arg0[%c40] : memref<57xf32, #tpu.memory_space<smem>>
    %c41 = arith.constant 41 : index
    %41 = memref.load %arg0[%c41] : memref<57xf32, #tpu.memory_space<smem>>
    %c42 = arith.constant 42 : index
    %42 = memref.load %arg0[%c42] : memref<57xf32, #tpu.memory_space<smem>>
    %c43 = arith.constant 43 : index
    %43 = memref.load %arg0[%c43] : memref<57xf32, #tpu.memory_space<smem>>
    %c44 = arith.constant 44 : index
    %44 = memref.load %arg0[%c44] : memref<57xf32, #tpu.memory_space<smem>>
    %c45 = arith.constant 45 : index
    %45 = memref.load %arg0[%c45] : memref<57xf32, #tpu.memory_space<smem>>
    %c46 = arith.constant 46 : index
    %46 = memref.load %arg0[%c46] : memref<57xf32, #tpu.memory_space<smem>>
    %c47 = arith.constant 47 : index
    %47 = memref.load %arg0[%c47] : memref<57xf32, #tpu.memory_space<smem>>
    %c48 = arith.constant 48 : index
    %48 = memref.load %arg0[%c48] : memref<57xf32, #tpu.memory_space<smem>>
    %c49 = arith.constant 49 : index
    %49 = memref.load %arg0[%c49] : memref<57xf32, #tpu.memory_space<smem>>
    %c50 = arith.constant 50 : index
    %50 = memref.load %arg0[%c50] : memref<57xf32, #tpu.memory_space<smem>>
    %c51 = arith.constant 51 : index
    %51 = memref.load %arg0[%c51] : memref<57xf32, #tpu.memory_space<smem>>
    %c52 = arith.constant 52 : index
    %52 = memref.load %arg0[%c52] : memref<57xf32, #tpu.memory_space<smem>>
    %c53 = arith.constant 53 : index
    %53 = memref.load %arg0[%c53] : memref<57xf32, #tpu.memory_space<smem>>
    %c54 = arith.constant 54 : index
    %54 = memref.load %arg0[%c54] : memref<57xf32, #tpu.memory_space<smem>>
    %c55 = arith.constant 55 : index
    %55 = memref.load %arg0[%c55] : memref<57xf32, #tpu.memory_space<smem>>
    %c56 = arith.constant 56 : index
    %56 = memref.load %arg0[%c56] : memref<57xf32, #tpu.memory_space<smem>>
    %57 = tpu.iota {dimensions = array<i32: 1>} : vector<2x128xi32>
    %c16_i32 = arith.constant 16 : i32
    %58 = vector.broadcast %c16_i32 : i32 to vector<2x128xi32>
    %59 = arith.cmpi slt, %57, %58 : vector<2x128xi32>
    %c0_0 = arith.constant 0 : index
    %c0_1 = arith.constant 0 : index
    %60 = vector.load %arg2[%c0_0, %c0_1] : memref<128x8xf32, #tpu.memory_space<vmem>>, vector<128x8xf32>
    %c0_2 = arith.constant 0 : index
    %c0_3 = arith.constant 0 : index
    %61 = vector.load %arg3[%c0_2, %c0_3] : memref<8x128xf32, #tpu.memory_space<vmem>>, vector<8x128xf32>
    %c0_4 = arith.constant 0 : index
    %c0_5 = arith.constant 0 : index
    %62 = vector.load %arg1[%c0_4, %c0_5] : memref<2x128xf32, #tpu.memory_space<vmem>>, vector<2x128xf32>
    %cst = arith.constant 0.000000e+00 : f32
    %63 = vector.broadcast %cst : f32 to vector<2x128xf32>
    %64 = arith.select %59, %62, %63 : vector<2x128xi1>, vector<2x128xf32>
    %c1_i32 = arith.constant 1 : i32
    %65 = tpu.dynamic_rotate %64 by %c1_i32 dim 1 : vector<2x128xf32>, i32 -> vector<2x128xf32>
    %c127_i32 = arith.constant 127 : i32
    %66 = tpu.dynamic_rotate %64 by %c127_i32 dim 1 : vector<2x128xf32>, i32 -> vector<2x128xf32>
    %67 = vector.broadcast %0 : f32 to vector<2x128xf32>
    %68 = arith.mulf %67, %65 : vector<2x128xf32>
    %69 = vector.broadcast %1 : f32 to vector<2x128xf32>
    %70 = arith.mulf %69, %64 : vector<2x128xf32>
    %71 = arith.addf %68, %70 : vector<2x128xf32>
    %72 = vector.broadcast %2 : f32 to vector<2x128xf32>
    %73 = arith.mulf %72, %66 : vector<2x128xf32>
    %74 = arith.addf %71, %73 : vector<2x128xf32>
    %75 = vector.broadcast %24 : f32 to vector<2x128xf32>
    %76 = arith.addf %74, %75 : vector<2x128xf32>
    %cst_6 = arith.constant 0.000000e+00 : f32
    %77 = vector.broadcast %cst_6 : f32 to vector<2x128xf32>
    %78 = arith.maximumf %76, %77 : vector<2x128xf32>
    %79 = vector.broadcast %32 : f32 to vector<2x128xf32>
    %80 = arith.mulf %79, %78 : vector<2x128xf32>
    %81 = vector.broadcast %33 : f32 to vector<2x128xf32>
    %82 = arith.mulf %81, %78 : vector<2x128xf32>
    %83 = vector.broadcast %34 : f32 to vector<2x128xf32>
    %84 = arith.mulf %83, %78 : vector<2x128xf32>
    %85 = vector.broadcast %3 : f32 to vector<2x128xf32>
    %86 = arith.mulf %85, %65 : vector<2x128xf32>
    %87 = vector.broadcast %4 : f32 to vector<2x128xf32>
    %88 = arith.mulf %87, %64 : vector<2x128xf32>
    %89 = arith.addf %86, %88 : vector<2x128xf32>
    %90 = vector.broadcast %5 : f32 to vector<2x128xf32>
    %91 = arith.mulf %90, %66 : vector<2x128xf32>
    %92 = arith.addf %89, %91 : vector<2x128xf32>
    %93 = vector.broadcast %25 : f32 to vector<2x128xf32>
    %94 = arith.addf %92, %93 : vector<2x128xf32>
    %cst_7 = arith.constant 0.000000e+00 : f32
    %95 = vector.broadcast %cst_7 : f32 to vector<2x128xf32>
    %96 = arith.maximumf %94, %95 : vector<2x128xf32>
    %97 = vector.broadcast %35 : f32 to vector<2x128xf32>
    %98 = arith.mulf %97, %96 : vector<2x128xf32>
    %99 = arith.addf %80, %98 : vector<2x128xf32>
    %100 = vector.broadcast %36 : f32 to vector<2x128xf32>
    %101 = arith.mulf %100, %96 : vector<2x128xf32>
    %102 = arith.addf %82, %101 : vector<2x128xf32>
    %103 = vector.broadcast %37 : f32 to vector<2x128xf32>
    %104 = arith.mulf %103, %96 : vector<2x128xf32>
    %105 = arith.addf %84, %104 : vector<2x128xf32>
    %106 = vector.broadcast %6 : f32 to vector<2x128xf32>
    %107 = arith.mulf %106, %65 : vector<2x128xf32>
    %108 = vector.broadcast %7 : f32 to vector<2x128xf32>
    %109 = arith.mulf %108, %64 : vector<2x128xf32>
    %110 = arith.addf %107, %109 : vector<2x128xf32>
    %111 = vector.broadcast %8 : f32 to vector<2x128xf32>
    %112 = arith.mulf %111, %66 : vector<2x128xf32>
    %113 = arith.addf %110, %112 : vector<2x128xf32>
    %114 = vector.broadcast %26 : f32 to vector<2x128xf32>
    %115 = arith.addf %113, %114 : vector<2x128xf32>
    %cst_8 = arith.constant 0.000000e+00 : f32
    %116 = vector.broadcast %cst_8 : f32 to vector<2x128xf32>
    %117 = arith.maximumf %115, %116 : vector<2x128xf32>
    %118 = vector.broadcast %38 : f32 to vector<2x128xf32>
    %119 = arith.mulf %118, %117 : vector<2x128xf32>
    %120 = arith.addf %99, %119 : vector<2x128xf32>
    %121 = vector.broadcast %39 : f32 to vector<2x128xf32>
    %122 = arith.mulf %121, %117 : vector<2x128xf32>
    %123 = arith.addf %102, %122 : vector<2x128xf32>
    %124 = vector.broadcast %40 : f32 to vector<2x128xf32>
    %125 = arith.mulf %124, %117 : vector<2x128xf32>
    %126 = arith.addf %105, %125 : vector<2x128xf32>
    %127 = vector.broadcast %9 : f32 to vector<2x128xf32>
    %128 = arith.mulf %127, %65 : vector<2x128xf32>
    %129 = vector.broadcast %10 : f32 to vector<2x128xf32>
    %130 = arith.mulf %129, %64 : vector<2x128xf32>
    %131 = arith.addf %128, %130 : vector<2x128xf32>
    %132 = vector.broadcast %11 : f32 to vector<2x128xf32>
    %133 = arith.mulf %132, %66 : vector<2x128xf32>
    %134 = arith.addf %131, %133 : vector<2x128xf32>
    %135 = vector.broadcast %27 : f32 to vector<2x128xf32>
    %136 = arith.addf %134, %135 : vector<2x128xf32>
    %cst_9 = arith.constant 0.000000e+00 : f32
    %137 = vector.broadcast %cst_9 : f32 to vector<2x128xf32>
    %138 = arith.maximumf %136, %137 : vector<2x128xf32>
    %139 = vector.broadcast %41 : f32 to vector<2x128xf32>
    %140 = arith.mulf %139, %138 : vector<2x128xf32>
    %141 = arith.addf %120, %140 : vector<2x128xf32>
    %142 = vector.broadcast %42 : f32 to vector<2x128xf32>
    %143 = arith.mulf %142, %138 : vector<2x128xf32>
    %144 = arith.addf %123, %143 : vector<2x128xf32>
    %145 = vector.broadcast %43 : f32 to vector<2x128xf32>
    %146 = arith.mulf %145, %138 : vector<2x128xf32>
    %147 = arith.addf %126, %146 : vector<2x128xf32>
    %148 = vector.broadcast %12 : f32 to vector<2x128xf32>
    %149 = arith.mulf %148, %65 : vector<2x128xf32>
    %150 = vector.broadcast %13 : f32 to vector<2x128xf32>
    %151 = arith.mulf %150, %64 : vector<2x128xf32>
    %152 = arith.addf %149, %151 : vector<2x128xf32>
    %153 = vector.broadcast %14 : f32 to vector<2x128xf32>
    %154 = arith.mulf %153, %66 : vector<2x128xf32>
    %155 = arith.addf %152, %154 : vector<2x128xf32>
    %156 = vector.broadcast %28 : f32 to vector<2x128xf32>
    %157 = arith.addf %155, %156 : vector<2x128xf32>
    %cst_10 = arith.constant 0.000000e+00 : f32
    %158 = vector.broadcast %cst_10 : f32 to vector<2x128xf32>
    %159 = arith.maximumf %157, %158 : vector<2x128xf32>
    %160 = vector.broadcast %44 : f32 to vector<2x128xf32>
    %161 = arith.mulf %160, %159 : vector<2x128xf32>
    %162 = arith.addf %141, %161 : vector<2x128xf32>
    %163 = vector.broadcast %45 : f32 to vector<2x128xf32>
    %164 = arith.mulf %163, %159 : vector<2x128xf32>
    %165 = arith.addf %144, %164 : vector<2x128xf32>
    %166 = vector.broadcast %46 : f32 to vector<2x128xf32>
    %167 = arith.mulf %166, %159 : vector<2x128xf32>
    %168 = arith.addf %147, %167 : vector<2x128xf32>
    %169 = vector.broadcast %15 : f32 to vector<2x128xf32>
    %170 = arith.mulf %169, %65 : vector<2x128xf32>
    %171 = vector.broadcast %16 : f32 to vector<2x128xf32>
    %172 = arith.mulf %171, %64 : vector<2x128xf32>
    %173 = arith.addf %170, %172 : vector<2x128xf32>
    %174 = vector.broadcast %17 : f32 to vector<2x128xf32>
    %175 = arith.mulf %174, %66 : vector<2x128xf32>
    %176 = arith.addf %173, %175 : vector<2x128xf32>
    %177 = vector.broadcast %29 : f32 to vector<2x128xf32>
    %178 = arith.addf %176, %177 : vector<2x128xf32>
    %cst_11 = arith.constant 0.000000e+00 : f32
    %179 = vector.broadcast %cst_11 : f32 to vector<2x128xf32>
    %180 = arith.maximumf %178, %179 : vector<2x128xf32>
    %181 = vector.broadcast %47 : f32 to vector<2x128xf32>
    %182 = arith.mulf %181, %180 : vector<2x128xf32>
    %183 = arith.addf %162, %182 : vector<2x128xf32>
    %184 = vector.broadcast %48 : f32 to vector<2x128xf32>
    %185 = arith.mulf %184, %180 : vector<2x128xf32>
    %186 = arith.addf %165, %185 : vector<2x128xf32>
    %187 = vector.broadcast %49 : f32 to vector<2x128xf32>
    %188 = arith.mulf %187, %180 : vector<2x128xf32>
    %189 = arith.addf %168, %188 : vector<2x128xf32>
    %190 = vector.broadcast %18 : f32 to vector<2x128xf32>
    %191 = arith.mulf %190, %65 : vector<2x128xf32>
    %192 = vector.broadcast %19 : f32 to vector<2x128xf32>
    %193 = arith.mulf %192, %64 : vector<2x128xf32>
    %194 = arith.addf %191, %193 : vector<2x128xf32>
    %195 = vector.broadcast %20 : f32 to vector<2x128xf32>
    %196 = arith.mulf %195, %66 : vector<2x128xf32>
    %197 = arith.addf %194, %196 : vector<2x128xf32>
    %198 = vector.broadcast %30 : f32 to vector<2x128xf32>
    %199 = arith.addf %197, %198 : vector<2x128xf32>
    %cst_12 = arith.constant 0.000000e+00 : f32
    %200 = vector.broadcast %cst_12 : f32 to vector<2x128xf32>
    %201 = arith.maximumf %199, %200 : vector<2x128xf32>
    %202 = vector.broadcast %50 : f32 to vector<2x128xf32>
    %203 = arith.mulf %202, %201 : vector<2x128xf32>
    %204 = arith.addf %183, %203 : vector<2x128xf32>
    %205 = vector.broadcast %51 : f32 to vector<2x128xf32>
    %206 = arith.mulf %205, %201 : vector<2x128xf32>
    %207 = arith.addf %186, %206 : vector<2x128xf32>
    %208 = vector.broadcast %52 : f32 to vector<2x128xf32>
    %209 = arith.mulf %208, %201 : vector<2x128xf32>
    %210 = arith.addf %189, %209 : vector<2x128xf32>
    %211 = vector.broadcast %21 : f32 to vector<2x128xf32>
    %212 = arith.mulf %211, %65 : vector<2x128xf32>
    %213 = vector.broadcast %22 : f32 to vector<2x128xf32>
    %214 = arith.mulf %213, %64 : vector<2x128xf32>
    %215 = arith.addf %212, %214 : vector<2x128xf32>
    %216 = vector.broadcast %23 : f32 to vector<2x128xf32>
    %217 = arith.mulf %216, %66 : vector<2x128xf32>
    %218 = arith.addf %215, %217 : vector<2x128xf32>
    %219 = vector.broadcast %31 : f32 to vector<2x128xf32>
    %220 = arith.addf %218, %219 : vector<2x128xf32>
    %cst_13 = arith.constant 0.000000e+00 : f32
    %221 = vector.broadcast %cst_13 : f32 to vector<2x128xf32>
    %222 = arith.maximumf %220, %221 : vector<2x128xf32>
    %223 = vector.broadcast %53 : f32 to vector<2x128xf32>
    %224 = arith.mulf %223, %222 : vector<2x128xf32>
    %225 = arith.addf %204, %224 : vector<2x128xf32>
    %226 = vector.broadcast %54 : f32 to vector<2x128xf32>
    %227 = arith.mulf %226, %222 : vector<2x128xf32>
    %228 = arith.addf %207, %227 : vector<2x128xf32>
    %229 = vector.broadcast %55 : f32 to vector<2x128xf32>
    %230 = arith.mulf %229, %222 : vector<2x128xf32>
    %231 = arith.addf %210, %230 : vector<2x128xf32>
    %cst_14 = arith.constant 0.000000e+00 : f32
    %232 = vector.broadcast %cst_14 : f32 to vector<2x128xf32>
    %233 = arith.select %59, %225, %232 : vector<2x128xi1>, vector<2x128xf32>
    %cst_15 = arith.constant 0.000000e+00 : f32
    %234 = vector.broadcast %cst_15 : f32 to vector<2x128xf32>
    %235 = arith.select %59, %231, %234 : vector<2x128xi1>, vector<2x128xf32>
    %c1_i32_16 = arith.constant 1 : i32
    %236 = tpu.dynamic_rotate %233 by %c1_i32_16 dim 1 : vector<2x128xf32>, i32 -> vector<2x128xf32>
    %237 = arith.addf %236, %228 : vector<2x128xf32>
    %c127_i32_17 = arith.constant 127 : i32
    %238 = tpu.dynamic_rotate %235 by %c127_i32_17 dim 1 : vector<2x128xf32>, i32 -> vector<2x128xf32>
    %239 = arith.addf %237, %238 : vector<2x128xf32>
    %240 = vector.broadcast %56 : f32 to vector<2x128xf32>
    %241 = arith.addf %239, %240 : vector<2x128xf32>
    %cst_18 = arith.constant dense<0.000000e+00> : vector<2x8xf32>
    %242 = tpu.matmul %64, %60, %cst_18 {dimension_numbers = #tpu.dot_dimension_numbers<[1], [0], [0], [1], [0, 0, 1, 1], [], []>, precision = #tpu.contract_precision<fp32>} : vector<2x128xf32>, vector<128x8xf32>, vector<2x8xf32> -> vector<2x8xf32>
    %cst_19 = arith.constant dense<0.000000e+00> : vector<2x128xf32>
    %243 = tpu.matmul %242, %61, %cst_19 {dimension_numbers = #tpu.dot_dimension_numbers<[1], [0], [0], [1], [0, 0, 1, 1], [], []>, precision = #tpu.contract_precision<fp32>} : vector<2x8xf32>, vector<8x128xf32>, vector<2x128xf32> -> vector<2x128xf32>
    %244 = arith.addf %241, %243 : vector<2x128xf32>
    %cst_20 = arith.constant 0.000000e+00 : f32
    %245 = vector.broadcast %cst_20 : f32 to vector<2x128xf32>
    %246 = arith.select %59, %244, %245 : vector<2x128xi1>, vector<2x128xf32>
    %c1_i32_21 = arith.constant 1 : i32
    %247 = tpu.dynamic_rotate %246 by %c1_i32_21 dim 1 : vector<2x128xf32>, i32 -> vector<2x128xf32>
    %c127_i32_22 = arith.constant 127 : i32
    %248 = tpu.dynamic_rotate %246 by %c127_i32_22 dim 1 : vector<2x128xf32>, i32 -> vector<2x128xf32>
    %249 = vector.broadcast %0 : f32 to vector<2x128xf32>
    %250 = arith.mulf %249, %247 : vector<2x128xf32>
    %251 = vector.broadcast %1 : f32 to vector<2x128xf32>
    %252 = arith.mulf %251, %246 : vector<2x128xf32>
    %253 = arith.addf %250, %252 : vector<2x128xf32>
    %254 = vector.broadcast %2 : f32 to vector<2x128xf32>
    %255 = arith.mulf %254, %248 : vector<2x128xf32>
    %256 = arith.addf %253, %255 : vector<2x128xf32>
    %257 = vector.broadcast %24 : f32 to vector<2x128xf32>
    %258 = arith.addf %256, %257 : vector<2x128xf32>
    %cst_23 = arith.constant 0.000000e+00 : f32
    %259 = vector.broadcast %cst_23 : f32 to vector<2x128xf32>
    %260 = arith.maximumf %258, %259 : vector<2x128xf32>
    %261 = vector.broadcast %32 : f32 to vector<2x128xf32>
    %262 = arith.mulf %261, %260 : vector<2x128xf32>
    %263 = vector.broadcast %33 : f32 to vector<2x128xf32>
    %264 = arith.mulf %263, %260 : vector<2x128xf32>
    %265 = vector.broadcast %34 : f32 to vector<2x128xf32>
    %266 = arith.mulf %265, %260 : vector<2x128xf32>
    %267 = vector.broadcast %3 : f32 to vector<2x128xf32>
    %268 = arith.mulf %267, %247 : vector<2x128xf32>
    %269 = vector.broadcast %4 : f32 to vector<2x128xf32>
    %270 = arith.mulf %269, %246 : vector<2x128xf32>
    %271 = arith.addf %268, %270 : vector<2x128xf32>
    %272 = vector.broadcast %5 : f32 to vector<2x128xf32>
    %273 = arith.mulf %272, %248 : vector<2x128xf32>
    %274 = arith.addf %271, %273 : vector<2x128xf32>
    %275 = vector.broadcast %25 : f32 to vector<2x128xf32>
    %276 = arith.addf %274, %275 : vector<2x128xf32>
    %cst_24 = arith.constant 0.000000e+00 : f32
    %277 = vector.broadcast %cst_24 : f32 to vector<2x128xf32>
    %278 = arith.maximumf %276, %277 : vector<2x128xf32>
    %279 = vector.broadcast %35 : f32 to vector<2x128xf32>
    %280 = arith.mulf %279, %278 : vector<2x128xf32>
    %281 = arith.addf %262, %280 : vector<2x128xf32>
    %282 = vector.broadcast %36 : f32 to vector<2x128xf32>
    %283 = arith.mulf %282, %278 : vector<2x128xf32>
    %284 = arith.addf %264, %283 : vector<2x128xf32>
    %285 = vector.broadcast %37 : f32 to vector<2x128xf32>
    %286 = arith.mulf %285, %278 : vector<2x128xf32>
    %287 = arith.addf %266, %286 : vector<2x128xf32>
    %288 = vector.broadcast %6 : f32 to vector<2x128xf32>
    %289 = arith.mulf %288, %247 : vector<2x128xf32>
    %290 = vector.broadcast %7 : f32 to vector<2x128xf32>
    %291 = arith.mulf %290, %246 : vector<2x128xf32>
    %292 = arith.addf %289, %291 : vector<2x128xf32>
    %293 = vector.broadcast %8 : f32 to vector<2x128xf32>
    %294 = arith.mulf %293, %248 : vector<2x128xf32>
    %295 = arith.addf %292, %294 : vector<2x128xf32>
    %296 = vector.broadcast %26 : f32 to vector<2x128xf32>
    %297 = arith.addf %295, %296 : vector<2x128xf32>
    %cst_25 = arith.constant 0.000000e+00 : f32
    %298 = vector.broadcast %cst_25 : f32 to vector<2x128xf32>
    %299 = arith.maximumf %297, %298 : vector<2x128xf32>
    %300 = vector.broadcast %38 : f32 to vector<2x128xf32>
    %301 = arith.mulf %300, %299 : vector<2x128xf32>
    %302 = arith.addf %281, %301 : vector<2x128xf32>
    %303 = vector.broadcast %39 : f32 to vector<2x128xf32>
    %304 = arith.mulf %303, %299 : vector<2x128xf32>
    %305 = arith.addf %284, %304 : vector<2x128xf32>
    %306 = vector.broadcast %40 : f32 to vector<2x128xf32>
    %307 = arith.mulf %306, %299 : vector<2x128xf32>
    %308 = arith.addf %287, %307 : vector<2x128xf32>
    %309 = vector.broadcast %9 : f32 to vector<2x128xf32>
    %310 = arith.mulf %309, %247 : vector<2x128xf32>
    %311 = vector.broadcast %10 : f32 to vector<2x128xf32>
    %312 = arith.mulf %311, %246 : vector<2x128xf32>
    %313 = arith.addf %310, %312 : vector<2x128xf32>
    %314 = vector.broadcast %11 : f32 to vector<2x128xf32>
    %315 = arith.mulf %314, %248 : vector<2x128xf32>
    %316 = arith.addf %313, %315 : vector<2x128xf32>
    %317 = vector.broadcast %27 : f32 to vector<2x128xf32>
    %318 = arith.addf %316, %317 : vector<2x128xf32>
    %cst_26 = arith.constant 0.000000e+00 : f32
    %319 = vector.broadcast %cst_26 : f32 to vector<2x128xf32>
    %320 = arith.maximumf %318, %319 : vector<2x128xf32>
    %321 = vector.broadcast %41 : f32 to vector<2x128xf32>
    %322 = arith.mulf %321, %320 : vector<2x128xf32>
    %323 = arith.addf %302, %322 : vector<2x128xf32>
    %324 = vector.broadcast %42 : f32 to vector<2x128xf32>
    %325 = arith.mulf %324, %320 : vector<2x128xf32>
    %326 = arith.addf %305, %325 : vector<2x128xf32>
    %327 = vector.broadcast %43 : f32 to vector<2x128xf32>
    %328 = arith.mulf %327, %320 : vector<2x128xf32>
    %329 = arith.addf %308, %328 : vector<2x128xf32>
    %330 = vector.broadcast %12 : f32 to vector<2x128xf32>
    %331 = arith.mulf %330, %247 : vector<2x128xf32>
    %332 = vector.broadcast %13 : f32 to vector<2x128xf32>
    %333 = arith.mulf %332, %246 : vector<2x128xf32>
    %334 = arith.addf %331, %333 : vector<2x128xf32>
    %335 = vector.broadcast %14 : f32 to vector<2x128xf32>
    %336 = arith.mulf %335, %248 : vector<2x128xf32>
    %337 = arith.addf %334, %336 : vector<2x128xf32>
    %338 = vector.broadcast %28 : f32 to vector<2x128xf32>
    %339 = arith.addf %337, %338 : vector<2x128xf32>
    %cst_27 = arith.constant 0.000000e+00 : f32
    %340 = vector.broadcast %cst_27 : f32 to vector<2x128xf32>
    %341 = arith.maximumf %339, %340 : vector<2x128xf32>
    %342 = vector.broadcast %44 : f32 to vector<2x128xf32>
    %343 = arith.mulf %342, %341 : vector<2x128xf32>
    %344 = arith.addf %323, %343 : vector<2x128xf32>
    %345 = vector.broadcast %45 : f32 to vector<2x128xf32>
    %346 = arith.mulf %345, %341 : vector<2x128xf32>
    %347 = arith.addf %326, %346 : vector<2x128xf32>
    %348 = vector.broadcast %46 : f32 to vector<2x128xf32>
    %349 = arith.mulf %348, %341 : vector<2x128xf32>
    %350 = arith.addf %329, %349 : vector<2x128xf32>
    %351 = vector.broadcast %15 : f32 to vector<2x128xf32>
    %352 = arith.mulf %351, %247 : vector<2x128xf32>
    %353 = vector.broadcast %16 : f32 to vector<2x128xf32>
    %354 = arith.mulf %353, %246 : vector<2x128xf32>
    %355 = arith.addf %352, %354 : vector<2x128xf32>
    %356 = vector.broadcast %17 : f32 to vector<2x128xf32>
    %357 = arith.mulf %356, %248 : vector<2x128xf32>
    %358 = arith.addf %355, %357 : vector<2x128xf32>
    %359 = vector.broadcast %29 : f32 to vector<2x128xf32>
    %360 = arith.addf %358, %359 : vector<2x128xf32>
    %cst_28 = arith.constant 0.000000e+00 : f32
    %361 = vector.broadcast %cst_28 : f32 to vector<2x128xf32>
    %362 = arith.maximumf %360, %361 : vector<2x128xf32>
    %363 = vector.broadcast %47 : f32 to vector<2x128xf32>
    %364 = arith.mulf %363, %362 : vector<2x128xf32>
    %365 = arith.addf %344, %364 : vector<2x128xf32>
    %366 = vector.broadcast %48 : f32 to vector<2x128xf32>
    %367 = arith.mulf %366, %362 : vector<2x128xf32>
    %368 = arith.addf %347, %367 : vector<2x128xf32>
    %369 = vector.broadcast %49 : f32 to vector<2x128xf32>
    %370 = arith.mulf %369, %362 : vector<2x128xf32>
    %371 = arith.addf %350, %370 : vector<2x128xf32>
    %372 = vector.broadcast %18 : f32 to vector<2x128xf32>
    %373 = arith.mulf %372, %247 : vector<2x128xf32>
    %374 = vector.broadcast %19 : f32 to vector<2x128xf32>
    %375 = arith.mulf %374, %246 : vector<2x128xf32>
    %376 = arith.addf %373, %375 : vector<2x128xf32>
    %377 = vector.broadcast %20 : f32 to vector<2x128xf32>
    %378 = arith.mulf %377, %248 : vector<2x128xf32>
    %379 = arith.addf %376, %378 : vector<2x128xf32>
    %380 = vector.broadcast %30 : f32 to vector<2x128xf32>
    %381 = arith.addf %379, %380 : vector<2x128xf32>
    %cst_29 = arith.constant 0.000000e+00 : f32
    %382 = vector.broadcast %cst_29 : f32 to vector<2x128xf32>
    %383 = arith.maximumf %381, %382 : vector<2x128xf32>
    %384 = vector.broadcast %50 : f32 to vector<2x128xf32>
    %385 = arith.mulf %384, %383 : vector<2x128xf32>
    %386 = arith.addf %365, %385 : vector<2x128xf32>
    %387 = vector.broadcast %51 : f32 to vector<2x128xf32>
    %388 = arith.mulf %387, %383 : vector<2x128xf32>
    %389 = arith.addf %368, %388 : vector<2x128xf32>
    %390 = vector.broadcast %52 : f32 to vector<2x128xf32>
    %391 = arith.mulf %390, %383 : vector<2x128xf32>
    %392 = arith.addf %371, %391 : vector<2x128xf32>
    %393 = vector.broadcast %21 : f32 to vector<2x128xf32>
    %394 = arith.mulf %393, %247 : vector<2x128xf32>
    %395 = vector.broadcast %22 : f32 to vector<2x128xf32>
    %396 = arith.mulf %395, %246 : vector<2x128xf32>
    %397 = arith.addf %394, %396 : vector<2x128xf32>
    %398 = vector.broadcast %23 : f32 to vector<2x128xf32>
    %399 = arith.mulf %398, %248 : vector<2x128xf32>
    %400 = arith.addf %397, %399 : vector<2x128xf32>
    %401 = vector.broadcast %31 : f32 to vector<2x128xf32>
    %402 = arith.addf %400, %401 : vector<2x128xf32>
    %cst_30 = arith.constant 0.000000e+00 : f32
    %403 = vector.broadcast %cst_30 : f32 to vector<2x128xf32>
    %404 = arith.maximumf %402, %403 : vector<2x128xf32>
    %405 = vector.broadcast %53 : f32 to vector<2x128xf32>
    %406 = arith.mulf %405, %404 : vector<2x128xf32>
    %407 = arith.addf %386, %406 : vector<2x128xf32>
    %408 = vector.broadcast %54 : f32 to vector<2x128xf32>
    %409 = arith.mulf %408, %404 : vector<2x128xf32>
    %410 = arith.addf %389, %409 : vector<2x128xf32>
    %411 = vector.broadcast %55 : f32 to vector<2x128xf32>
    %412 = arith.mulf %411, %404 : vector<2x128xf32>
    %413 = arith.addf %392, %412 : vector<2x128xf32>
    %cst_31 = arith.constant 0.000000e+00 : f32
    %414 = vector.broadcast %cst_31 : f32 to vector<2x128xf32>
    %415 = arith.select %59, %407, %414 : vector<2x128xi1>, vector<2x128xf32>
    %cst_32 = arith.constant 0.000000e+00 : f32
    %416 = vector.broadcast %cst_32 : f32 to vector<2x128xf32>
    %417 = arith.select %59, %413, %416 : vector<2x128xi1>, vector<2x128xf32>
    %c1_i32_33 = arith.constant 1 : i32
    %418 = tpu.dynamic_rotate %415 by %c1_i32_33 dim 1 : vector<2x128xf32>, i32 -> vector<2x128xf32>
    %419 = arith.addf %418, %410 : vector<2x128xf32>
    %c127_i32_34 = arith.constant 127 : i32
    %420 = tpu.dynamic_rotate %417 by %c127_i32_34 dim 1 : vector<2x128xf32>, i32 -> vector<2x128xf32>
    %421 = arith.addf %419, %420 : vector<2x128xf32>
    %422 = vector.broadcast %56 : f32 to vector<2x128xf32>
    %423 = arith.addf %421, %422 : vector<2x128xf32>
    %cst_35 = arith.constant dense<0.000000e+00> : vector<2x8xf32>
    %424 = tpu.matmul %246, %60, %cst_35 {dimension_numbers = #tpu.dot_dimension_numbers<[1], [0], [0], [1], [0, 0, 1, 1], [], []>, precision = #tpu.contract_precision<fp32>} : vector<2x128xf32>, vector<128x8xf32>, vector<2x8xf32> -> vector<2x8xf32>
    %cst_36 = arith.constant dense<0.000000e+00> : vector<2x128xf32>
    %425 = tpu.matmul %424, %61, %cst_36 {dimension_numbers = #tpu.dot_dimension_numbers<[1], [0], [0], [1], [0, 0, 1, 1], [], []>, precision = #tpu.contract_precision<fp32>} : vector<2x8xf32>, vector<8x128xf32>, vector<2x128xf32> -> vector<2x128xf32>
    %426 = arith.addf %423, %425 : vector<2x128xf32>
    %cst_37 = arith.constant 0.000000e+00 : f32
    %427 = vector.broadcast %cst_37 : f32 to vector<2x128xf32>
    %428 = arith.select %59, %426, %427 : vector<2x128xi1>, vector<2x128xf32>
    %c1_i32_38 = arith.constant 1 : i32
    %429 = tpu.dynamic_rotate %428 by %c1_i32_38 dim 1 : vector<2x128xf32>, i32 -> vector<2x128xf32>
    %c127_i32_39 = arith.constant 127 : i32
    %430 = tpu.dynamic_rotate %428 by %c127_i32_39 dim 1 : vector<2x128xf32>, i32 -> vector<2x128xf32>
    %431 = vector.broadcast %0 : f32 to vector<2x128xf32>
    %432 = arith.mulf %431, %429 : vector<2x128xf32>
    %433 = vector.broadcast %1 : f32 to vector<2x128xf32>
    %434 = arith.mulf %433, %428 : vector<2x128xf32>
    %435 = arith.addf %432, %434 : vector<2x128xf32>
    %436 = vector.broadcast %2 : f32 to vector<2x128xf32>
    %437 = arith.mulf %436, %430 : vector<2x128xf32>
    %438 = arith.addf %435, %437 : vector<2x128xf32>
    %439 = vector.broadcast %24 : f32 to vector<2x128xf32>
    %440 = arith.addf %438, %439 : vector<2x128xf32>
    %cst_40 = arith.constant 0.000000e+00 : f32
    %441 = vector.broadcast %cst_40 : f32 to vector<2x128xf32>
    %442 = arith.maximumf %440, %441 : vector<2x128xf32>
    %443 = vector.broadcast %32 : f32 to vector<2x128xf32>
    %444 = arith.mulf %443, %442 : vector<2x128xf32>
    %445 = vector.broadcast %33 : f32 to vector<2x128xf32>
    %446 = arith.mulf %445, %442 : vector<2x128xf32>
    %447 = vector.broadcast %34 : f32 to vector<2x128xf32>
    %448 = arith.mulf %447, %442 : vector<2x128xf32>
    %449 = vector.broadcast %3 : f32 to vector<2x128xf32>
    %450 = arith.mulf %449, %429 : vector<2x128xf32>
    %451 = vector.broadcast %4 : f32 to vector<2x128xf32>
    %452 = arith.mulf %451, %428 : vector<2x128xf32>
    %453 = arith.addf %450, %452 : vector<2x128xf32>
    %454 = vector.broadcast %5 : f32 to vector<2x128xf32>
    %455 = arith.mulf %454, %430 : vector<2x128xf32>
    %456 = arith.addf %453, %455 : vector<2x128xf32>
    %457 = vector.broadcast %25 : f32 to vector<2x128xf32>
    %458 = arith.addf %456, %457 : vector<2x128xf32>
    %cst_41 = arith.constant 0.000000e+00 : f32
    %459 = vector.broadcast %cst_41 : f32 to vector<2x128xf32>
    %460 = arith.maximumf %458, %459 : vector<2x128xf32>
    %461 = vector.broadcast %35 : f32 to vector<2x128xf32>
    %462 = arith.mulf %461, %460 : vector<2x128xf32>
    %463 = arith.addf %444, %462 : vector<2x128xf32>
    %464 = vector.broadcast %36 : f32 to vector<2x128xf32>
    %465 = arith.mulf %464, %460 : vector<2x128xf32>
    %466 = arith.addf %446, %465 : vector<2x128xf32>
    %467 = vector.broadcast %37 : f32 to vector<2x128xf32>
    %468 = arith.mulf %467, %460 : vector<2x128xf32>
    %469 = arith.addf %448, %468 : vector<2x128xf32>
    %470 = vector.broadcast %6 : f32 to vector<2x128xf32>
    %471 = arith.mulf %470, %429 : vector<2x128xf32>
    %472 = vector.broadcast %7 : f32 to vector<2x128xf32>
    %473 = arith.mulf %472, %428 : vector<2x128xf32>
    %474 = arith.addf %471, %473 : vector<2x128xf32>
    %475 = vector.broadcast %8 : f32 to vector<2x128xf32>
    %476 = arith.mulf %475, %430 : vector<2x128xf32>
    %477 = arith.addf %474, %476 : vector<2x128xf32>
    %478 = vector.broadcast %26 : f32 to vector<2x128xf32>
    %479 = arith.addf %477, %478 : vector<2x128xf32>
    %cst_42 = arith.constant 0.000000e+00 : f32
    %480 = vector.broadcast %cst_42 : f32 to vector<2x128xf32>
    %481 = arith.maximumf %479, %480 : vector<2x128xf32>
    %482 = vector.broadcast %38 : f32 to vector<2x128xf32>
    %483 = arith.mulf %482, %481 : vector<2x128xf32>
    %484 = arith.addf %463, %483 : vector<2x128xf32>
    %485 = vector.broadcast %39 : f32 to vector<2x128xf32>
    %486 = arith.mulf %485, %481 : vector<2x128xf32>
    %487 = arith.addf %466, %486 : vector<2x128xf32>
    %488 = vector.broadcast %40 : f32 to vector<2x128xf32>
    %489 = arith.mulf %488, %481 : vector<2x128xf32>
    %490 = arith.addf %469, %489 : vector<2x128xf32>
    %491 = vector.broadcast %9 : f32 to vector<2x128xf32>
    %492 = arith.mulf %491, %429 : vector<2x128xf32>
    %493 = vector.broadcast %10 : f32 to vector<2x128xf32>
    %494 = arith.mulf %493, %428 : vector<2x128xf32>
    %495 = arith.addf %492, %494 : vector<2x128xf32>
    %496 = vector.broadcast %11 : f32 to vector<2x128xf32>
    %497 = arith.mulf %496, %430 : vector<2x128xf32>
    %498 = arith.addf %495, %497 : vector<2x128xf32>
    %499 = vector.broadcast %27 : f32 to vector<2x128xf32>
    %500 = arith.addf %498, %499 : vector<2x128xf32>
    %cst_43 = arith.constant 0.000000e+00 : f32
    %501 = vector.broadcast %cst_43 : f32 to vector<2x128xf32>
    %502 = arith.maximumf %500, %501 : vector<2x128xf32>
    %503 = vector.broadcast %41 : f32 to vector<2x128xf32>
    %504 = arith.mulf %503, %502 : vector<2x128xf32>
    %505 = arith.addf %484, %504 : vector<2x128xf32>
    %506 = vector.broadcast %42 : f32 to vector<2x128xf32>
    %507 = arith.mulf %506, %502 : vector<2x128xf32>
    %508 = arith.addf %487, %507 : vector<2x128xf32>
    %509 = vector.broadcast %43 : f32 to vector<2x128xf32>
    %510 = arith.mulf %509, %502 : vector<2x128xf32>
    %511 = arith.addf %490, %510 : vector<2x128xf32>
    %512 = vector.broadcast %12 : f32 to vector<2x128xf32>
    %513 = arith.mulf %512, %429 : vector<2x128xf32>
    %514 = vector.broadcast %13 : f32 to vector<2x128xf32>
    %515 = arith.mulf %514, %428 : vector<2x128xf32>
    %516 = arith.addf %513, %515 : vector<2x128xf32>
    %517 = vector.broadcast %14 : f32 to vector<2x128xf32>
    %518 = arith.mulf %517, %430 : vector<2x128xf32>
    %519 = arith.addf %516, %518 : vector<2x128xf32>
    %520 = vector.broadcast %28 : f32 to vector<2x128xf32>
    %521 = arith.addf %519, %520 : vector<2x128xf32>
    %cst_44 = arith.constant 0.000000e+00 : f32
    %522 = vector.broadcast %cst_44 : f32 to vector<2x128xf32>
    %523 = arith.maximumf %521, %522 : vector<2x128xf32>
    %524 = vector.broadcast %44 : f32 to vector<2x128xf32>
    %525 = arith.mulf %524, %523 : vector<2x128xf32>
    %526 = arith.addf %505, %525 : vector<2x128xf32>
    %527 = vector.broadcast %45 : f32 to vector<2x128xf32>
    %528 = arith.mulf %527, %523 : vector<2x128xf32>
    %529 = arith.addf %508, %528 : vector<2x128xf32>
    %530 = vector.broadcast %46 : f32 to vector<2x128xf32>
    %531 = arith.mulf %530, %523 : vector<2x128xf32>
    %532 = arith.addf %511, %531 : vector<2x128xf32>
    %533 = vector.broadcast %15 : f32 to vector<2x128xf32>
    %534 = arith.mulf %533, %429 : vector<2x128xf32>
    %535 = vector.broadcast %16 : f32 to vector<2x128xf32>
    %536 = arith.mulf %535, %428 : vector<2x128xf32>
    %537 = arith.addf %534, %536 : vector<2x128xf32>
    %538 = vector.broadcast %17 : f32 to vector<2x128xf32>
    %539 = arith.mulf %538, %430 : vector<2x128xf32>
    %540 = arith.addf %537, %539 : vector<2x128xf32>
    %541 = vector.broadcast %29 : f32 to vector<2x128xf32>
    %542 = arith.addf %540, %541 : vector<2x128xf32>
    %cst_45 = arith.constant 0.000000e+00 : f32
    %543 = vector.broadcast %cst_45 : f32 to vector<2x128xf32>
    %544 = arith.maximumf %542, %543 : vector<2x128xf32>
    %545 = vector.broadcast %47 : f32 to vector<2x128xf32>
    %546 = arith.mulf %545, %544 : vector<2x128xf32>
    %547 = arith.addf %526, %546 : vector<2x128xf32>
    %548 = vector.broadcast %48 : f32 to vector<2x128xf32>
    %549 = arith.mulf %548, %544 : vector<2x128xf32>
    %550 = arith.addf %529, %549 : vector<2x128xf32>
    %551 = vector.broadcast %49 : f32 to vector<2x128xf32>
    %552 = arith.mulf %551, %544 : vector<2x128xf32>
    %553 = arith.addf %532, %552 : vector<2x128xf32>
    %554 = vector.broadcast %18 : f32 to vector<2x128xf32>
    %555 = arith.mulf %554, %429 : vector<2x128xf32>
    %556 = vector.broadcast %19 : f32 to vector<2x128xf32>
    %557 = arith.mulf %556, %428 : vector<2x128xf32>
    %558 = arith.addf %555, %557 : vector<2x128xf32>
    %559 = vector.broadcast %20 : f32 to vector<2x128xf32>
    %560 = arith.mulf %559, %430 : vector<2x128xf32>
    %561 = arith.addf %558, %560 : vector<2x128xf32>
    %562 = vector.broadcast %30 : f32 to vector<2x128xf32>
    %563 = arith.addf %561, %562 : vector<2x128xf32>
    %cst_46 = arith.constant 0.000000e+00 : f32
    %564 = vector.broadcast %cst_46 : f32 to vector<2x128xf32>
    %565 = arith.maximumf %563, %564 : vector<2x128xf32>
    %566 = vector.broadcast %50 : f32 to vector<2x128xf32>
    %567 = arith.mulf %566, %565 : vector<2x128xf32>
    %568 = arith.addf %547, %567 : vector<2x128xf32>
    %569 = vector.broadcast %51 : f32 to vector<2x128xf32>
    %570 = arith.mulf %569, %565 : vector<2x128xf32>
    %571 = arith.addf %550, %570 : vector<2x128xf32>
    %572 = vector.broadcast %52 : f32 to vector<2x128xf32>
    %573 = arith.mulf %572, %565 : vector<2x128xf32>
    %574 = arith.addf %553, %573 : vector<2x128xf32>
    %575 = vector.broadcast %21 : f32 to vector<2x128xf32>
    %576 = arith.mulf %575, %429 : vector<2x128xf32>
    %577 = vector.broadcast %22 : f32 to vector<2x128xf32>
    %578 = arith.mulf %577, %428 : vector<2x128xf32>
    %579 = arith.addf %576, %578 : vector<2x128xf32>
    %580 = vector.broadcast %23 : f32 to vector<2x128xf32>
    %581 = arith.mulf %580, %430 : vector<2x128xf32>
    %582 = arith.addf %579, %581 : vector<2x128xf32>
    %583 = vector.broadcast %31 : f32 to vector<2x128xf32>
    %584 = arith.addf %582, %583 : vector<2x128xf32>
    %cst_47 = arith.constant 0.000000e+00 : f32
    %585 = vector.broadcast %cst_47 : f32 to vector<2x128xf32>
    %586 = arith.maximumf %584, %585 : vector<2x128xf32>
    %587 = vector.broadcast %53 : f32 to vector<2x128xf32>
    %588 = arith.mulf %587, %586 : vector<2x128xf32>
    %589 = arith.addf %568, %588 : vector<2x128xf32>
    %590 = vector.broadcast %54 : f32 to vector<2x128xf32>
    %591 = arith.mulf %590, %586 : vector<2x128xf32>
    %592 = arith.addf %571, %591 : vector<2x128xf32>
    %593 = vector.broadcast %55 : f32 to vector<2x128xf32>
    %594 = arith.mulf %593, %586 : vector<2x128xf32>
    %595 = arith.addf %574, %594 : vector<2x128xf32>
    %cst_48 = arith.constant 0.000000e+00 : f32
    %596 = vector.broadcast %cst_48 : f32 to vector<2x128xf32>
    %597 = arith.select %59, %589, %596 : vector<2x128xi1>, vector<2x128xf32>
    %cst_49 = arith.constant 0.000000e+00 : f32
    %598 = vector.broadcast %cst_49 : f32 to vector<2x128xf32>
    %599 = arith.select %59, %595, %598 : vector<2x128xi1>, vector<2x128xf32>
    %c1_i32_50 = arith.constant 1 : i32
    %600 = tpu.dynamic_rotate %597 by %c1_i32_50 dim 1 : vector<2x128xf32>, i32 -> vector<2x128xf32>
    %601 = arith.addf %600, %592 : vector<2x128xf32>
    %c127_i32_51 = arith.constant 127 : i32
    %602 = tpu.dynamic_rotate %599 by %c127_i32_51 dim 1 : vector<2x128xf32>, i32 -> vector<2x128xf32>
    %603 = arith.addf %601, %602 : vector<2x128xf32>
    %604 = vector.broadcast %56 : f32 to vector<2x128xf32>
    %605 = arith.addf %603, %604 : vector<2x128xf32>
    %cst_52 = arith.constant dense<0.000000e+00> : vector<2x8xf32>
    %606 = tpu.matmul %428, %60, %cst_52 {dimension_numbers = #tpu.dot_dimension_numbers<[1], [0], [0], [1], [0, 0, 1, 1], [], []>, precision = #tpu.contract_precision<fp32>} : vector<2x128xf32>, vector<128x8xf32>, vector<2x8xf32> -> vector<2x8xf32>
    %cst_53 = arith.constant dense<0.000000e+00> : vector<2x128xf32>
    %607 = tpu.matmul %606, %61, %cst_53 {dimension_numbers = #tpu.dot_dimension_numbers<[1], [0], [0], [1], [0, 0, 1, 1], [], []>, precision = #tpu.contract_precision<fp32>} : vector<2x8xf32>, vector<8x128xf32>, vector<2x128xf32> -> vector<2x128xf32>
    %608 = arith.addf %605, %607 : vector<2x128xf32>
    %cst_54 = arith.constant 0.000000e+00 : f32
    %609 = vector.broadcast %cst_54 : f32 to vector<2x128xf32>
    %610 = arith.select %59, %608, %609 : vector<2x128xi1>, vector<2x128xf32>
    %c1_i32_55 = arith.constant 1 : i32
    %611 = tpu.dynamic_rotate %610 by %c1_i32_55 dim 1 : vector<2x128xf32>, i32 -> vector<2x128xf32>
    %c127_i32_56 = arith.constant 127 : i32
    %612 = tpu.dynamic_rotate %610 by %c127_i32_56 dim 1 : vector<2x128xf32>, i32 -> vector<2x128xf32>
    %613 = vector.broadcast %0 : f32 to vector<2x128xf32>
    %614 = arith.mulf %613, %611 : vector<2x128xf32>
    %615 = vector.broadcast %1 : f32 to vector<2x128xf32>
    %616 = arith.mulf %615, %610 : vector<2x128xf32>
    %617 = arith.addf %614, %616 : vector<2x128xf32>
    %618 = vector.broadcast %2 : f32 to vector<2x128xf32>
    %619 = arith.mulf %618, %612 : vector<2x128xf32>
    %620 = arith.addf %617, %619 : vector<2x128xf32>
    %621 = vector.broadcast %24 : f32 to vector<2x128xf32>
    %622 = arith.addf %620, %621 : vector<2x128xf32>
    %cst_57 = arith.constant 0.000000e+00 : f32
    %623 = vector.broadcast %cst_57 : f32 to vector<2x128xf32>
    %624 = arith.maximumf %622, %623 : vector<2x128xf32>
    %625 = vector.broadcast %32 : f32 to vector<2x128xf32>
    %626 = arith.mulf %625, %624 : vector<2x128xf32>
    %627 = vector.broadcast %33 : f32 to vector<2x128xf32>
    %628 = arith.mulf %627, %624 : vector<2x128xf32>
    %629 = vector.broadcast %34 : f32 to vector<2x128xf32>
    %630 = arith.mulf %629, %624 : vector<2x128xf32>
    %631 = vector.broadcast %3 : f32 to vector<2x128xf32>
    %632 = arith.mulf %631, %611 : vector<2x128xf32>
    %633 = vector.broadcast %4 : f32 to vector<2x128xf32>
    %634 = arith.mulf %633, %610 : vector<2x128xf32>
    %635 = arith.addf %632, %634 : vector<2x128xf32>
    %636 = vector.broadcast %5 : f32 to vector<2x128xf32>
    %637 = arith.mulf %636, %612 : vector<2x128xf32>
    %638 = arith.addf %635, %637 : vector<2x128xf32>
    %639 = vector.broadcast %25 : f32 to vector<2x128xf32>
    %640 = arith.addf %638, %639 : vector<2x128xf32>
    %cst_58 = arith.constant 0.000000e+00 : f32
    %641 = vector.broadcast %cst_58 : f32 to vector<2x128xf32>
    %642 = arith.maximumf %640, %641 : vector<2x128xf32>
    %643 = vector.broadcast %35 : f32 to vector<2x128xf32>
    %644 = arith.mulf %643, %642 : vector<2x128xf32>
    %645 = arith.addf %626, %644 : vector<2x128xf32>
    %646 = vector.broadcast %36 : f32 to vector<2x128xf32>
    %647 = arith.mulf %646, %642 : vector<2x128xf32>
    %648 = arith.addf %628, %647 : vector<2x128xf32>
    %649 = vector.broadcast %37 : f32 to vector<2x128xf32>
    %650 = arith.mulf %649, %642 : vector<2x128xf32>
    %651 = arith.addf %630, %650 : vector<2x128xf32>
    %652 = vector.broadcast %6 : f32 to vector<2x128xf32>
    %653 = arith.mulf %652, %611 : vector<2x128xf32>
    %654 = vector.broadcast %7 : f32 to vector<2x128xf32>
    %655 = arith.mulf %654, %610 : vector<2x128xf32>
    %656 = arith.addf %653, %655 : vector<2x128xf32>
    %657 = vector.broadcast %8 : f32 to vector<2x128xf32>
    %658 = arith.mulf %657, %612 : vector<2x128xf32>
    %659 = arith.addf %656, %658 : vector<2x128xf32>
    %660 = vector.broadcast %26 : f32 to vector<2x128xf32>
    %661 = arith.addf %659, %660 : vector<2x128xf32>
    %cst_59 = arith.constant 0.000000e+00 : f32
    %662 = vector.broadcast %cst_59 : f32 to vector<2x128xf32>
    %663 = arith.maximumf %661, %662 : vector<2x128xf32>
    %664 = vector.broadcast %38 : f32 to vector<2x128xf32>
    %665 = arith.mulf %664, %663 : vector<2x128xf32>
    %666 = arith.addf %645, %665 : vector<2x128xf32>
    %667 = vector.broadcast %39 : f32 to vector<2x128xf32>
    %668 = arith.mulf %667, %663 : vector<2x128xf32>
    %669 = arith.addf %648, %668 : vector<2x128xf32>
    %670 = vector.broadcast %40 : f32 to vector<2x128xf32>
    %671 = arith.mulf %670, %663 : vector<2x128xf32>
    %672 = arith.addf %651, %671 : vector<2x128xf32>
    %673 = vector.broadcast %9 : f32 to vector<2x128xf32>
    %674 = arith.mulf %673, %611 : vector<2x128xf32>
    %675 = vector.broadcast %10 : f32 to vector<2x128xf32>
    %676 = arith.mulf %675, %610 : vector<2x128xf32>
    %677 = arith.addf %674, %676 : vector<2x128xf32>
    %678 = vector.broadcast %11 : f32 to vector<2x128xf32>
    %679 = arith.mulf %678, %612 : vector<2x128xf32>
    %680 = arith.addf %677, %679 : vector<2x128xf32>
    %681 = vector.broadcast %27 : f32 to vector<2x128xf32>
    %682 = arith.addf %680, %681 : vector<2x128xf32>
    %cst_60 = arith.constant 0.000000e+00 : f32
    %683 = vector.broadcast %cst_60 : f32 to vector<2x128xf32>
    %684 = arith.maximumf %682, %683 : vector<2x128xf32>
    %685 = vector.broadcast %41 : f32 to vector<2x128xf32>
    %686 = arith.mulf %685, %684 : vector<2x128xf32>
    %687 = arith.addf %666, %686 : vector<2x128xf32>
    %688 = vector.broadcast %42 : f32 to vector<2x128xf32>
    %689 = arith.mulf %688, %684 : vector<2x128xf32>
    %690 = arith.addf %669, %689 : vector<2x128xf32>
    %691 = vector.broadcast %43 : f32 to vector<2x128xf32>
    %692 = arith.mulf %691, %684 : vector<2x128xf32>
    %693 = arith.addf %672, %692 : vector<2x128xf32>
    %694 = vector.broadcast %12 : f32 to vector<2x128xf32>
    %695 = arith.mulf %694, %611 : vector<2x128xf32>
    %696 = vector.broadcast %13 : f32 to vector<2x128xf32>
    %697 = arith.mulf %696, %610 : vector<2x128xf32>
    %698 = arith.addf %695, %697 : vector<2x128xf32>
    %699 = vector.broadcast %14 : f32 to vector<2x128xf32>
    %700 = arith.mulf %699, %612 : vector<2x128xf32>
    %701 = arith.addf %698, %700 : vector<2x128xf32>
    %702 = vector.broadcast %28 : f32 to vector<2x128xf32>
    %703 = arith.addf %701, %702 : vector<2x128xf32>
    %cst_61 = arith.constant 0.000000e+00 : f32
    %704 = vector.broadcast %cst_61 : f32 to vector<2x128xf32>
    %705 = arith.maximumf %703, %704 : vector<2x128xf32>
    %706 = vector.broadcast %44 : f32 to vector<2x128xf32>
    %707 = arith.mulf %706, %705 : vector<2x128xf32>
    %708 = arith.addf %687, %707 : vector<2x128xf32>
    %709 = vector.broadcast %45 : f32 to vector<2x128xf32>
    %710 = arith.mulf %709, %705 : vector<2x128xf32>
    %711 = arith.addf %690, %710 : vector<2x128xf32>
    %712 = vector.broadcast %46 : f32 to vector<2x128xf32>
    %713 = arith.mulf %712, %705 : vector<2x128xf32>
    %714 = arith.addf %693, %713 : vector<2x128xf32>
    %715 = vector.broadcast %15 : f32 to vector<2x128xf32>
    %716 = arith.mulf %715, %611 : vector<2x128xf32>
    %717 = vector.broadcast %16 : f32 to vector<2x128xf32>
    %718 = arith.mulf %717, %610 : vector<2x128xf32>
    %719 = arith.addf %716, %718 : vector<2x128xf32>
    %720 = vector.broadcast %17 : f32 to vector<2x128xf32>
    %721 = arith.mulf %720, %612 : vector<2x128xf32>
    %722 = arith.addf %719, %721 : vector<2x128xf32>
    %723 = vector.broadcast %29 : f32 to vector<2x128xf32>
    %724 = arith.addf %722, %723 : vector<2x128xf32>
    %cst_62 = arith.constant 0.000000e+00 : f32
    %725 = vector.broadcast %cst_62 : f32 to vector<2x128xf32>
    %726 = arith.maximumf %724, %725 : vector<2x128xf32>
    %727 = vector.broadcast %47 : f32 to vector<2x128xf32>
    %728 = arith.mulf %727, %726 : vector<2x128xf32>
    %729 = arith.addf %708, %728 : vector<2x128xf32>
    %730 = vector.broadcast %48 : f32 to vector<2x128xf32>
    %731 = arith.mulf %730, %726 : vector<2x128xf32>
    %732 = arith.addf %711, %731 : vector<2x128xf32>
    %733 = vector.broadcast %49 : f32 to vector<2x128xf32>
    %734 = arith.mulf %733, %726 : vector<2x128xf32>
    %735 = arith.addf %714, %734 : vector<2x128xf32>
    %736 = vector.broadcast %18 : f32 to vector<2x128xf32>
    %737 = arith.mulf %736, %611 : vector<2x128xf32>
    %738 = vector.broadcast %19 : f32 to vector<2x128xf32>
    %739 = arith.mulf %738, %610 : vector<2x128xf32>
    %740 = arith.addf %737, %739 : vector<2x128xf32>
    %741 = vector.broadcast %20 : f32 to vector<2x128xf32>
    %742 = arith.mulf %741, %612 : vector<2x128xf32>
    %743 = arith.addf %740, %742 : vector<2x128xf32>
    %744 = vector.broadcast %30 : f32 to vector<2x128xf32>
    %745 = arith.addf %743, %744 : vector<2x128xf32>
    %cst_63 = arith.constant 0.000000e+00 : f32
    %746 = vector.broadcast %cst_63 : f32 to vector<2x128xf32>
    %747 = arith.maximumf %745, %746 : vector<2x128xf32>
    %748 = vector.broadcast %50 : f32 to vector<2x128xf32>
    %749 = arith.mulf %748, %747 : vector<2x128xf32>
    %750 = arith.addf %729, %749 : vector<2x128xf32>
    %751 = vector.broadcast %51 : f32 to vector<2x128xf32>
    %752 = arith.mulf %751, %747 : vector<2x128xf32>
    %753 = arith.addf %732, %752 : vector<2x128xf32>
    %754 = vector.broadcast %52 : f32 to vector<2x128xf32>
    %755 = arith.mulf %754, %747 : vector<2x128xf32>
    %756 = arith.addf %735, %755 : vector<2x128xf32>
    %757 = vector.broadcast %21 : f32 to vector<2x128xf32>
    %758 = arith.mulf %757, %611 : vector<2x128xf32>
    %759 = vector.broadcast %22 : f32 to vector<2x128xf32>
    %760 = arith.mulf %759, %610 : vector<2x128xf32>
    %761 = arith.addf %758, %760 : vector<2x128xf32>
    %762 = vector.broadcast %23 : f32 to vector<2x128xf32>
    %763 = arith.mulf %762, %612 : vector<2x128xf32>
    %764 = arith.addf %761, %763 : vector<2x128xf32>
    %765 = vector.broadcast %31 : f32 to vector<2x128xf32>
    %766 = arith.addf %764, %765 : vector<2x128xf32>
    %cst_64 = arith.constant 0.000000e+00 : f32
    %767 = vector.broadcast %cst_64 : f32 to vector<2x128xf32>
    %768 = arith.maximumf %766, %767 : vector<2x128xf32>
    %769 = vector.broadcast %53 : f32 to vector<2x128xf32>
    %770 = arith.mulf %769, %768 : vector<2x128xf32>
    %771 = arith.addf %750, %770 : vector<2x128xf32>
    %772 = vector.broadcast %54 : f32 to vector<2x128xf32>
    %773 = arith.mulf %772, %768 : vector<2x128xf32>
    %774 = arith.addf %753, %773 : vector<2x128xf32>
    %775 = vector.broadcast %55 : f32 to vector<2x128xf32>
    %776 = arith.mulf %775, %768 : vector<2x128xf32>
    %777 = arith.addf %756, %776 : vector<2x128xf32>
    %cst_65 = arith.constant 0.000000e+00 : f32
    %778 = vector.broadcast %cst_65 : f32 to vector<2x128xf32>
    %779 = arith.select %59, %771, %778 : vector<2x128xi1>, vector<2x128xf32>
    %cst_66 = arith.constant 0.000000e+00 : f32
    %780 = vector.broadcast %cst_66 : f32 to vector<2x128xf32>
    %781 = arith.select %59, %777, %780 : vector<2x128xi1>, vector<2x128xf32>
    %c1_i32_67 = arith.constant 1 : i32
    %782 = tpu.dynamic_rotate %779 by %c1_i32_67 dim 1 : vector<2x128xf32>, i32 -> vector<2x128xf32>
    %783 = arith.addf %782, %774 : vector<2x128xf32>
    %c127_i32_68 = arith.constant 127 : i32
    %784 = tpu.dynamic_rotate %781 by %c127_i32_68 dim 1 : vector<2x128xf32>, i32 -> vector<2x128xf32>
    %785 = arith.addf %783, %784 : vector<2x128xf32>
    %786 = vector.broadcast %56 : f32 to vector<2x128xf32>
    %787 = arith.addf %785, %786 : vector<2x128xf32>
    %cst_69 = arith.constant dense<0.000000e+00> : vector<2x8xf32>
    %788 = tpu.matmul %610, %60, %cst_69 {dimension_numbers = #tpu.dot_dimension_numbers<[1], [0], [0], [1], [0, 0, 1, 1], [], []>, precision = #tpu.contract_precision<fp32>} : vector<2x128xf32>, vector<128x8xf32>, vector<2x8xf32> -> vector<2x8xf32>
    %cst_70 = arith.constant dense<0.000000e+00> : vector<2x128xf32>
    %789 = tpu.matmul %788, %61, %cst_70 {dimension_numbers = #tpu.dot_dimension_numbers<[1], [0], [0], [1], [0, 0, 1, 1], [], []>, precision = #tpu.contract_precision<fp32>} : vector<2x8xf32>, vector<8x128xf32>, vector<2x128xf32> -> vector<2x128xf32>
    %790 = arith.addf %787, %789 : vector<2x128xf32>
    %cst_71 = arith.constant 0.000000e+00 : f32
    %791 = vector.broadcast %cst_71 : f32 to vector<2x128xf32>
    %792 = arith.select %59, %790, %791 : vector<2x128xi1>, vector<2x128xf32>
    %c0_72 = arith.constant 0 : index
    %c0_73 = arith.constant 0 : index
    %793 = vector.load %arg4[%c0_72, %c0_73] : memref<2x128xf32, #tpu.memory_space<vmem>>, vector<2x128xf32>
    tpu.vector_store %arg4[%c0_72, %c0_73], %792 {strides = array<i32>} : memref<2x128xf32, #tpu.memory_space<vmem>>, vector<2x128xf32>,
    return
  }
}

</mosaic_0001>

<llo_original>
// kernel: ml1d_forward.1
$region0: #{ml1d_forward.1}
  #allocation0 [shape = 'u32[]', space=smem, size = 0x4, offset = 0x4, fixed_abs, tag = 'smem constant byte address 0x4 - core index']
  #allocation1 [shape = 'u32[144,128]{1,0:T(1,128)}', space=vmem, size = 0x12000, scoped, tag = 'internal scratch']
  %s0 = inlined_call_operand.vmem [shape: f32[57], index: 0, kind: input, shape index: {}]
  %s1 = inlined_call_operand.vmem [shape: f32[2,128], index: 1, kind: input, shape index: {}, may-alias: {1,4}]
  %s2 = inlined_call_operand.vmem [shape: f32[128,8], index: 2, kind: input, shape index: {}]
  %s3 = inlined_call_operand.vmem [shape: f32[8,128], index: 3, kind: input, shape index: {}]
  %s4 = inlined_call_operand.vmem [shape: f32[2,128], index: 4, kind: output, shape index: {}, may-alias: {1,4}]
  %s5 = sld [smem:[#allocation0]]
  $region30: #{ml1d_forward.1} parent=0
    _
  %s7 = ssub.s32 1, %s5
  %s8 = scalar_select 0, %s7, %s5
  $region1: #{ml1d_forward.1} parent=0
    #allocation2 [shape = 'u8[512]{0}', space=smem, size = 0x200, scoped, tag = 'input window, operand 0, single buffered']
    #allocation3 [shape = 's32[1]{0}', space=sflag, size = 0x4, scoped, tag = 'scoped memory for ml1d_forward.1']
    %9 = vsyncpa [#allocation3], 0
    // Predicated region
    $region2: #{ml1d_forward.1} parent=1 // pred_check
      _
    $region3: #{ml1d_forward.1} parent=1 // pred_check_branch
      %11 = sbr.rel (0) target = $region5
    $region4: #{ml1d_forward.1} parent=1 // pred_region
      %s13 = ssub.s32 16, 16
      %14 = vsyncadd [#allocation3], %s13
      %s16 = sshll.u32 %s0, 4
      %s17 = int_to_ptr.vmem [resolvable:$true] %s16
      %19 = dma.vmem_to_smem %s17, 16, [#allocation2], [#allocation3]
    $region5: #{ml1d_forward.1} parent=1 // pred_fallthru
      _
    // Predicated region
    $region6: #{ml1d_forward.1} parent=1 // pred_check
      _
    $region7: #{ml1d_forward.1} parent=1 // pred_check_branch
      %21 = sbr.rel (0) target = $region9
    $region8: #{ml1d_forward.1} parent=1 // pred_region
      _
    $region9: #{ml1d_forward.1} parent=1 // pred_fallthru
      _
    // Predicated region
    $region10: #{ml1d_forward.1} parent=1 // pred_check
      _
    $region11: #{ml1d_forward.1} parent=1 // pred_check_branch
      %23 = sbr.rel (0) target = $region13
    $region12: #{ml1d_forward.1} parent=1 // pred_region
      _
    $region13: #{ml1d_forward.1} parent=1 // pred_fallthru
      _
    // Predicated region
    $region14: #{ml1d_forward.1} parent=1 // pred_check
      _
    $region15: #{ml1d_forward.1} parent=1 // pred_check_branch
      %25 = sbr.rel (0) target = $region17
    $region16: #{ml1d_forward.1} parent=1 // pred_region
      _
    $region17: #{ml1d_forward.1} parent=1 // pred_fallthru
      _
    // Predicated region
    $region18: #{ml1d_forward.1} parent=1 // pred_check
      _
    $region19: #{ml1d_forward.1} parent=1 // pred_check_branch
      %27 = sbr.rel (0) target = $region21
    $region20: #{ml1d_forward.1} parent=1 // pred_region
      %28 = dma.done [#allocation3], 16
    $region21: #{ml1d_forward.1} parent=1 // pred_fallthru
      _
    %29 = sfence
    %s30 = sld [smem:[#allocation2]]
    %s31 = sld [smem:[#allocation2 + $0x1]]
    %s32 = sld [smem:[#allocation2 + $0x2]]
    %s33 = sld [smem:[#allocation2 + $0x3]]
    %s34 = sld [smem:[#allocation2 + $0x4]]
    %s35 = sld [smem:[#allocation2 + $0x5]]
    %s36 = sld [smem:[#allocation2 + $0x6]]
    %s37 = sld [smem:[#allocation2 + $0x7]]
    %s38 = sld [smem:[#allocation2 + $0x8]]
    %s39 = sld [smem:[#allocation2 + $0x9]]
    %s40 = sld [smem:[#allocation2 + $0xa]]
    %s41 = sld [smem:[#allocation2 + $0xb]]
    %s42 = sld [smem:[#allocation2 + $0xc]]
    %s43 = sld [smem:[#allocation2 + $0xd]]
    %s44 = sld [smem:[#allocation2 + $0xe]]
    %s45 = sld [smem:[#allocation2 + $0xf]]
    %s46 = sld [smem:[#allocation2 + $0x10]]
    %s47 = sld [smem:[#allocation2 + $0x11]]
    %s48 = sld [smem:[#allocation2 + $0x12]]
    %s49 = sld [smem:[#allocation2 + $0x13]]
    %s50 = sld [smem:[#allocation2 + $0x14]]
    %s51 = sld [smem:[#allocation2 + $0x15]]
    %s52 = sld [smem:[#allocation2 + $0x16]]
    %s53 = sld [smem:[#allocation2 + $0x17]]
    %s54 = sld [smem:[#allocation2 + $0x18]]
    %s55 = sld [smem:[#allocation2 + $0x19]]
    %s56 = sld [smem:[#allocation2 + $0x1a]]
    %s57 = sld [smem:[#allocation2 + $0x1b]]
    %s58 = sld [smem:[#allocation2 + $0x1c]]
    %s59 = sld [smem:[#allocation2 + $0x1d]]
    %s60 = sld [smem:[#allocation2 + $0x1e]]
    %s61 = sld [smem:[#allocation2 + $0x1f]]
    %s62 = sld [smem:[#allocation2 + $0x20]]
    %s63 = sld [smem:[#allocation2 + $0x21]]
    %s64 = sld [smem:[#allocation2 + $0x22]]
    %s65 = sld [smem:[#allocation2 + $0x23]]
    %s66 = sld [smem:[#allocation2 + $0x24]]
    %s67 = sld [smem:[#allocation2 + $0x25]]
    %s68 = sld [smem:[#allocation2 + $0x26]]
    %s69 = sld [smem:[#allocation2 + $0x27]]
    %s70 = sld [smem:[#allocation2 + $0x28]]
    %s71 = sld [smem:[#allocation2 + $0x29]]
    %s72 = sld [smem:[#allocation2 + $0x2a]]
    %s73 = sld [smem:[#allocation2 + $0x2b]]
    %s74 = sld [smem:[#allocation2 + $0x2c]]
    %s75 = sld [smem:[#allocation2 + $0x2d]]
    %s76 = sld [smem:[#allocation2 + $0x2e]]
    %s77 = sld [smem:[#allocation2 + $0x2f]]
    %s78 = sld [smem:[#allocation2 + $0x30]]
    %s79 = sld [smem:[#allocation2 + $0x31]]
    %s80 = sld [smem:[#allocation2 + $0x32]]
    %s81 = sld [smem:[#allocation2 + $0x33]]
    %s82 = sld [smem:[#allocation2 + $0x34]]
    %s83 = sld [smem:[#allocation2 + $0x35]]
    %s84 = sld [smem:[#allocation2 + $0x36]]
    %s85 = sld [smem:[#allocation2 + $0x37]]
    %s86 = sld [smem:[#allocation2 + $0x38]]
    %v87 = vlaneseq
    %v88 = vand.u32 %v87, 127
    %vm89 = vcmp.lt.s32.totalorder %v88, 16
    %v90 = vld [vmem:[%s2] sm:$0xff]
    %v91 = vld [vmem:[%s2 + $0x8] sm:$0xff]
    %v92 = vld [vmem:[%s2 + $0x10] sm:$0xff]
    %v93 = vld [vmem:[%s2 + $0x18] sm:$0xff]
    %v94 = vld [vmem:[%s2 + $0x20] sm:$0xff]
    %v95 = vld [vmem:[%s2 + $0x28] sm:$0xff]
    %v96 = vld [vmem:[%s2 + $0x30] sm:$0xff]
    %v97 = vld [vmem:[%s2 + $0x38] sm:$0xff]
    %v98 = vld [vmem:[%s2 + $0x40] sm:$0xff]
    %v99 = vld [vmem:[%s2 + $0x48] sm:$0xff]
    %v100 = vld [vmem:[%s2 + $0x50] sm:$0xff]
    %v101 = vld [vmem:[%s2 + $0x58] sm:$0xff]
    %v102 = vld [vmem:[%s2 + $0x60] sm:$0xff]
    %v103 = vld [vmem:[%s2 + $0x68] sm:$0xff]
    %v104 = vld [vmem:[%s2 + $0x70] sm:$0xff]
    %v105 = vld [vmem:[%s2 + $0x78] sm:$0xff]
    %v106 = vld [vmem:[%s3] sm:$0xff]
    %v107 = vld [vmem:[%s1] sm:$0x3]
    %v108 = vsel %vm89, %v107, 0.0
    %109 = vrot.lane.b32.xlu0 %v108, 1
    %v110 = vpop.permute.xlu0 %109
    %111 = vrot.lane.b32.xlu0 %v108, 127
    %v112 = vpop.permute.xlu0 %111
    %v113 = vstv %s30
    %v114 = vmul.f32 %v113, %v110
    %v115 = vstv %s31
    %v116 = vmul.f32 %v115, %v108
    %v117 = vadd.f32 %v114, %v116
    %v118 = vstv %s32
    %v119 = vmul.f32 %v118, %v112
    %v120 = vadd.f32 %v117, %v119
    %v121 = vstv %s54
    %v122 = vadd.f32 %v120, %v121
    %v123 = vmax.f32 %v122, 0.0
    %v124 = vstv %s62
    %v125 = vmul.f32 %v124, %v123
    %v126 = vstv %s63
    %v127 = vmul.f32 %v126, %v123
    %v128 = vstv %s64
    %v129 = vmul.f32 %v128, %v123
    %v130 = vstv %s33
    %v131 = vmul.f32 %v130, %v110
    %v132 = vstv %s34
    %v133 = vmul.f32 %v132, %v108
    %v134 = vadd.f32 %v131, %v133
    %v135 = vstv %s35
    %v136 = vmul.f32 %v135, %v112
    %v137 = vadd.f32 %v134, %v136
    %v138 = vstv %s55
    %v139 = vadd.f32 %v137, %v138
    %v140 = vmax.f32 %v139, 0.0
    %v141 = vstv %s65
    %v142 = vmul.f32 %v141, %v140
    %v143 = vadd.f32 %v125, %v142
    %v144 = vstv %s66
    %v145 = vmul.f32 %v144, %v140
    %v146 = vadd.f32 %v127, %v145
    %v147 = vstv %s67
    %v148 = vmul.f32 %v147, %v140
    %v149 = vadd.f32 %v129, %v148
    %v150 = vstv %s36
    %v151 = vmul.f32 %v150, %v110
    %v152 = vstv %s37
    %v153 = vmul.f32 %v152, %v108
    %v154 = vadd.f32 %v151, %v153
    %v155 = vstv %s38
    %v156 = vmul.f32 %v155, %v112
    %v157 = vadd.f32 %v154, %v156
    %v158 = vstv %s56
    %v159 = vadd.f32 %v157, %v158
    %v160 = vmax.f32 %v159, 0.0
    %v161 = vstv %s68
    %v162 = vmul.f32 %v161, %v160
    %v163 = vadd.f32 %v143, %v162
    %v164 = vstv %s69
    %v165 = vmul.f32 %v164, %v160
    %v166 = vadd.f32 %v146, %v165
    %v167 = vstv %s70
    %v168 = vmul.f32 %v167, %v160
    %v169 = vadd.f32 %v149, %v168
    %v170 = vstv %s39
    %v171 = vmul.f32 %v170, %v110
    %v172 = vstv %s40
    %v173 = vmul.f32 %v172, %v108
    %v174 = vadd.f32 %v171, %v173
    %v175 = vstv %s41
    %v176 = vmul.f32 %v175, %v112
    %v177 = vadd.f32 %v174, %v176
    %v178 = vstv %s57
    %v179 = vadd.f32 %v177, %v178
    %v180 = vmax.f32 %v179, 0.0
    %v181 = vstv %s71
    %v182 = vmul.f32 %v181, %v180
    %v183 = vadd.f32 %v163, %v182
    %v184 = vstv %s72
    %v185 = vmul.f32 %v184, %v180
    %v186 = vadd.f32 %v166, %v185
    %v187 = vstv %s73
    %v188 = vmul.f32 %v187, %v180
    %v189 = vadd.f32 %v169, %v188
    %v190 = vstv %s42
    %v191 = vmul.f32 %v190, %v110
    %v192 = vstv %s43
    %v193 = vmul.f32 %v192, %v108
    %v194 = vadd.f32 %v191, %v193
    %v195 = vstv %s44
    %v196 = vmul.f32 %v195, %v112
    %v197 = vadd.f32 %v194, %v196
    %v198 = vstv %s58
    %v199 = vadd.f32 %v197, %v198
    %v200 = vmax.f32 %v199, 0.0
    %v201 = vstv %s74
    %v202 = vmul.f32 %v201, %v200
    %v203 = vadd.f32 %v183, %v202
    %v204 = vstv %s75
    %v205 = vmul.f32 %v204, %v200
    %v206 = vadd.f32 %v186, %v205
    %v207 = vstv %s76
    %v208 = vmul.f32 %v207, %v200
    %v209 = vadd.f32 %v189, %v208
    %v210 = vstv %s45
    %v211 = vmul.f32 %v210, %v110
    %v212 = vstv %s46
    %v213 = vmul.f32 %v212, %v108
    %v214 = vadd.f32 %v211, %v213
    %v215 = vstv %s47
    %v216 = vmul.f32 %v215, %v112
    %v217 = vadd.f32 %v214, %v216
    %v218 = vstv %s59
    %v219 = vadd.f32 %v217, %v218
    %v220 = vmax.f32 %v219, 0.0
    %v221 = vstv %s77
    %v222 = vmul.f32 %v221, %v220
    %v223 = vadd.f32 %v203, %v222
    %v224 = vstv %s78
    %v225 = vmul.f32 %v224, %v220
    %v226 = vadd.f32 %v206, %v225
    %v227 = vstv %s79
    %v228 = vmul.f32 %v227, %v220
    %v229 = vadd.f32 %v209, %v228
    %v230 = vstv %s48
    %v231 = vmul.f32 %v230, %v110
    %v232 = vstv %s49
    %v233 = vmul.f32 %v232, %v108
    %v234 = vadd.f32 %v231, %v233
    %v235 = vstv %s50
    %v236 = vmul.f32 %v235, %v112
    %v237 = vadd.f32 %v234, %v236
    %v238 = vstv %s60
    %v239 = vadd.f32 %v237, %v238
    %v240 = vmax.f32 %v239, 0.0
    %v241 = vstv %s80
    %v242 = vmul.f32 %v241, %v240
    %v243 = vadd.f32 %v223, %v242
    %v244 = vstv %s81
    %v245 = vmul.f32 %v244, %v240
    %v246 = vadd.f32 %v226, %v245
    %v247 = vstv %s82
    %v248 = vmul.f32 %v247, %v240
    %v249 = vadd.f32 %v229, %v248
    %v250 = vstv %s51
    %v251 = vmul.f32 %v250, %v110
    %v252 = vstv %s52
    %v253 = vmul.f32 %v252, %v108
    %v254 = vadd.f32 %v251, %v253
    %v255 = vstv %s53
    %v256 = vmul.f32 %v255, %v112
    %v257 = vadd.f32 %v254, %v256
    %v258 = vstv %s61
    %v259 = vadd.f32 %v257, %v258
    %v260 = vmax.f32 %v259, 0.0
    %v261 = vstv %s83
    %v262 = vmul.f32 %v261, %v260
    %v263 = vadd.f32 %v243, %v262
    %v264 = vstv %s84
    %v265 = vmul.f32 %v264, %v260
    %v266 = vadd.f32 %v246, %v265
    %v267 = vstv %s85
    %v268 = vmul.f32 %v267, %v260
    %v269 = vadd.f32 %v249, %v268
    %v270 = vsel %vm89, %v263, 0.0
    %v271 = vsel %vm89, %v269, 0.0
    %272 = vrot.lane.b32.xlu0 %v270, 1
    %v273 = vpop.permute.xlu0 %272
    %v274 = vadd.f32 %v273, %v266
    %275 = vrot.lane.b32.xlu0 %v271, 127
    %v276 = vpop.permute.xlu0 %275
    %v277 = vadd.f32 %v274, %v276
    %v278 = vstv %s86
    %v279 = vadd.f32 %v277, %v278
    %280 = vmatprep.subr.mxu0 0.0
    %v281 = vand.u32 %v90, 4294901760
    %282 = vmatpush1.msra.mxu0 %v281
    %283 = vmatprep.subr.mxu0 0.0
    %v284 = vand.u32 %v91, 4294901760
    %285 = vmatpush1.msra.mxu0 %v284
    %286 = vmatprep.subr.mxu0 0.0
    %v287 = vand.u32 %v92, 4294901760
    %288 = vmatpush1.msra.mxu0 %v287
    %289 = vmatprep.subr.mxu0 0.0
    %v290 = vand.u32 %v93, 4294901760
    %291 = vmatpush1.msra.mxu0 %v290
    %292 = vmatprep.subr.mxu0 0.0
    %v293 = vand.u32 %v94, 4294901760
    %294 = vmatpush1.msra.mxu0 %v293
    %295 = vmatprep.subr.mxu0 0.0
    %v296 = vand.u32 %v95, 4294901760
    %297 = vmatpush1.msra.mxu0 %v296
    %298 = vmatprep.subr.mxu0 0.0
    %v299 = vand.u32 %v96, 4294901760
    %300 = vmatpush1.msra.mxu0 %v299
    %301 = vmatprep.subr.mxu0 0.0
    %v302 = vand.u32 %v97, 4294901760
    %303 = vmatpush1.msra.mxu0 %v302
    %304 = vmatprep.subr.mxu0 0.0
    %v305 = vand.u32 %v98, 4294901760
    %306 = vmatpush1.msra.mxu0 %v305
    %307 = vmatprep.subr.mxu0 0.0
    %v308 = vand.u32 %v99, 4294901760
    %309 = vmatpush1.msra.mxu0 %v308
    %310 = vmatprep.subr.mxu0 0.0
    %v311 = vand.u32 %v100, 4294901760
    %312 = vmatpush1.msra.mxu0 %v311
    %313 = vmatprep.subr.mxu0 0.0
    %v314 = vand.u32 %v101, 4294901760
    %315 = vmatpush1.msra.mxu0 %v314
    %316 = vmatprep.subr.mxu0 0.0
    %v317 = vand.u32 %v102, 4294901760
    %318 = vmatpush1.msra.mxu0 %v317
    %319 = vmatprep.subr.mxu0 0.0
    %v320 = vand.u32 %v103, 4294901760
    %321 = vmatpush1.msra.mxu0 %v320
    %322 = vmatprep.subr.mxu0 0.0
    %v323 = vand.u32 %v104, 4294901760
    %324 = vmatpush1.msra.mxu0 %v323
    %325 = vmatprep.subr.mxu0 0.0
    %v326 = vand.u32 %v105, 4294901760
    %327 = vmatpush1.msra.mxu0 %v326
    %328 = vmatprep.subr.mxu0 0.0
    %329 = vmatpush1.msra.mxu0 0.0
    %330 = vmatprep.subr.mxu0 0.0
    %331 = vmatpush1.msra.mxu0 0.0
    %332 = vmatprep.subr.mxu0 0.0
    %333 = vmatpush1.msra.mxu0 0.0
    %334 = vmatprep.subr.mxu0 0.0
    %335 = vmatpush1.msra.mxu0 0.0
    %336 = vmatprep.subr.mxu0 0.0
    %337 = vmatpush1.msra.mxu0 0.0
    %338 = vmatprep.subr.mxu0 0.0
    %339 = vmatpush1.msra.mxu0 0.0
    %340 = vmatprep.subr.mxu0 0.0
    %341 = vmatpush1.msra.mxu0 0.0
    %342 = vmatprep.subr.mxu0 0.0
    %343 = vmatpush1.msra.mxu0 0.0
    %344 = vmatprep.subr.mxu0 0.0
    %345 = vmatpush1.msra.mxu0 0.0
    %346 = vmatprep.subr.mxu0 0.0
    %347 = vmatpush1.msra.mxu0 0.0
    %348 = vmatprep.subr.mxu0 0.0
    %349 = vmatpush1.msra.mxu0 0.0
    %350 = vmatprep.subr.mxu0 0.0
    %351 = vmatpush1.msra.mxu0 0.0
    %352 = vmatprep.subr.mxu0 0.0
    %353 = vmatpush1.msra.mxu0 0.0
    %354 = vmatprep.subr.mxu0 0.0
    %355 = vmatpush1.msra.mxu0 0.0
    %356 = vmatprep.subr.mxu0 0.0
    %357 = vmatpush1.msra.mxu0 0.0
    %358 = vmatprep.subr.mxu0 0.0
    %359 = vmatpush1.msra.mxu0 0.0
    %360 = vmatprep.mubr.f32.mxu0 0.0
    %v361 = vand.u32 %v108, 4294901760
    %v362 = vsub.f32 %v108, %v361
    %v363 = vand.u32 %v362, 4294901760
    %v364 = vsub.f32 %v362, %v363
    %v365 = vand.u32 %v364, 4294901760
    %366 = vmatmul.mubr.f32.gmra.mrb[0].mxu0 %v365
    %v367 = vpop.f32.mrb[0].mxu0
    %v368 = vadd.f32 0.0, %v367
    %v369 = vpop.f32.mrb[0].mxu0
    %370 = vdwg.mxu0
    %371 = vmatprep.subr.mxu0 0.0
    %v372 = vand.u32 %v90, 4294901760
    %v373 = vsub.f32 %v90, %v372
    %v374 = vand.u32 %v373, 4294901760
    %v375 = vsub.f32 %v373, %v374
    %v376 = vand.u32 %v375, 4294901760
    %377 = vmatpush1.msra.mxu0 %v376
    %378 = vmatprep.subr.mxu0 0.0
    %v379 = vand.u32 %v91, 4294901760
    %v380 = vsub.f32 %v91, %v379
    %v381 = vand.u32 %v380, 4294901760
    %v382 = vsub.f32 %v380, %v381
    %v383 = vand.u32 %v382, 4294901760
    %384 = vmatpush1.msra.mxu0 %v383
    %385 = vmatprep.subr.mxu0 0.0
    %v386 = vand.u32 %v92, 4294901760
    %v387 = vsub.f32 %v92, %v386
    %v388 = vand.u32 %v387, 4294901760
    %v389 = vsub.f32 %v387, %v388
    %v390 = vand.u32 %v389, 4294901760
    %391 = vmatpush1.msra.mxu0 %v390
    %392 = vmatprep.subr.mxu0 0.0
    %v393 = vand.u32 %v93, 4294901760
    %v394 = vsub.f32 %v93, %v393
    %v395 = vand.u32 %v394, 4294901760
    %v396 = vsub.f32 %v394, %v395
    %v397 = vand.u32 %v396, 4294901760
    %398 = vmatpush1.msra.mxu0 %v397
    %399 = vmatprep.subr.mxu0 0.0
    %v400 = vand.u32 %v94, 4294901760
    %v401 = vsub.f32 %v94, %v400
    %v402 = vand.u32 %v401, 4294901760
    %v403 = vsub.f32 %v401, %v402
    %v404 = vand.u32 %v403, 4294901760
    %405 = vmatpush1.msra.mxu0 %v404
    %406 = vmatprep.subr.mxu0 0.0
    %v407 = vand.u32 %v95, 4294901760
    %v408 = vsub.f32 %v95, %v407
    %v409 = vand.u32 %v408, 4294901760
    %v410 = vsub.f32 %v408, %v409
    %v411 = vand.u32 %v410, 4294901760
    %412 = vmatpush1.msra.mxu0 %v411
    %413 = vmatprep.subr.mxu0 0.0
    %v414 = vand.u32 %v96, 4294901760
    %v415 = vsub.f32 %v96, %v414
    %v416 = vand.u32 %v415, 4294901760
    %v417 = vsub.f32 %v415, %v416
    %v418 = vand.u32 %v417, 4294901760
    %419 = vmatpush1.msra.mxu0 %v418
    %420 = vmatprep.subr.mxu0 0.0
    %v421 = vand.u32 %v97, 4294901760
    %v422 = vsub.f32 %v97, %v421
    %v423 = vand.u32 %v422, 4294901760
    %v424 = vsub.f32 %v422, %v423
    %v425 = vand.u32 %v424, 4294901760
    %426 = vmatpush1.msra.mxu0 %v425
    %427 = vmatprep.subr.mxu0 0.0
    %v428 = vand.u32 %v98, 4294901760
    %v429 = vsub.f32 %v98, %v428
    %v430 = vand.u32 %v429, 4294901760
    %v431 = vsub.f32 %v429, %v430
    %v432 = vand.u32 %v431, 4294901760
    %433 = vmatpush1.msra.mxu0 %v432
    %434 = vmatprep.subr.mxu0 0.0
    %v435 = vand.u32 %v99, 4294901760
    %v436 = vsub.f32 %v99, %v435
    %v437 = vand.u32 %v436, 4294901760
    %v438 = vsub.f32 %v436, %v437
    %v439 = vand.u32 %v438, 4294901760
    %440 = vmatpush1.msra.mxu0 %v439
    %441 = vmatprep.subr.mxu0 0.0
    %v442 = vand.u32 %v100, 4294901760
    %v443 = vsub.f32 %v100, %v442
    %v444 = vand.u32 %v443, 4294901760
    %v445 = vsub.f32 %v443, %v444
    %v446 = vand.u32 %v445, 4294901760
    %447 = vmatpush1.msra.mxu0 %v446
    %448 = vmatprep.subr.mxu0 0.0
    %v449 = vand.u32 %v101, 4294901760
    %v450 = vsub.f32 %v101, %v449
    %v451 = vand.u32 %v450, 4294901760
    %v452 = vsub.f32 %v450, %v451
    %v453 = vand.u32 %v452, 4294901760
    %454 = vmatpush1.msra.mxu0 %v453
    %455 = vmatprep.subr.mxu0 0.0
    %v456 = vand.u32 %v102, 4294901760
    %v457 = vsub.f32 %v102, %v456
    %v458 = vand.u32 %v457, 4294901760
    %v459 = vsub.f32 %v457, %v458
    %v460 = vand.u32 %v459, 4294901760
    %461 = vmatpush1.msra.mxu0 %v460
    %462 = vmatprep.subr.mxu0 0.0
    %v463 = vand.u32 %v103, 4294901760
    %v464 = vsub.f32 %v103, %v463
    %v465 = vand.u32 %v464, 4294901760
    %v466 = vsub.f32 %v464, %v465
    %v467 = vand.u32 %v466, 4294901760
    %468 = vmatpush1.msra.mxu0 %v467
    %469 = vmatprep.subr.mxu0 0.0
    %v470 = vand.u32 %v104, 4294901760
    %v471 = vsub.f32 %v104, %v470
    %v472 = vand.u32 %v471, 4294901760
    %v473 = vsub.f32 %v471, %v472
    %v474 = vand.u32 %v473, 4294901760
    %475 = vmatpush1.msra.mxu0 %v474
    %476 = vmatprep.subr.mxu0 0.0
    %v477 = vand.u32 %v105, 4294901760
    %v478 = vsub.f32 %v105, %v477
    %v479 = vand.u32 %v478, 4294901760
    %v480 = vsub.f32 %v478, %v479
    %v481 = vand.u32 %v480, 4294901760
    %482 = vmatpush1.msra.mxu0 %v481
    %483 = vmatprep.subr.mxu0 0.0
    %484 = vmatpush1.msra.mxu0 0.0
    %485 = vmatprep.subr.mxu0 0.0
    %486 = vmatpush1.msra.mxu0 0.0
    %487 = vmatprep.subr.mxu0 0.0
    %488 = vmatpush1.msra.mxu0 0.0
    %489 = vmatprep.subr.mxu0 0.0
    %490 = vmatpush1.msra.mxu0 0.0
    %491 = vmatprep.subr.mxu0 0.0
    %492 = vmatpush1.msra.mxu0 0.0
    %493 = vmatprep.subr.mxu0 0.0
    %494 = vmatpush1.msra.mxu0 0.0
    %495 = vmatprep.subr.mxu0 0.0
    %496 = vmatpush1.msra.mxu0 0.0
    %497 = vmatprep.subr.mxu0 0.0
    %498 = vmatpush1.msra.mxu0 0.0
    %499 = vmatprep.subr.mxu0 0.0
    %500 = vmatpush1.msra.mxu0 0.0
    %501 = vmatprep.subr.mxu0 0.0
    %502 = vmatpush1.msra.mxu0 0.0
    %503 = vmatprep.subr.mxu0 0.0
    %504 = vmatpush1.msra.mxu0 0.0
    %505 = vmatprep.subr.mxu0 0.0
    %506 = vmatpush1.msra.mxu0 0.0
    %507 = vmatprep.subr.mxu0 0.0
    %508 = vmatpush1.msra.mxu0 0.0
    %509 = vmatprep.subr.mxu0 0.0
    %510 = vmatpush1.msra.mxu0 0.0
    %511 = vmatprep.subr.mxu0 0.0
    %512 = vmatpush1.msra.mxu0 0.0
    %513 = vmatprep.subr.mxu0 0.0
    %514 = vmatpush1.msra.mxu0 0.0
    %515 = vmatprep.mubr.f32.mxu0 0.0
    %v516 = vand.u32 %v108, 4294901760
    %517 = vmatmul.mubr.f32.gmra.mrb[0].mxu0 %v516
    %v518 = vpop.f32.mrb[0].mxu0
    %v519 = vadd.f32 %v368, %v518
    %v520 = vpop.f32.mrb[0].mxu0
    %521 = vdwg.mxu0
    %522 = vmatprep.subr.mxu0 0.0
    %v523 = vand.u32 %v90, 4294901760
    %v524 = vsub.f32 %v90, %v523
    %525 = vmatpush1.msra.mxu0 %v524
    %526 = vmatprep.subr.mxu0 0.0
    %v527 = vand.u32 %v91, 4294901760
    %v528 = vsub.f32 %v91, %v527
    %529 = vmatpush1.msra.mxu0 %v528
    %530 = vmatprep.subr.mxu0 0.0
    %v531 = vand.u32 %v92, 4294901760
    %v532 = vsub.f32 %v92, %v531
    %533 = vmatpush1.msra.mxu0 %v532
    %534 = vmatprep.subr.mxu0 0.0
    %v535 = vand.u32 %v93, 4294901760
    %v536 = vsub.f32 %v93, %v535
    %537 = vmatpush1.msra.mxu0 %v536
    %538 = vmatprep.subr.mxu0 0.0
    %v539 = vand.u32 %v94, 4294901760
    %v540 = vsub.f32 %v94, %v539
    %541 = vmatpush1.msra.mxu0 %v540
    %542 = vmatprep.subr.mxu0 0.0
    %v543 = vand.u32 %v95, 4294901760
    %v544 = vsub.f32 %v95, %v543
    %545 = vmatpush1.msra.mxu0 %v544
    %546 = vmatprep.subr.mxu0 0.0
    %v547 = vand.u32 %v96, 4294901760
    %v548 = vsub.f32 %v96, %v547
    %549 = vmatpush1.msra.mxu0 %v548
    %550 = vmatprep.subr.mxu0 0.0
    %v551 = vand.u32 %v97, 4294901760
    %v552 = vsub.f32 %v97, %v551
    %553 = vmatpush1.msra.mxu0 %v552
    %554 = vmatprep.subr.mxu0 0.0
    %v555 = vand.u32 %v98, 4294901760
    %v556 = vsub.f32 %v98, %v555
    %557 = vmatpush1.msra.mxu0 %v556
    %558 = vmatprep.subr.mxu0 0.0
    %v559 = vand.u32 %v99, 4294901760
    %v560 = vsub.f32 %v99, %v559
    %561 = vmatpush1.msra.mxu0 %v560
    %562 = vmatprep.subr.mxu0 0.0
    %v563 = vand.u32 %v100, 4294901760
    %v564 = vsub.f32 %v100, %v563
    %565 = vmatpush1.msra.mxu0 %v564
    %566 = vmatprep.subr.mxu0 0.0
    %v567 = vand.u32 %v101, 4294901760
    %v568 = vsub.f32 %v101, %v567
    %569 = vmatpush1.msra.mxu0 %v568
    %570 = vmatprep.subr.mxu0 0.0
    %v571 = vand.u32 %v102, 4294901760
    %v572 = vsub.f32 %v102, %v571
    %573 = vmatpush1.msra.mxu0 %v572
    %574 = vmatprep.subr.mxu0 0.0
    %v575 = vand.u32 %v103, 4294901760
    %v576 = vsub.f32 %v103, %v575
    %577 = vmatpush1.msra.mxu0 %v576
    %578 = vmatprep.subr.mxu0 0.0
    %v579 = vand.u32 %v104, 4294901760
    %v580 = vsub.f32 %v104, %v579
    %581 = vmatpush1.msra.mxu0 %v580
    %582 = vmatprep.subr.mxu0 0.0
    %v583 = vand.u32 %v105, 4294901760
    %v584 = vsub.f32 %v105, %v583
    %585 = vmatpush1.msra.mxu0 %v584
    %586 = vmatprep.subr.mxu0 0.0
    %587 = vmatpush1.msra.mxu0 0.0
    %588 = vmatprep.subr.mxu0 0.0
    %589 = vmatpush1.msra.mxu0 0.0
    %590 = vmatprep.subr.mxu0 0.0
    %591 = vmatpush1.msra.mxu0 0.0
    %592 = vmatprep.subr.mxu0 0.0
    %593 = vmatpush1.msra.mxu0 0.0
    %594 = vmatprep.subr.mxu0 0.0
    %595 = vmatpush1.msra.mxu0 0.0
    %596 = vmatprep.subr.mxu0 0.0
    %597 = vmatpush1.msra.mxu0 0.0
    %598 = vmatprep.subr.mxu0 0.0
    %599 = vmatpush1.msra.mxu0 0.0
    %600 = vmatprep.subr.mxu0 0.0
    %601 = vmatpush1.msra.mxu0 0.0
    %602 = vmatprep.subr.mxu0 0.0
    %603 = vmatpush1.msra.mxu0 0.0
    %604 = vmatprep.subr.mxu0 0.0
    %605 = vmatpush1.msra.mxu0 0.0
    %606 = vmatprep.subr.mxu0 0.0
    %607 = vmatpush1.msra.mxu0 0.0
    %608 = vmatprep.subr.mxu0 0.0
    %609 = vmatpush1.msra.mxu0 0.0
    %610 = vmatprep.subr.mxu0 0.0
    %611 = vmatpush1.msra.mxu0 0.0
    %612 = vmatprep.subr.mxu0 0.0
    %613 = vmatpush1.msra.mxu0 0.0
    %614 = vmatprep.subr.mxu0 0.0
    %615 = vmatpush1.msra.mxu0 0.0
    %616 = vmatprep.subr.mxu0 0.0
    %617 = vmatpush1.msra.mxu0 0.0
    %618 = vmatprep.mubr.f32.mxu0 0.0
    %v619 = vand.u32 %v108, 4294901760
    %v620 = vsub.f32 %v108, %v619
    %621 = vmatmul.mubr.f32.gmra.mrb[0].mxu0 %v620
    %v622 = vpop.f32.mrb[0].mxu0
    %v623 = vadd.f32 %v519, %v622
    %v624 = vpop.f32.mrb[0].mxu0
    %625 = vdwg.mxu0
    %626 = vmatprep.subr.mxu0 0.0
    %v627 = vand.u32 %v90, 4294901760
    %628 = vmatpush1.msra.mxu0 %v627
    %629 = vmatprep.subr.mxu0 0.0
    %v630 = vand.u32 %v91, 4294901760
    %631 = vmatpush1.msra.mxu0 %v630
    %632 = vmatprep.subr.mxu0 0.0
    %v633 = vand.u32 %v92, 4294901760
    %634 = vmatpush1.msra.mxu0 %v633
    %635 = vmatprep.subr.mxu0 0.0
    %v636 = vand.u32 %v93, 4294901760
    %637 = vmatpush1.msra.mxu0 %v636
    %638 = vmatprep.subr.mxu0 0.0
    %v639 = vand.u32 %v94, 4294901760
    %640 = vmatpush1.msra.mxu0 %v639
    %641 = vmatprep.subr.mxu0 0.0
    %v642 = vand.u32 %v95, 4294901760
    %643 = vmatpush1.msra.mxu0 %v642
    %644 = vmatprep.subr.mxu0 0.0
    %v645 = vand.u32 %v96, 4294901760
    %646 = vmatpush1.msra.mxu0 %v645
    %647 = vmatprep.subr.mxu0 0.0
    %v648 = vand.u32 %v97, 4294901760
    %649 = vmatpush1.msra.mxu0 %v648
    %650 = vmatprep.subr.mxu0 0.0
    %v651 = vand.u32 %v98, 4294901760
    %652 = vmatpush1.msra.mxu0 %v651
    %653 = vmatprep.subr.mxu0 0.0
    %v654 = vand.u32 %v99, 4294901760
    %655 = vmatpush1.msra.mxu0 %v654
    %656 = vmatprep.subr.mxu0 0.0
    %v657 = vand.u32 %v100, 4294901760
    %658 = vmatpush1.msra.mxu0 %v657
    %659 = vmatprep.subr.mxu0 0.0
    %v660 = vand.u32 %v101, 4294901760
    %661 = vmatpush1.msra.mxu0 %v660
    %662 = vmatprep.subr.mxu0 0.0
    %v663 = vand.u32 %v102, 4294901760
    %664 = vmatpush1.msra.mxu0 %v663
    %665 = vmatprep.subr.mxu0 0.0
    %v666 = vand.u32 %v103, 4294901760
    %667 = vmatpush1.msra.mxu0 %v666
    %668 = vmatprep.subr.mxu0 0.0
    %v669 = vand.u32 %v104, 4294901760
    %670 = vmatpush1.msra.mxu0 %v669
    %671 = vmatprep.subr.mxu0 0.0
    %v672 = vand.u32 %v105, 4294901760
    %673 = vmatpush1.msra.mxu0 %v672
    %674 = vmatprep.subr.mxu0 0.0
    %675 = vmatpush1.msra.mxu0 0.0
    %676 = vmatprep.subr.mxu0 0.0
    %677 = vmatpush1.msra.mxu0 0.0
    %678 = vmatprep.subr.mxu0 0.0
    %679 = vmatpush1.msra.mxu0 0.0
    %680 = vmatprep.subr.mxu0 0.0
    %681 = vmatpush1.msra.mxu0 0.0
    %682 = vmatprep.subr.mxu0 0.0
    %683 = vmatpush1.msra.mxu0 0.0
    %684 = vmatprep.subr.mxu0 0.0
    %685 = vmatpush1.msra.mxu0 0.0
    %686 = vmatprep.subr.mxu0 0.0
    %687 = vmatpush1.msra.mxu0 0.0
    %688 = vmatprep.subr.mxu0 0.0
    %689 = vmatpush1.msra.mxu0 0.0
    %690 = vmatprep.subr.mxu0 0.0
    %691 = vmatpush1.msra.mxu0 0.0
    %692 = vmatprep.subr.mxu0 0.0
    %693 = vmatpush1.msra.mxu0 0.0
    %694 = vmatprep.subr.mxu0 0.0
    %695 = vmatpush1.msra.mxu0 0.0
    %696 = vmatprep.subr.mxu0 0.0
    %697 = vmatpush1.msra.mxu0 0.0
    %698 = vmatprep.subr.mxu0 0.0
    %699 = vmatpush1.msra.mxu0 0.0
    %700 = vmatprep.subr.mxu0 0.0
    %701 = vmatpush1.msra.mxu0 0.0
    %702 = vmatprep.subr.mxu0 0.0
    %703 = vmatpush1.msra.mxu0 0.0
    %704 = vmatprep.subr.mxu0 0.0
    %705 = vmatpush1.msra.mxu0 0.0
    %706 = vmatprep.mubr.f32.mxu0 0.0
    %v707 = vand.u32 %v108, 4294901760
    %v708 = vsub.f32 %v108, %v707
    %v709 = vand.u32 %v708, 4294901760
    %710 = vmatmul.mubr.f32.gmra.mrb[0].mxu0 %v709
    %v711 = vpop.f32.mrb[0].mxu0
    %v712 = vadd.f32 %v623, %v711
    %v713 = vpop.f32.mrb[0].mxu0
    %714 = vdwg.mxu0
    %715 = vmatprep.subr.mxu0 0.0
    %v716 = vand.u32 %v90, 4294901760
    %v717 = vsub.f32 %v90, %v716
    %v718 = vand.u32 %v717, 4294901760
    %719 = vmatpush1.msra.mxu0 %v718
    %720 = vmatprep.subr.mxu0 0.0
    %v721 = vand.u32 %v91, 4294901760
    %v722 = vsub.f32 %v91, %v721
    %v723 = vand.u32 %v722, 4294901760
    %724 = vmatpush1.msra.mxu0 %v723
    %725 = vmatprep.subr.mxu0 0.0
    %v726 = vand.u32 %v92, 4294901760
    %v727 = vsub.f32 %v92, %v726
    %v728 = vand.u32 %v727, 4294901760
    %729 = vmatpush1.msra.mxu0 %v728
    %730 = vmatprep.subr.mxu0 0.0
    %v731 = vand.u32 %v93, 4294901760
    %v732 = vsub.f32 %v93, %v731
    %v733 = vand.u32 %v732, 4294901760
    %734 = vmatpush1.msra.mxu0 %v733
    %735 = vmatprep.subr.mxu0 0.0
    %v736 = vand.u32 %v94, 4294901760
    %v737 = vsub.f32 %v94, %v736
    %v738 = vand.u32 %v737, 4294901760
    %739 = vmatpush1.msra.mxu0 %v738
    %740 = vmatprep.subr.mxu0 0.0
    %v741 = vand.u32 %v95, 4294901760
    %v742 = vsub.f32 %v95, %v741
    %v743 = vand.u32 %v742, 4294901760
    %744 = vmatpush1.msra.mxu0 %v743
    %745 = vmatprep.subr.mxu0 0.0
    %v746 = vand.u32 %v96, 4294901760
    %v747 = vsub.f32 %v96, %v746
    %v748 = vand.u32 %v747, 4294901760
    %749 = vmatpush1.msra.mxu0 %v748
    %750 = vmatprep.subr.mxu0 0.0
    %v751 = vand.u32 %v97, 4294901760
    %v752 = vsub.f32 %v97, %v751
    %v753 = vand.u32 %v752, 4294901760
    %754 = vmatpush1.msra.mxu0 %v753
    %755 = vmatprep.subr.mxu0 0.0
    %v756 = vand.u32 %v98, 4294901760
    %v757 = vsub.f32 %v98, %v756
    %v758 = vand.u32 %v757, 4294901760
    %759 = vmatpush1.msra.mxu0 %v758
    %760 = vmatprep.subr.mxu0 0.0
    %v761 = vand.u32 %v99, 4294901760
    %v762 = vsub.f32 %v99, %v761
    %v763 = vand.u32 %v762, 4294901760
    %764 = vmatpush1.msra.mxu0 %v763
    %765 = vmatprep.subr.mxu0 0.0
    %v766 = vand.u32 %v100, 4294901760
    %v767 = vsub.f32 %v100, %v766
    %v768 = vand.u32 %v767, 4294901760
    %769 = vmatpush1.msra.mxu0 %v768
    %770 = vmatprep.subr.mxu0 0.0
    %v771 = vand.u32 %v101, 4294901760
    %v772 = vsub.f32 %v101, %v771
    %v773 = vand.u32 %v772, 4294901760
    %774 = vmatpush1.msra.mxu0 %v773
    %775 = vmatprep.subr.mxu0 0.0
    %v776 = vand.u32 %v102, 4294901760
    %v777 = vsub.f32 %v102, %v776
    %v778 = vand.u32 %v777, 4294901760
    %779 = vmatpush1.msra.mxu0 %v778
    %780 = vmatprep.subr.mxu0 0.0
    %v781 = vand.u32 %v103, 4294901760
    %v782 = vsub.f32 %v103, %v781
    %v783 = vand.u32 %v782, 4294901760
    %784 = vmatpush1.msra.mxu0 %v783
    %785 = vmatprep.subr.mxu0 0.0
    %v786 = vand.u32 %v104, 4294901760
    %v787 = vsub.f32 %v104, %v786
    %v788 = vand.u32 %v787, 4294901760
    %789 = vmatpush1.msra.mxu0 %v788
    %790 = vmatprep.subr.mxu0 0.0
    %v791 = vand.u32 %v105, 4294901760
    %v792 = vsub.f32 %v105, %v791
    %v793 = vand.u32 %v792, 4294901760
    %794 = vmatpush1.msra.mxu0 %v793
    %795 = vmatprep.subr.mxu0 0.0
    %796 = vmatpush1.msra.mxu0 0.0
    %797 = vmatprep.subr.mxu0 0.0
    %798 = vmatpush1.msra.mxu0 0.0
    %799 = vmatprep.subr.mxu0 0.0
    %800 = vmatpush1.msra.mxu0 0.0
    %801 = vmatprep.subr.mxu0 0.0
    %802 = vmatpush1.msra.mxu0 0.0
    %803 = vmatprep.subr.mxu0 0.0
    %804 = vmatpush1.msra.mxu0 0.0
    %805 = vmatprep.subr.mxu0 0.0
    %806 = vmatpush1.msra.mxu0 0.0
    %807 = vmatprep.subr.mxu0 0.0
    %808 = vmatpush1.msra.mxu0 0.0
    %809 = vmatprep.subr.mxu0 0.0
    %810 = vmatpush1.msra.mxu0 0.0
    %811 = vmatprep.subr.mxu0 0.0
    %812 = vmatpush1.msra.mxu0 0.0
    %813 = vmatprep.subr.mxu0 0.0
    %814 = vmatpush1.msra.mxu0 0.0
    %815 = vmatprep.subr.mxu0 0.0
    %816 = vmatpush1.msra.mxu0 0.0
    %817 = vmatprep.subr.mxu0 0.0
    %818 = vmatpush1.msra.mxu0 0.0
    %819 = vmatprep.subr.mxu0 0.0
    %820 = vmatpush1.msra.mxu0 0.0
    %821 = vmatprep.subr.mxu0 0.0
    %822 = vmatpush1.msra.mxu0 0.0
    %823 = vmatprep.subr.mxu0 0.0
    %824 = vmatpush1.msra.mxu0 0.0
    %825 = vmatprep.subr.mxu0 0.0
    %826 = vmatpush1.msra.mxu0 0.0
    %827 = vmatprep.mubr.f32.mxu0 0.0
    %v828 = vand.u32 %v108, 4294901760
    %829 = vmatmul.mubr.f32.gmra.mrb[0].mxu0 %v828
    %v830 = vpop.f32.mrb[0].mxu0
    %v831 = vadd.f32 %v712, %v830
    %v832 = vpop.f32.mrb[0].mxu0
    %833 = vdwg.mxu0
    %834 = vmatprep.subr.mxu0 0.0
    %v835 = vand.u32 %v90, 4294901760
    %836 = vmatpush1.msra.mxu0 %v835
    %837 = vmatprep.subr.mxu0 0.0
    %v838 = vand.u32 %v91, 4294901760
    %839 = vmatpush1.msra.mxu0 %v838
    %840 = vmatprep.subr.mxu0 0.0
    %v841 = vand.u32 %v92, 4294901760
    %842 = vmatpush1.msra.mxu0 %v841
    %843 = vmatprep.subr.mxu0 0.0
    %v844 = vand.u32 %v93, 4294901760
    %845 = vmatpush1.msra.mxu0 %v844
    %846 = vmatprep.subr.mxu0 0.0
    %v847 = vand.u32 %v94, 4294901760
    %848 = vmatpush1.msra.mxu0 %v847
    %849 = vmatprep.subr.mxu0 0.0
    %v850 = vand.u32 %v95, 4294901760
    %851 = vmatpush1.msra.mxu0 %v850
    %852 = vmatprep.subr.mxu0 0.0
    %v853 = vand.u32 %v96, 4294901760
    %854 = vmatpush1.msra.mxu0 %v853
    %855 = vmatprep.subr.mxu0 0.0
    %v856 = vand.u32 %v97, 4294901760
    %857 = vmatpush1.msra.mxu0 %v856
    %858 = vmatprep.subr.mxu0 0.0
    %v859 = vand.u32 %v98, 4294901760
    %860 = vmatpush1.msra.mxu0 %v859
    %861 = vmatprep.subr.mxu0 0.0
    %v862 = vand.u32 %v99, 4294901760
    %863 = vmatpush1.msra.mxu0 %v862
    %864 = vmatprep.subr.mxu0 0.0
    %v865 = vand.u32 %v100, 4294901760
    %866 = vmatpush1.msra.mxu0 %v865
    %867 = vmatprep.subr.mxu0 0.0
    %v868 = vand.u32 %v101, 4294901760
    %869 = vmatpush1.msra.mxu0 %v868
    %870 = vmatprep.subr.mxu0 0.0
    %v871 = vand.u32 %v102, 4294901760
    %872 = vmatpush1.msra.mxu0 %v871
    %873 = vmatprep.subr.mxu0 0.0
    %v874 = vand.u32 %v103, 4294901760
    %875 = vmatpush1.msra.mxu0 %v874
    %876 = vmatprep.subr.mxu0 0.0
    %v877 = vand.u32 %v104, 4294901760
    %878 = vmatpush1.msra.mxu0 %v877
    %879 = vmatprep.subr.mxu0 0.0
    %v880 = vand.u32 %v105, 4294901760
    %881 = vmatpush1.msra.mxu0 %v880
    %882 = vmatprep.subr.mxu0 0.0
    %883 = vmatpush1.msra.mxu0 0.0
    %884 = vmatprep.subr.mxu0 0.0
    %885 = vmatpush1.msra.mxu0 0.0
    %886 = vmatprep.subr.mxu0 0.0
    %887 = vmatpush1.msra.mxu0 0.0
    %888 = vmatprep.subr.mxu0 0.0
    %889 = vmatpush1.msra.mxu0 0.0
    %890 = vmatprep.subr.mxu0 0.0
    %891 = vmatpush1.msra.mxu0 0.0
    %892 = vmatprep.subr.mxu0 0.0
    %893 = vmatpush1.msra.mxu0 0.0
    %894 = vmatprep.subr.mxu0 0.0
    %895 = vmatpush1.msra.mxu0 0.0
    %896 = vmatprep.subr.mxu0 0.0
    %897 = vmatpush1.msra.mxu0 0.0
    %898 = vmatprep.subr.mxu0 0.0
    %899 = vmatpush1.msra.mxu0 0.0
    %900 = vmatprep.subr.mxu0 0.0
    %901 = vmatpush1.msra.mxu0 0.0
    %902 = vmatprep.subr.mxu0 0.0
    %903 = vmatpush1.msra.mxu0 0.0
    %904 = vmatprep.subr.mxu0 0.0
    %905 = vmatpush1.msra.mxu0 0.0
    %906 = vmatprep.subr.mxu0 0.0
    %907 = vmatpush1.msra.mxu0 0.0
    %908 = vmatprep.subr.mxu0 0.0
    %909 = vmatpush1.msra.mxu0 0.0
    %910 = vmatprep.subr.mxu0 0.0
    %911 = vmatpush1.msra.mxu0 0.0
    %912 = vmatprep.subr.mxu0 0.0
    %913 = vmatpush1.msra.mxu0 0.0
    %914 = vmatprep.mubr.f32.mxu0 0.0
    %v915 = vand.u32 %v108, 4294901760
    %916 = vmatmul.mubr.f32.gmra.mrb[0].mxu0 %v915
    %v917 = vpop.f32.mrb[0].mxu0
    %v918 = vadd.f32 %v831, %v917
    %v919 = vpop.f32.mrb[0].mxu0
    %920 = vdwg.mxu0
    %vm921 = vcmask 64512
    %v923 = vsel %vm921, %v918, 0
    %925 = vmatprep.subr.mxu0 0.0
    %v926 = vand.u32 %v106, 4294901760
    %927 = vmatpush1.msra.mxu0 %v926
    %928 = vmatprep.subr.mxu0 0.0
    %929 = vmatpush1.msra.mxu0 0.0
    %930 = vmatprep.subr.mxu0 0.0
    %931 = vmatpush1.msra.mxu0 0.0
    %932 = vmatprep.subr.mxu0 0.0
    %933 = vmatpush1.msra.mxu0 0.0
    %934 = vmatprep.subr.mxu0 0.0
    %935 = vmatpush1.msra.mxu0 0.0
    %936 = vmatprep.subr.mxu0 0.0
    %937 = vmatpush1.msra.mxu0 0.0
    %938 = vmatprep.subr.mxu0 0.0
    %939 = vmatpush1.msra.mxu0 0.0
    %940 = vmatprep.subr.mxu0 0.0
    %941 = vmatpush1.msra.mxu0 0.0
    %942 = vmatprep.subr.mxu0 0.0
    %943 = vmatpush1.msra.mxu0 0.0
    %944 = vmatprep.subr.mxu0 0.0
    %945 = vmatpush1.msra.mxu0 0.0
    %946 = vmatprep.subr.mxu0 0.0
    %947 = vmatpush1.msra.mxu0 0.0
    %948 = vmatprep.subr.mxu0 0.0
    %949 = vmatpush1.msra.mxu0 0.0
    %950 = vmatprep.subr.mxu0 0.0
    %951 = vmatpush1.msra.mxu0 0.0
    %952 = vmatprep.subr.mxu0 0.0
    %953 = vmatpush1.msra.mxu0 0.0
    %954 = vmatprep.subr.mxu0 0.0
    %955 = vmatpush1.msra.mxu0 0.0
    %956 = vmatprep.subr.mxu0 0.0
    %957 = vmatpush1.msra.mxu0 0.0
    %958 = vmatprep.subr.mxu0 0.0
    %959 = vmatpush1.msra.mxu0 0.0
    %960 = vmatprep.subr.mxu0 0.0
    %961 = vmatpush1.msra.mxu0 0.0
    %962 = vmatprep.subr.mxu0 0.0
    %963 = vmatpush1.msra.mxu0 0.0
    %964 = vmatprep.subr.mxu0 0.0
    %965 = vmatpush1.msra.mxu0 0.0
    %966 = vmatprep.subr.mxu0 0.0
    %967 = vmatpush1.msra.mxu0 0.0
    %968 = vmatprep.subr.mxu0 0.0
    %969 = vmatpush1.msra.mxu0 0.0
    %970 = vmatprep.subr.mxu0 0.0
    %971 = vmatpush1.msra.mxu0 0.0
    %972 = vmatprep.subr.mxu0 0.0
    %973 = vmatpush1.msra.mxu0 0.0
    %974 = vmatprep.subr.mxu0 0.0
    %975 = vmatpush1.msra.mxu0 0.0
    %976 = vmatprep.subr.mxu0 0.0
    %977 = vmatpush1.msra.mxu0 0.0
    %978 = vmatprep.subr.mxu0 0.0
    %979 = vmatpush1.msra.mxu0 0.0
    %980 = vmatprep.subr.mxu0 0.0
    %981 = vmatpush1.msra.mxu0 0.0
    %982 = vmatprep.subr.mxu0 0.0
    %983 = vmatpush1.msra.mxu0 0.0
    %984 = vmatprep.subr.mxu0 0.0
    %985 = vmatpush1.msra.mxu0 0.0
    %986 = vmatprep.subr.mxu0 0.0
    %987 = vmatpush1.msra.mxu0 0.0
    %988 = vmatprep.subr.mxu0 0.0
    %989 = vmatpush1.msra.mxu0 0.0
    %990 = vmatprep.mubr.f32.mxu0 0.0
    %v991 = vand.u32 %v923, 4294901760
    %v992 = vsub.f32 %v923, %v991
    %v993 = vand.u32 %v992, 4294901760
    %v994 = vsub.f32 %v992, %v993
    %v995 = vand.u32 %v994, 4294901760
    %996 = vmatmul.mubr.f32.gmra.mrb[0].mxu0 %v995
    %v997 = vpop.f32.mrb[0].mxu0
    %v998 = vadd.f32 0.0, %v997
    %v999 = vpop.f32.mrb[0].mxu0
    %1000 = vdwg.mxu0
    %1001 = vmatprep.subr.mxu0 0.0
    %v1002 = vand.u32 %v106, 4294901760
    %v1003 = vsub.f32 %v106, %v1002
    %v1004 = vand.u32 %v1003, 4294901760
    %v1005 = vsub.f32 %v1003, %v1004
    %v1006 = vand.u32 %v1005, 4294901760
    %1007 = vmatpush1.msra.mxu0 %v1006
    %1008 = vmatprep.subr.mxu0 0.0
    %1009 = vmatpush1.msra.mxu0 0.0
    %1010 = vmatprep.subr.mxu0 0.0
    %1011 = vmatpush1.msra.mxu0 0.0
    %1012 = vmatprep.subr.mxu0 0.0
    %1013 = vmatpush1.msra.mxu0 0.0
    %1014 = vmatprep.subr.mxu0 0.0
    %1015 = vmatpush1.msra.mxu0 0.0
    %1016 = vmatprep.subr.mxu0 0.0
    %1017 = vmatpush1.msra.mxu0 0.0
    %1018 = vmatprep.subr.mxu0 0.0
    %1019 = vmatpush1.msra.mxu0 0.0
    %1020 = vmatprep.subr.mxu0 0.0
    %1021 = vmatpush1.msra.mxu0 0.0
    %1022 = vmatprep.subr.mxu0 0.0
    %1023 = vmatpush1.msra.mxu0 0.0
    %1024 = vmatprep.subr.mxu0 0.0
    %1025 = vmatpush1.msra.mxu0 0.0
    %1026 = vmatprep.subr.mxu0 0.0
    %1027 = vmatpush1.msra.mxu0 0.0
    %1028 = vmatprep.subr.mxu0 0.0
    %1029 = vmatpush1.msra.mxu0 0.0
    %1030 = vmatprep.subr.mxu0 0.0
    %1031 = vmatpush1.msra.mxu0 0.0
    %1032 = vmatprep.subr.mxu0 0.0
    %1033 = vmatpush1.msra.mxu0 0.0
    %1034 = vmatprep.subr.mxu0 0.0
    %1035 = vmatpush1.msra.mxu0 0.0
    %1036 = vmatprep.subr.mxu0 0.0
    %1037 = vmatpush1.msra.mxu0 0.0
    %1038 = vmatprep.subr.mxu0 0.0
    %1039 = vmatpush1.msra.mxu0 0.0
    %1040 = vmatprep.subr.mxu0 0.0
    %1041 = vmatpush1.msra.mxu0 0.0
    %1042 = vmatprep.subr.mxu0 0.0
    %1043 = vmatpush1.msra.mxu0 0.0
    %1044 = vmatprep.subr.mxu0 0.0
    %1045 = vmatpush1.msra.mxu0 0.0
    %1046 = vmatprep.subr.mxu0 0.0
    %1047 = vmatpush1.msra.mxu0 0.0
    %1048 = vmatprep.subr.mxu0 0.0
    %1049 = vmatpush1.msra.mxu0 0.0
    %1050 = vmatprep.subr.mxu0 0.0
    %1051 = vmatpush1.msra.mxu0 0.0
    %1052 = vmatprep.subr.mxu0 0.0
    %1053 = vmatpush1.msra.mxu0 0.0
    %1054 = vmatprep.subr.mxu0 0.0
    %1055 = vmatpush1.msra.mxu0 0.0
    %1056 = vmatprep.subr.mxu0 0.0
    %1057 = vmatpush1.msra.mxu0 0.0
    %1058 = vmatprep.subr.mxu0 0.0
    %1059 = vmatpush1.msra.mxu0 0.0
    %1060 = vmatprep.subr.mxu0 0.0
    %1061 = vmatpush1.msra.mxu0 0.0
    %1062 = vmatprep.subr.mxu0 0.0
    %1063 = vmatpush1.msra.mxu0 0.0
    %1064 = vmatprep.subr.mxu0 0.0
    %1065 = vmatpush1.msra.mxu0 0.0
    %1066 = vmatprep.subr.mxu0 0.0
    %1067 = vmatpush1.msra.mxu0 0.0
    %1068 = vmatprep.subr.mxu0 0.0
    %1069 = vmatpush1.msra.mxu0 0.0
    %1070 = vmatprep.mubr.f32.mxu0 0.0
    %v1071 = vand.u32 %v923, 4294901760
    %1072 = vmatmul.mubr.f32.gmra.mrb[0].mxu0 %v1071
    %v1073 = vpop.f32.mrb[0].mxu0
    %v1074 = vadd.f32 %v998, %v1073
    %v1075 = vpop.f32.mrb[0].mxu0
    %1076 = vdwg.mxu0
    %1077 = vmatprep.subr.mxu0 0.0
    %v1078 = vand.u32 %v106, 4294901760
    %v1079 = vsub.f32 %v106, %v1078
    %1080 = vmatpush1.msra.mxu0 %v1079
    %1081 = vmatprep.subr.mxu0 0.0
    %1082 = vmatpush1.msra.mxu0 0.0
    %1083 = vmatprep.subr.mxu0 0.0
    %1084 = vmatpush1.msra.mxu0 0.0
    %1085 = vmatprep.subr.mxu0 0.0
    %1086 = vmatpush1.msra.mxu0 0.0
    %1087 = vmatprep.subr.mxu0 0.0
    %1088 = vmatpush1.msra.mxu0 0.0
    %1089 = vmatprep.subr.mxu0 0.0
    %1090 = vmatpush1.msra.mxu0 0.0
    %1091 = vmatprep.subr.mxu0 0.0
    %1092 = vmatpush1.msra.mxu0 0.0
    %1093 = vmatprep.subr.mxu0 0.0
    %1094 = vmatpush1.msra.mxu0 0.0
    %1095 = vmatprep.subr.mxu0 0.0
    %1096 = vmatpush1.msra.mxu0 0.0
    %1097 = vmatprep.subr.mxu0 0.0
    %1098 = vmatpush1.msra.mxu0 0.0
    %1099 = vmatprep.subr.mxu0 0.0
    %1100 = vmatpush1.msra.mxu0 0.0
    %1101 = vmatprep.subr.mxu0 0.0
    %1102 = vmatpush1.msra.mxu0 0.0
    %1103 = vmatprep.subr.mxu0 0.0
    %1104 = vmatpush1.msra.mxu0 0.0
    %1105 = vmatprep.subr.mxu0 0.0
    %1106 = vmatpush1.msra.mxu0 0.0
    %1107 = vmatprep.subr.mxu0 0.0
    %1108 = vmatpush1.msra.mxu0 0.0
    %1109 = vmatprep.subr.mxu0 0.0
    %1110 = vmatpush1.msra.mxu0 0.0
    %1111 = vmatprep.subr.mxu0 0.0
    %1112 = vmatpush1.msra.mxu0 0.0
    %1113 = vmatprep.subr.mxu0 0.0
    %1114 = vmatpush1.msra.mxu0 0.0
    %1115 = vmatprep.subr.mxu0 0.0
    %1116 = vmatpush1.msra.mxu0 0.0
    %1117 = vmatprep.subr.mxu0 0.0
    %1118 = vmatpush1.msra.mxu0 0.0
    %1119 = vmatprep.subr.mxu0 0.0
    %1120 = vmatpush1.msra.mxu0 0.0
    %1121 = vmatprep.subr.mxu0 0.0
    %1122 = vmatpush1.msra.mxu0 0.0
    %1123 = vmatprep.subr.mxu0 0.0
    %1124 = vmatpush1.msra.mxu0 0.0
    %1125 = vmatprep.subr.mxu0 0.0
    %1126 = vmatpush1.msra.mxu0 0.0
    %1127 = vmatprep.subr.mxu0 0.0
    %1128 = vmatpush1.msra.mxu0 0.0
    %1129 = vmatprep.subr.mxu0 0.0
    %1130 = vmatpush1.msra.mxu0 0.0
    %1131 = vmatprep.subr.mxu0 0.0
    %1132 = vmatpush1.msra.mxu0 0.0
    %1133 = vmatprep.subr.mxu0 0.0
    %1134 = vmatpush1.msra.mxu0 0.0
    %1135 = vmatprep.subr.mxu0 0.0
    %1136 = vmatpush1.msra.mxu0 0.0
    %1137 = vmatprep.subr.mxu0 0.0
    %1138 = vmatpush1.msra.mxu0 0.0
    %1139 = vmatprep.subr.mxu0 0.0
    %1140 = vmatpush1.msra.mxu0 0.0
    %1141 = vmatprep.subr.mxu0 0.0
    %1142 = vmatpush1.msra.mxu0 0.0
    %1143 = vmatprep.mubr.f32.mxu0 0.0
    %v1144 = vand.u32 %v923, 4294901760
    %v1145 = vsub.f32 %v923, %v1144
    %1146 = vmatmul.mubr.f32.gmra.mrb[0].mxu0 %v1145
    %v1147 = vpop.f32.mrb[0].mxu0
    %v1148 = vadd.f32 %v1074, %v1147
    %v1149 = vpop.f32.mrb[0].mxu0
    %1150 = vdwg.mxu0
    %1151 = vmatprep.subr.mxu0 0.0
    %v1152 = vand.u32 %v106, 4294901760
    %1153 = vmatpush1.msra.mxu0 %v1152
    %1154 = vmatprep.subr.mxu0 0.0
    %1155 = vmatpush1.msra.mxu0 0.0
    %1156 = vmatprep.subr.mxu0 0.0
    %1157 = vmatpush1.msra.mxu0 0.0
    %1158 = vmatprep.subr.mxu0 0.0
    %1159 = vmatpush1.msra.mxu0 0.0
    %1160 = vmatprep.subr.mxu0 0.0
    %1161 = vmatpush1.msra.mxu0 0.0
    %1162 = vmatprep.subr.mxu0 0.0
    %1163 = vmatpush1.msra.mxu0 0.0
    %1164 = vmatprep.subr.mxu0 0.0
    %1165 = vmatpush1.msra.mxu0 0.0
    %1166 = vmatprep.subr.mxu0 0.0
    %1167 = vmatpush1.msra.mxu0 0.0
    %1168 = vmatprep.subr.mxu0 0.0
    %1169 = vmatpush1.msra.mxu0 0.0
    %1170 = vmatprep.subr.mxu0 0.0
    %1171 = vmatpush1.msra.mxu0 0.0
    %1172 = vmatprep.subr.mxu0 0.0
    %1173 = vmatpush1.msra.mxu0 0.0
    %1174 = vmatprep.subr.mxu0 0.0
    %1175 = vmatpush1.msra.mxu0 0.0
    %1176 = vmatprep.subr.mxu0 0.0
    %1177 = vmatpush1.msra.mxu0 0.0
    %1178 = vmatprep.subr.mxu0 0.0
    %1179 = vmatpush1.msra.mxu0 0.0
    %1180 = vmatprep.subr.mxu0 0.0
    %1181 = vmatpush1.msra.mxu0 0.0
    %1182 = vmatprep.subr.mxu0 0.0
    %1183 = vmatpush1.msra.mxu0 0.0
    %1184 = vmatprep.subr.mxu0 0.0
    %1185 = vmatpush1.msra.mxu0 0.0
    %1186 = vmatprep.subr.mxu0 0.0
    %1187 = vmatpush1.msra.mxu0 0.0
    %1188 = vmatprep.subr.mxu0 0.0
    %1189 = vmatpush1.msra.mxu0 0.0
    %1190 = vmatprep.subr.mxu0 0.0
    %1191 = vmatpush1.msra.mxu0 0.0
    %1192 = vmatprep.subr.mxu0 0.0
    %1193 = vmatpush1.msra.mxu0 0.0
    %1194 = vmatprep.subr.mxu0 0.0
    %1195 = vmatpush1.msra.mxu0 0.0
    %1196 = vmatprep.subr.mxu0 0.0
    %1197 = vmatpush1.msra.mxu0 0.0
    %1198 = vmatprep.subr.mxu0 0.0
    %1199 = vmatpush1.msra.mxu0 0.0
    %1200 = vmatprep.subr.mxu0 0.0
    %1201 = vmatpush1.msra.mxu0 0.0
    %1202 = vmatprep.subr.mxu0 0.0
    %1203 = vmatpush1.msra.mxu0 0.0
    %1204 = vmatprep.subr.mxu0 0.0
    %1205 = vmatpush1.msra.mxu0 0.0
    %1206 = vmatprep.subr.mxu0 0.0
    %1207 = vmatpush1.msra.mxu0 0.0
    %1208 = vmatprep.subr.mxu0 0.0
    %1209 = vmatpush1.msra.mxu0 0.0
    %1210 = vmatprep.subr.mxu0 0.0
    %1211 = vmatpush1.msra.mxu0 0.0
    %1212 = vmatprep.subr.mxu0 0.0
    %1213 = vmatpush1.msra.mxu0 0.0
    %1214 = vmatprep.subr.mxu0 0.0
    %1215 = vmatpush1.msra.mxu0 0.0
    %1216 = vmatprep.mubr.f32.mxu0 0.0
    %v1217 = vand.u32 %v923, 4294901760
    %v1218 = vsub.f32 %v923, %v1217
    %v1219 = vand.u32 %v1218, 4294901760
    %1220 = vmatmul.mubr.f32.gmra.mrb[0].mxu0 %v1219
    %v1221 = vpop.f32.mrb[0].mxu0
    %v1222 = vadd.f32 %v1148, %v1221
    %v1223 = vpop.f32.mrb[0].mxu0
    %1224 = vdwg.mxu0
    %1225 = vmatprep.subr.mxu0 0.0
    %v1226 = vand.u32 %v106, 4294901760
    %v1227 = vsub.f32 %v106, %v1226
    %v1228 = vand.u32 %v1227, 4294901760
    %1229 = vmatpush1.msra.mxu0 %v1228
    %1230 = vmatprep.subr.mxu0 0.0
    %1231 = vmatpush1.msra.mxu0 0.0
    %1232 = vmatprep.subr.mxu0 0.0
    %1233 = vmatpush1.msra.mxu0 0.0
    %1234 = vmatprep.subr.mxu0 0.0
    %1235 = vmatpush1.msra.mxu0 0.0
    %1236 = vmatprep.subr.mxu0 0.0
    %1237 = vmatpush1.msra.mxu0 0.0
    %1238 = vmatprep.subr.mxu0 0.0
    %1239 = vmatpush1.msra.mxu0 0.0
    %1240 = vmatprep.subr.mxu0 0.0
    %1241 = vmatpush1.msra.mxu0 0.0
    %1242 = vmatprep.subr.mxu0 0.0
    %1243 = vmatpush1.msra.mxu0 0.0
    %1244 = vmatprep.subr.mxu0 0.0
    %1245 = vmatpush1.msra.mxu0 0.0
    %1246 = vmatprep.subr.mxu0 0.0
    %1247 = vmatpush1.msra.mxu0 0.0
    %1248 = vmatprep.subr.mxu0 0.0
    %1249 = vmatpush1.msra.mxu0 0.0
    %1250 = vmatprep.subr.mxu0 0.0
    %1251 = vmatpush1.msra.mxu0 0.0
    %1252 = vmatprep.subr.mxu0 0.0
    %1253 = vmatpush1.msra.mxu0 0.0
    %1254 = vmatprep.subr.mxu0 0.0
    %1255 = vmatpush1.msra.mxu0 0.0
    %1256 = vmatprep.subr.mxu0 0.0
    %1257 = vmatpush1.msra.mxu0 0.0
    %1258 = vmatprep.subr.mxu0 0.0
    %1259 = vmatpush1.msra.mxu0 0.0
    %1260 = vmatprep.subr.mxu0 0.0
    %1261 = vmatpush1.msra.mxu0 0.0
    %1262 = vmatprep.subr.mxu0 0.0
    %1263 = vmatpush1.msra.mxu0 0.0
    %1264 = vmatprep.subr.mxu0 0.0
    %1265 = vmatpush1.msra.mxu0 0.0
    %1266 = vmatprep.subr.mxu0 0.0
    %1267 = vmatpush1.msra.mxu0 0.0
    %1268 = vmatprep.subr.mxu0 0.0
    %1269 = vmatpush1.msra.mxu0 0.0
    %1270 = vmatprep.subr.mxu0 0.0
    %1271 = vmatpush1.msra.mxu0 0.0
    %1272 = vmatprep.subr.mxu0 0.0
    %1273 = vmatpush1.msra.mxu0 0.0
    %1274 = vmatprep.subr.mxu0 0.0
    %1275 = vmatpush1.msra.mxu0 0.0
    %1276 = vmatprep.subr.mxu0 0.0
    %1277 = vmatpush1.msra.mxu0 0.0
    %1278 = vmatprep.subr.mxu0 0.0
    %1279 = vmatpush1.msra.mxu0 0.0
    %1280 = vmatprep.subr.mxu0 0.0
    %1281 = vmatpush1.msra.mxu0 0.0
    %1282 = vmatprep.subr.mxu0 0.0
    %1283 = vmatpush1.msra.mxu0 0.0
    %1284 = vmatprep.subr.mxu0 0.0
    %1285 = vmatpush1.msra.mxu0 0.0
    %1286 = vmatprep.subr.mxu0 0.0
    %1287 = vmatpush1.msra.mxu0 0.0
    %1288 = vmatprep.subr.mxu0 0.0
    %1289 = vmatpush1.msra.mxu0 0.0
    %1290 = vmatprep.subr.mxu0 0.0
    %1291 = vmatpush1.msra.mxu0 0.0
    %1292 = vmatprep.mubr.f32.mxu0 0.0
    %v1293 = vand.u32 %v923, 4294901760
    %1294 = vmatmul.mubr.f32.gmra.mrb[0].mxu0 %v1293
    %v1295 = vpop.f32.mrb[0].mxu0
    %v1296 = vadd.f32 %v1222, %v1295
    %v1297 = vpop.f32.mrb[0].mxu0
    %1298 = vdwg.mxu0
    %1299 = vmatprep.subr.mxu0 0.0
    %v1300 = vand.u32 %v106, 4294901760
    %1301 = vmatpush1.msra.mxu0 %v1300
    %1302 = vmatprep.subr.mxu0 0.0
    %1303 = vmatpush1.msra.mxu0 0.0
    %1304 = vmatprep.subr.mxu0 0.0
    %1305 = vmatpush1.msra.mxu0 0.0
    %1306 = vmatprep.subr.mxu0 0.0
    %1307 = vmatpush1.msra.mxu0 0.0
    %1308 = vmatprep.subr.mxu0 0.0
    %1309 = vmatpush1.msra.mxu0 0.0
    %1310 = vmatprep.subr.mxu0 0.0
    %1311 = vmatpush1.msra.mxu0 0.0
    %1312 = vmatprep.subr.mxu0 0.0
    %1313 = vmatpush1.msra.mxu0 0.0
    %1314 = vmatprep.subr.mxu0 0.0
    %1315 = vmatpush1.msra.mxu0 0.0
    %1316 = vmatprep.subr.mxu0 0.0
    %1317 = vmatpush1.msra.mxu0 0.0
    %1318 = vmatprep.subr.mxu0 0.0
    %1319 = vmatpush1.msra.mxu0 0.0
    %1320 = vmatprep.subr.mxu0 0.0
    %1321 = vmatpush1.msra.mxu0 0.0
    %1322 = vmatprep.subr.mxu0 0.0
    %1323 = vmatpush1.msra.mxu0 0.0
    %1324 = vmatprep.subr.mxu0 0.0
    %1325 = vmatpush1.msra.mxu0 0.0
    %1326 = vmatprep.subr.mxu0 0.0
    %1327 = vmatpush1.msra.mxu0 0.0
    %1328 = vmatprep.subr.mxu0 0.0
    %1329 = vmatpush1.msra.mxu0 0.0
    %1330 = vmatprep.subr.mxu0 0.0
    %1331 = vmatpush1.msra.mxu0 0.0
    %1332 = vmatprep.subr.mxu0 0.0
    %1333 = vmatpush1.msra.mxu0 0.0
    %1334 = vmatprep.subr.mxu0 0.0
    %1335 = vmatpush1.msra.mxu0 0.0
    %1336 = vmatprep.subr.mxu0 0.0
    %1337 = vmatpush1.msra.mxu0 0.0
    %1338 = vmatprep.subr.mxu0 0.0
    %1339 = vmatpush1.msra.mxu0 0.0
    %1340 = vmatprep.subr.mxu0 0.0
    %1341 = vmatpush1.msra.mxu0 0.0
    %1342 = vmatprep.subr.mxu0 0.0
    %1343 = vmatpush1.msra.mxu0 0.0
    %1344 = vmatprep.subr.mxu0 0.0
    %1345 = vmatpush1.msra.mxu0 0.0
    %1346 = vmatprep.subr.mxu0 0.0
    %1347 = vmatpush1.msra.mxu0 0.0
    %1348 = vmatprep.subr.mxu0 0.0
    %1349 = vmatpush1.msra.mxu0 0.0
    %1350 = vmatprep.subr.mxu0 0.0
    %1351 = vmatpush1.msra.mxu0 0.0
    %1352 = vmatprep.subr.mxu0 0.0
    %1353 = vmatpush1.msra.mxu0 0.0
    %1354 = vmatprep.subr.mxu0 0.0
    %1355 = vmatpush1.msra.mxu0 0.0
    %1356 = vmatprep.subr.mxu0 0.0
    %1357 = vmatpush1.msra.mxu0 0.0
    %1358 = vmatprep.subr.mxu0 0.0
    %1359 = vmatpush1.msra.mxu0 0.0
    %1360 = vmatprep.subr.mxu0 0.0
    %1361 = vmatpush1.msra.mxu0 0.0
    %1362 = vmatprep.subr.mxu0 0.0
    %1363 = vmatpush1.msra.mxu0 0.0
    %1364 = vmatprep.mubr.f32.mxu0 0.0
    %v1365 = vand.u32 %v923, 4294901760
    %1366 = vmatmul.mubr.f32.gmra.mrb[0].mxu0 %v1365
    %v1367 = vpop.f32.mrb[0].mxu0
    %v1368 = vadd.f32 %v1296, %v1367
    %v1369 = vpop.f32.mrb[0].mxu0
    %1370 = vdwg.mxu0
    %v1371 = vadd.f32 %v279, %v1368
    %v1372 = vsel %vm89, %v1371, 0.0
    %1373 = vrot.lane.b32.xlu0 %v1372, 1
    %v1374 = vpop.permute.xlu0 %1373
    %1375 = vrot.lane.b32.xlu0 %v1372, 127
    %v1376 = vpop.permute.xlu0 %1375
    %v1377 = vmul.f32 %v113, %v1374
    %v1378 = vmul.f32 %v115, %v1372
    %v1379 = vadd.f32 %v1377, %v1378
    %v1380 = vmul.f32 %v118, %v1376
    %v1381 = vadd.f32 %v1379, %v1380
    %v1382 = vadd.f32 %v1381, %v121
    %v1383 = vmax.f32 %v1382, 0.0
    %v1384 = vmul.f32 %v124, %v1383
    %v1385 = vmul.f32 %v126, %v1383
    %v1386 = vmul.f32 %v128, %v1383
    %v1387 = vmul.f32 %v130, %v1374
    %v1388 = vmul.f32 %v132, %v1372
    %v1389 = vadd.f32 %v1387, %v1388
    %v1390 = vmul.f32 %v135, %v1376
    %v1391 = vadd.f32 %v1389, %v1390
    %v1392 = vadd.f32 %v1391, %v138
    %v1393 = vmax.f32 %v1392, 0.0
    %v1394 = vmul.f32 %v141, %v1393
    %v1395 = vadd.f32 %v1384, %v1394
    %v1396 = vmul.f32 %v144, %v1393
    %v1397 = vadd.f32 %v1385, %v1396
    %v1398 = vmul.f32 %v147, %v1393
    %v1399 = vadd.f32 %v1386, %v1398
    %v1400 = vmul.f32 %v150, %v1374
    %v1401 = vmul.f32 %v152, %v1372
    %v1402 = vadd.f32 %v1400, %v1401
    %v1403 = vmul.f32 %v155, %v1376
    %v1404 = vadd.f32 %v1402, %v1403
    %v1405 = vadd.f32 %v1404, %v158
    %v1406 = vmax.f32 %v1405, 0.0
    %v1407 = vmul.f32 %v161, %v1406
    %v1408 = vadd.f32 %v1395, %v1407
    %v1409 = vmul.f32 %v164, %v1406
    %v1410 = vadd.f32 %v1397, %v1409
    %v1411 = vmul.f32 %v167, %v1406
    %v1412 = vadd.f32 %v1399, %v1411
    %v1413 = vmul.f32 %v170, %v1374
    %v1414 = vmul.f32 %v172, %v1372
    %v1415 = vadd.f32 %v1413, %v1414
    %v1416 = vmul.f32 %v175, %v1376
    %v1417 = vadd.f32 %v1415, %v1416
    %v1418 = vadd.f32 %v1417, %v178
    %v1419 = vmax.f32 %v1418, 0.0
    %v1420 = vmul.f32 %v181, %v1419
    %v1421 = vadd.f32 %v1408, %v1420
    %v1422 = vmul.f32 %v184, %v1419
    %v1423 = vadd.f32 %v1410, %v1422
    %v1424 = vmul.f32 %v187, %v1419
    %v1425 = vadd.f32 %v1412, %v1424
    %v1426 = vmul.f32 %v190, %v1374
    %v1427 = vmul.f32 %v192, %v1372
    %v1428 = vadd.f32 %v1426, %v1427
    %v1429 = vmul.f32 %v195, %v1376
    %v1430 = vadd.f32 %v1428, %v1429
    %v1431 = vadd.f32 %v1430, %v198
    %v1432 = vmax.f32 %v1431, 0.0
    %v1433 = vmul.f32 %v201, %v1432
    %v1434 = vadd.f32 %v1421, %v1433
    %v1435 = vmul.f32 %v204, %v1432
    %v1436 = vadd.f32 %v1423, %v1435
    %v1437 = vmul.f32 %v207, %v1432
    %v1438 = vadd.f32 %v1425, %v1437
    %v1439 = vmul.f32 %v210, %v1374
    %v1440 = vmul.f32 %v212, %v1372
    %v1441 = vadd.f32 %v1439, %v1440
    %v1442 = vmul.f32 %v215, %v1376
    %v1443 = vadd.f32 %v1441, %v1442
    %v1444 = vadd.f32 %v1443, %v218
    %v1445 = vmax.f32 %v1444, 0.0
    %v1446 = vmul.f32 %v221, %v1445
    %v1447 = vadd.f32 %v1434, %v1446
    %v1448 = vmul.f32 %v224, %v1445
    %v1449 = vadd.f32 %v1436, %v1448
    %v1450 = vmul.f32 %v227, %v1445
    %v1451 = vadd.f32 %v1438, %v1450
    %v1452 = vmul.f32 %v230, %v1374
    %v1453 = vmul.f32 %v232, %v1372
    %v1454 = vadd.f32 %v1452, %v1453
    %v1455 = vmul.f32 %v235, %v1376
    %v1456 = vadd.f32 %v1454, %v1455
    %v1457 = vadd.f32 %v1456, %v238
    %v1458 = vmax.f32 %v1457, 0.0
    %v1459 = vmul.f32 %v241, %v1458
    %v1460 = vadd.f32 %v1447, %v1459
    %v1461 = vmul.f32 %v244, %v1458
    %v1462 = vadd.f32 %v1449, %v1461
    %v1463 = vmul.f32 %v247, %v1458
    %v1464 = vadd.f32 %v1451, %v1463
    %v1465 = vmul.f32 %v250, %v1374
    %v1466 = vmul.f32 %v252, %v1372
    %v1467 = vadd.f32 %v1465, %v1466
    %v1468 = vmul.f32 %v255, %v1376
    %v1469 = vadd.f32 %v1467, %v1468
    %v1470 = vadd.f32 %v1469, %v258
    %v1471 = vmax.f32 %v1470, 0.0
    %v1472 = vmul.f32 %v261, %v1471
    %v1473 = vadd.f32 %v1460, %v1472
    %v1474 = vmul.f32 %v264, %v1471
    %v1475 = vadd.f32 %v1462, %v1474
    %v1476 = vmul.f32 %v267, %v1471
    %v1477 = vadd.f32 %v1464, %v1476
    %v1478 = vsel %vm89, %v1473, 0.0
    %v1479 = vsel %vm89, %v1477, 0.0
    %1480 = vrot.lane.b32.xlu0 %v1478, 1
    %v1481 = vpop.permute.xlu0 %1480
    %v1482 = vadd.f32 %v1481, %v1475
    %1483 = vrot.lane.b32.xlu0 %v1479, 127
    %v1484 = vpop.permute.xlu0 %1483
    %v1485 = vadd.f32 %v1482, %v1484
    %v1486 = vadd.f32 %v1485, %v278
    %1487 = vmatprep.subr.mxu0 0.0
    %v1488 = vand.u32 %v90, 4294901760
    %1489 = vmatpush1.msra.mxu0 %v1488
    %1490 = vmatprep.subr.mxu0 0.0
    %v1491 = vand.u32 %v91, 4294901760
    %1492 = vmatpush1.msra.mxu0 %v1491
    %1493 = vmatprep.subr.mxu0 0.0
    %v1494 = vand.u32 %v92, 4294901760
    %1495 = vmatpush1.msra.mxu0 %v1494
    %1496 = vmatprep.subr.mxu0 0.0
    %v1497 = vand.u32 %v93, 4294901760
    %1498 = vmatpush1.msra.mxu0 %v1497
    %1499 = vmatprep.subr.mxu0 0.0
    %v1500 = vand.u32 %v94, 4294901760
    %1501 = vmatpush1.msra.mxu0 %v1500
    %1502 = vmatprep.subr.mxu0 0.0
    %v1503 = vand.u32 %v95, 4294901760
    %1504 = vmatpush1.msra.mxu0 %v1503
    %1505 = vmatprep.subr.mxu0 0.0
    %v1506 = vand.u32 %v96, 4294901760
    %1507 = vmatpush1.msra.mxu0 %v1506
    %1508 = vmatprep.subr.mxu0 0.0
    %v1509 = vand.u32 %v97, 4294901760
    %1510 = vmatpush1.msra.mxu0 %v1509
    %1511 = vmatprep.subr.mxu0 0.0
    %v1512 = vand.u32 %v98, 4294901760
    %1513 = vmatpush1.msra.mxu0 %v1512
    %1514 = vmatprep.subr.mxu0 0.0
    %v1515 = vand.u32 %v99, 4294901760
    %1516 = vmatpush1.msra.mxu0 %v1515
    %1517 = vmatprep.subr.mxu0 0.0
    %v1518 = vand.u32 %v100, 4294901760
    %1519 = vmatpush1.msra.mxu0 %v1518
    %1520 = vmatprep.subr.mxu0 0.0
    %v1521 = vand.u32 %v101, 4294901760
    %1522 = vmatpush1.msra.mxu0 %v1521
    %1523 = vmatprep.subr.mxu0 0.0
    %v1524 = vand.u32 %v102, 4294901760
    %1525 = vmatpush1.msra.mxu0 %v1524
    %1526 = vmatprep.subr.mxu0 0.0
    %v1527 = vand.u32 %v103, 4294901760
    %1528 = vmatpush1.msra.mxu0 %v1527
    %1529 = vmatprep.subr.mxu0 0.0
    %v1530 = vand.u32 %v104, 4294901760
    %1531 = vmatpush1.msra.mxu0 %v1530
    %1532 = vmatprep.subr.mxu0 0.0
    %v1533 = vand.u32 %v105, 4294901760
    %1534 = vmatpush1.msra.mxu0 %v1533
    %1535 = vmatprep.subr.mxu0 0.0
    %1536 = vmatpush1.msra.mxu0 0.0
    %1537 = vmatprep.subr.mxu0 0.0
    %1538 = vmatpush1.msra.mxu0 0.0
    %1539 = vmatprep.subr.mxu0 0.0
    %1540 = vmatpush1.msra.mxu0 0.0
    %1541 = vmatprep.subr.mxu0 0.0
    %1542 = vmatpush1.msra.mxu0 0.0
    %1543 = vmatprep.subr.mxu0 0.0
    %1544 = vmatpush1.msra.mxu0 0.0
    %1545 = vmatprep.subr.mxu0 0.0
    %1546 = vmatpush1.msra.mxu0 0.0
    %1547 = vmatprep.subr.mxu0 0.0
    %1548 = vmatpush1.msra.mxu0 0.0
    %1549 = vmatprep.subr.mxu0 0.0
    %1550 = vmatpush1.msra.mxu0 0.0
    %1551 = vmatprep.subr.mxu0 0.0
    %1552 = vmatpush1.msra.mxu0 0.0
    %1553 = vmatprep.subr.mxu0 0.0
    %1554 = vmatpush1.msra.mxu0 0.0
    %1555 = vmatprep.subr.mxu0 0.0
    %1556 = vmatpush1.msra.mxu0 0.0
    %1557 = vmatprep.subr.mxu0 0.0
    %1558 = vmatpush1.msra.mxu0 0.0
    %1559 = vmatprep.subr.mxu0 0.0
    %1560 = vmatpush1.msra.mxu0 0.0
    %1561 = vmatprep.subr.mxu0 0.0
    %1562 = vmatpush1.msra.mxu0 0.0
    %1563 = vmatprep.subr.mxu0 0.0
    %1564 = vmatpush1.msra.mxu0 0.0
    %1565 = vmatprep.subr.mxu0 0.0
    %1566 = vmatpush1.msra.mxu0 0.0
    %1567 = vmatprep.mubr.f32.mxu0 0.0
    %v1568 = vand.u32 %v1372, 4294901760
    %v1569 = vsub.f32 %v1372, %v1568
    %v1570 = vand.u32 %v1569, 4294901760
    %v1571 = vsub.f32 %v1569, %v1570
    %v1572 = vand.u32 %v1571, 4294901760
    %1573 = vmatmul.mubr.f32.gmra.mrb[0].mxu0 %v1572
    %v1574 = vpop.f32.mrb[0].mxu0
    %v1575 = vadd.f32 0.0, %v1574
    %v1576 = vpop.f32.mrb[0].mxu0
    %1577 = vdwg.mxu0
    %1578 = vmatprep.subr.mxu0 0.0
    %v1579 = vand.u32 %v90, 4294901760
    %v1580 = vsub.f32 %v90, %v1579
    %v1581 = vand.u32 %v1580, 4294901760
    %v1582 = vsub.f32 %v1580, %v1581
    %v1583 = vand.u32 %v1582, 4294901760
    %1584 = vmatpush1.msra.mxu0 %v1583
    %1585 = vmatprep.subr.mxu0 0.0
    %v1586 = vand.u32 %v91, 4294901760
    %v1587 = vsub.f32 %v91, %v1586
    %v1588 = vand.u32 %v1587, 4294901760
    %v1589 = vsub.f32 %v1587, %v1588
    %v1590 = vand.u32 %v1589, 4294901760
    %1591 = vmatpush1.msra.mxu0 %v1590
    %1592 = vmatprep.subr.mxu0 0.0
    %v1593 = vand.u32 %v92, 4294901760
    %v1594 = vsub.f32 %v92, %v1593
    %v1595 = vand.u32 %v1594, 4294901760
    %v1596 = vsub.f32 %v1594, %v1595
    %v1597 = vand.u32 %v1596, 4294901760
    %1598 = vmatpush1.msra.mxu0 %v1597
    %1599 = vmatprep.subr.mxu0 0.0
    %v1600 = vand.u32 %v93, 4294901760
    %v1601 = vsub.f32 %v93, %v1600
    %v1602 = vand.u32 %v1601, 4294901760
    %v1603 = vsub.f32 %v1601, %v1602
    %v1604 = vand.u32 %v1603, 4294901760
    %1605 = vmatpush1.msra.mxu0 %v1604
    %1606 = vmatprep.subr.mxu0 0.0
    %v1607 = vand.u32 %v94, 4294901760
    %v1608 = vsub.f32 %v94, %v1607
    %v1609 = vand.u32 %v1608, 4294901760
    %v1610 = vsub.f32 %v1608, %v1609
    %v1611 = vand.u32 %v1610, 4294901760
    %1612 = vmatpush1.msra.mxu0 %v1611
    %1613 = vmatprep.subr.mxu0 0.0
    %v1614 = vand.u32 %v95, 4294901760
    %v1615 = vsub.f32 %v95, %v1614
    %v1616 = vand.u32 %v1615, 4294901760
    %v1617 = vsub.f32 %v1615, %v1616
    %v1618 = vand.u32 %v1617, 4294901760
    %1619 = vmatpush1.msra.mxu0 %v1618
    %1620 = vmatprep.subr.mxu0 0.0
    %v1621 = vand.u32 %v96, 4294901760
    %v1622 = vsub.f32 %v96, %v1621
    %v1623 = vand.u32 %v1622, 4294901760
    %v1624 = vsub.f32 %v1622, %v1623
    %v1625 = vand.u32 %v1624, 4294901760
    %1626 = vmatpush1.msra.mxu0 %v1625
    %1627 = vmatprep.subr.mxu0 0.0
    %v1628 = vand.u32 %v97, 4294901760
    %v1629 = vsub.f32 %v97, %v1628
    %v1630 = vand.u32 %v1629, 4294901760
    %v1631 = vsub.f32 %v1629, %v1630
    %v1632 = vand.u32 %v1631, 4294901760
    %1633 = vmatpush1.msra.mxu0 %v1632
    %1634 = vmatprep.subr.mxu0 0.0
    %v1635 = vand.u32 %v98, 4294901760
    %v1636 = vsub.f32 %v98, %v1635
    %v1637 = vand.u32 %v1636, 4294901760
    %v1638 = vsub.f32 %v1636, %v1637
    %v1639 = vand.u32 %v1638, 4294901760
    %1640 = vmatpush1.msra.mxu0 %v1639
    %1641 = vmatprep.subr.mxu0 0.0
    %v1642 = vand.u32 %v99, 4294901760
    %v1643 = vsub.f32 %v99, %v1642
    %v1644 = vand.u32 %v1643, 4294901760
    %v1645 = vsub.f32 %v1643, %v1644
    %v1646 = vand.u32 %v1645, 4294901760
    %1647 = vmatpush1.msra.mxu0 %v1646
    %1648 = vmatprep.subr.mxu0 0.0
    %v1649 = vand.u32 %v100, 4294901760
    %v1650 = vsub.f32 %v100, %v1649
    %v1651 = vand.u32 %v1650, 4294901760
    %v1652 = vsub.f32 %v1650, %v1651
    %v1653 = vand.u32 %v1652, 4294901760
    %1654 = vmatpush1.msra.mxu0 %v1653
    %1655 = vmatprep.subr.mxu0 0.0
    %v1656 = vand.u32 %v101, 4294901760
    %v1657 = vsub.f32 %v101, %v1656
    %v1658 = vand.u32 %v1657, 4294901760
    %v1659 = vsub.f32 %v1657, %v1658
    %v1660 = vand.u32 %v1659, 4294901760
    %1661 = vmatpush1.msra.mxu0 %v1660
    %1662 = vmatprep.subr.mxu0 0.0
    %v1663 = vand.u32 %v102, 4294901760
    %v1664 = vsub.f32 %v102, %v1663
    %v1665 = vand.u32 %v1664, 4294901760
    %v1666 = vsub.f32 %v1664, %v1665
    %v1667 = vand.u32 %v1666, 4294901760
    %1668 = vmatpush1.msra.mxu0 %v1667
    %1669 = vmatprep.subr.mxu0 0.0
    %v1670 = vand.u32 %v103, 4294901760
    %v1671 = vsub.f32 %v103, %v1670
    %v1672 = vand.u32 %v1671, 4294901760
    %v1673 = vsub.f32 %v1671, %v1672
    %v1674 = vand.u32 %v1673, 4294901760
    %1675 = vmatpush1.msra.mxu0 %v1674
    %1676 = vmatprep.subr.mxu0 0.0
    %v1677 = vand.u32 %v104, 4294901760
    %v1678 = vsub.f32 %v104, %v1677
    %v1679 = vand.u32 %v1678, 4294901760
    %v1680 = vsub.f32 %v1678, %v1679
    %v1681 = vand.u32 %v1680, 4294901760
    %1682 = vmatpush1.msra.mxu0 %v1681
    %1683 = vmatprep.subr.mxu0 0.0
    %v1684 = vand.u32 %v105, 4294901760
    %v1685 = vsub.f32 %v105, %v1684
    %v1686 = vand.u32 %v1685, 4294901760
    %v1687 = vsub.f32 %v1685, %v1686
    %v1688 = vand.u32 %v1687, 4294901760
    %1689 = vmatpush1.msra.mxu0 %v1688
    %1690 = vmatprep.subr.mxu0 0.0
    %1691 = vmatpush1.msra.mxu0 0.0
    %1692 = vmatprep.subr.mxu0 0.0
    %1693 = vmatpush1.msra.mxu0 0.0
    %1694 = vmatprep.subr.mxu0 0.0
    %1695 = vmatpush1.msra.mxu0 0.0
    %1696 = vmatprep.subr.mxu0 0.0
    %1697 = vmatpush1.msra.mxu0 0.0
    %1698 = vmatprep.subr.mxu0 0.0
    %1699 = vmatpush1.msra.mxu0 0.0
    %1700 = vmatprep.subr.mxu0 0.0
    %1701 = vmatpush1.msra.mxu0 0.0
    %1702 = vmatprep.subr.mxu0 0.0
    %1703 = vmatpush1.msra.mxu0 0.0
    %1704 = vmatprep.subr.mxu0 0.0
    %1705 = vmatpush1.msra.mxu0 0.0
    %1706 = vmatprep.subr.mxu0 0.0
    %1707 = vmatpush1.msra.mxu0 0.0
    %1708 = vmatprep.subr.mxu0 0.0
    %1709 = vmatpush1.msra.mxu0 0.0
    %1710 = vmatprep.subr.mxu0 0.0
    %1711 = vmatpush1.msra.mxu0 0.0
    %1712 = vmatprep.subr.mxu0 0.0
    %1713 = vmatpush1.msra.mxu0 0.0
    %1714 = vmatprep.subr.mxu0 0.0
    %1715 = vmatpush1.msra.mxu0 0.0
    %1716 = vmatprep.subr.mxu0 0.0
    %1717 = vmatpush1.msra.mxu0 0.0
    %1718 = vmatprep.subr.mxu0 0.0
    %1719 = vmatpush1.msra.mxu0 0.0
    %1720 = vmatprep.subr.mxu0 0.0
    %1721 = vmatpush1.msra.mxu0 0.0
    %1722 = vmatprep.mubr.f32.mxu0 0.0
    %v1723 = vand.u32 %v1372, 4294901760
    %1724 = vmatmul.mubr.f32.gmra.mrb[0].mxu0 %v1723
    %v1725 = vpop.f32.mrb[0].mxu0
    %v1726 = vadd.f32 %v1575, %v1725
    %v1727 = vpop.f32.mrb[0].mxu0
    %1728 = vdwg.mxu0
    %1729 = vmatprep.subr.mxu0 0.0
    %v1730 = vand.u32 %v90, 4294901760
    %v1731 = vsub.f32 %v90, %v1730
    %1732 = vmatpush1.msra.mxu0 %v1731
    %1733 = vmatprep.subr.mxu0 0.0
    %v1734 = vand.u32 %v91, 4294901760
    %v1735 = vsub.f32 %v91, %v1734
    %1736 = vmatpush1.msra.mxu0 %v1735
    %1737 = vmatprep.subr.mxu0 0.0
    %v1738 = vand.u32 %v92, 4294901760
    %v1739 = vsub.f32 %v92, %v1738
    %1740 = vmatpush1.msra.mxu0 %v1739
    %1741 = vmatprep.subr.mxu0 0.0
    %v1742 = vand.u32 %v93, 4294901760
    %v1743 = vsub.f32 %v93, %v1742
    %1744 = vmatpush1.msra.mxu0 %v1743
    %1745 = vmatprep.subr.mxu0 0.0
    %v1746 = vand.u32 %v94, 4294901760
    %v1747 = vsub.f32 %v94, %v1746
    %1748 = vmatpush1.msra.mxu0 %v1747
    %1749 = vmatprep.subr.mxu0 0.0
    %v1750 = vand.u32 %v95, 4294901760
    %v1751 = vsub.f32 %v95, %v1750
    %1752 = vmatpush1.msra.mxu0 %v1751
    %1753 = vmatprep.subr.mxu0 0.0
    %v1754 = vand.u32 %v96, 4294901760
    %v1755 = vsub.f32 %v96, %v1754
    %1756 = vmatpush1.msra.mxu0 %v1755
    %1757 = vmatprep.subr.mxu0 0.0
    %v1758 = vand.u32 %v97, 4294901760
    %v1759 = vsub.f32 %v97, %v1758
    %1760 = vmatpush1.msra.mxu0 %v1759
    %1761 = vmatprep.subr.mxu0 0.0
    %v1762 = vand.u32 %v98, 4294901760
    %v1763 = vsub.f32 %v98, %v1762
    %1764 = vmatpush1.msra.mxu0 %v1763
    %1765 = vmatprep.subr.mxu0 0.0
    %v1766 = vand.u32 %v99, 4294901760
    %v1767 = vsub.f32 %v99, %v1766
    %1768 = vmatpush1.msra.mxu0 %v1767
    %1769 = vmatprep.subr.mxu0 0.0
    %v1770 = vand.u32 %v100, 4294901760
    %v1771 = vsub.f32 %v100, %v1770
    %1772 = vmatpush1.msra.mxu0 %v1771
    %1773 = vmatprep.subr.mxu0 0.0
    %v1774 = vand.u32 %v101, 4294901760
    %v1775 = vsub.f32 %v101, %v1774
    %1776 = vmatpush1.msra.mxu0 %v1775
    %1777 = vmatprep.subr.mxu0 0.0
    %v1778 = vand.u32 %v102, 4294901760
    %v1779 = vsub.f32 %v102, %v1778
    %1780 = vmatpush1.msra.mxu0 %v1779
    %1781 = vmatprep.subr.mxu0 0.0
    %v1782 = vand.u32 %v103, 4294901760
    %v1783 = vsub.f32 %v103, %v1782
    %1784 = vmatpush1.msra.mxu0 %v1783
    %1785 = vmatprep.subr.mxu0 0.0
    %v1786 = vand.u32 %v104, 4294901760
    %v1787 = vsub.f32 %v104, %v1786
    %1788 = vmatpush1.msra.mxu0 %v1787
    %1789 = vmatprep.subr.mxu0 0.0
    %v1790 = vand.u32 %v105, 4294901760
    %v1791 = vsub.f32 %v105, %v1790
    %1792 = vmatpush1.msra.mxu0 %v1791
    %1793 = vmatprep.subr.mxu0 0.0
    %1794 = vmatpush1.msra.mxu0 0.0
    %1795 = vmatprep.subr.mxu0 0.0
    %1796 = vmatpush1.msra.mxu0 0.0
    %1797 = vmatprep.subr.mxu0 0.0
    %1798 = vmatpush1.msra.mxu0 0.0
    %1799 = vmatprep.subr.mxu0 0.0
    %1800 = vmatpush1.msra.mxu0 0.0
    %1801 = vmatprep.subr.mxu0 0.0
    %1802 = vmatpush1.msra.mxu0 0.0
    %1803 = vmatprep.subr.mxu0 0.0
    %1804 = vmatpush1.msra.mxu0 0.0
    %1805 = vmatprep.subr.mxu0 0.0
    %1806 = vmatpush1.msra.mxu0 0.0
    %1807 = vmatprep.subr.mxu0 0.0
    %1808 = vmatpush1.msra.mxu0 0.0
    %1809 = vmatprep.subr.mxu0 0.0
    %1810 = vmatpush1.msra.mxu0 0.0
    %1811 = vmatprep.subr.mxu0 0.0
    %1812 = vmatpush1.msra.mxu0 0.0
    %1813 = vmatprep.subr.mxu0 0.0
    %1814 = vmatpush1.msra.mxu0 0.0
    %1815 = vmatprep.subr.mxu0 0.0
    %1816 = vmatpush1.msra.mxu0 0.0
    %1817 = vmatprep.subr.mxu0 0.0
    %1818 = vmatpush1.msra.mxu0 0.0
    %1819 = vmatprep.subr.mxu0 0.0
    %1820 = vmatpush1.msra.mxu0 0.0
    %1821 = vmatprep.subr.mxu0 0.0
    %1822 = vmatpush1.msra.mxu0 0.0
    %1823 = vmatprep.subr.mxu0 0.0
    %1824 = vmatpush1.msra.mxu0 0.0
    %1825 = vmatprep.mubr.f32.mxu0 0.0
    %v1826 = vand.u32 %v1372, 4294901760
    %v1827 = vsub.f32 %v1372, %v1826
    %1828 = vmatmul.mubr.f32.gmra.mrb[0].mxu0 %v1827
    %v1829 = vpop.f32.mrb[0].mxu0
    %v1830 = vadd.f32 %v1726, %v1829
    %v1831 = vpop.f32.mrb[0].mxu0
    %1832 = vdwg.mxu0
    %1833 = vmatprep.subr.mxu0 0.0
    %v1834 = vand.u32 %v90, 4294901760
    %1835 = vmatpush1.msra.mxu0 %v1834
    %1836 = vmatprep.subr.mxu0 0.0
    %v1837 = vand.u32 %v91, 4294901760
    %1838 = vmatpush1.msra.mxu0 %v1837
    %1839 = vmatprep.subr.mxu0 0.0
    %v1840 = vand.u32 %v92, 4294901760
    %1841 = vmatpush1.msra.mxu0 %v1840
    %1842 = vmatprep.subr.mxu0 0.0
    %v1843 = vand.u32 %v93, 4294901760
    %1844 = vmatpush1.msra.mxu0 %v1843
    %1845 = vmatprep.subr.mxu0 0.0
    %v1846 = vand.u32 %v94, 4294901760
    %1847 = vmatpush1.msra.mxu0 %v1846
    %1848 = vmatprep.subr.mxu0 0.0
    %v1849 = vand.u32 %v95, 4294901760
    %1850 = vmatpush1.msra.mxu0 %v1849
    %1851 = vmatprep.subr.mxu0 0.0
    %v1852 = vand.u32 %v96, 4294901760
    %1853 = vmatpush1.msra.mxu0 %v1852
    %1854 = vmatprep.subr.mxu0 0.0
    %v1855 = vand.u32 %v97, 4294901760
    %1856 = vmatpush1.msra.mxu0 %v1855
    %1857 = vmatprep.subr.mxu0 0.0
    %v1858 = vand.u32 %v98, 4294901760
    %1859 = vmatpush1.msra.mxu0 %v1858
    %1860 = vmatprep.subr.mxu0 0.0
    %v1861 = vand.u32 %v99, 4294901760
    %1862 = vmatpush1.msra.mxu0 %v1861
    %1863 = vmatprep.subr.mxu0 0.0
    %v1864 = vand.u32 %v100, 4294901760
    %1865 = vmatpush1.msra.mxu0 %v1864
    %1866 = vmatprep.subr.mxu0 0.0
    %v1867 = vand.u32 %v101, 4294901760
    %1868 = vmatpush1.msra.mxu0 %v1867
    %1869 = vmatprep.subr.mxu0 0.0
    %v1870 = vand.u32 %v102, 4294901760
    %1871 = vmatpush1.msra.mxu0 %v1870
    %1872 = vmatprep.subr.mxu0 0.0
    %v1873 = vand.u32 %v103, 4294901760
    %1874 = vmatpush1.msra.mxu0 %v1873
    %1875 = vmatprep.subr.mxu0 0.0
    %v1876 = vand.u32 %v104, 4294901760
    %1877 = vmatpush1.msra.mxu0 %v1876
    %1878 = vmatprep.subr.mxu0 0.0
    %v1879 = vand.u32 %v105, 4294901760
    %1880 = vmatpush1.msra.mxu0 %v1879
    %1881 = vmatprep.subr.mxu0 0.0
    %1882 = vmatpush1.msra.mxu0 0.0
    %1883 = vmatprep.subr.mxu0 0.0
    %1884 = vmatpush1.msra.mxu0 0.0
    %1885 = vmatprep.subr.mxu0 0.0
    %1886 = vmatpush1.msra.mxu0 0.0
    %1887 = vmatprep.subr.mxu0 0.0
    %1888 = vmatpush1.msra.mxu0 0.0
    %1889 = vmatprep.subr.mxu0 0.0
    %1890 = vmatpush1.msra.mxu0 0.0
    %1891 = vmatprep.subr.mxu0 0.0
    %1892 = vmatpush1.msra.mxu0 0.0
    %1893 = vmatprep.subr.mxu0 0.0
    %1894 = vmatpush1.msra.mxu0 0.0
    %1895 = vmatprep.subr.mxu0 0.0
    %1896 = vmatpush1.msra.mxu0 0.0
    %1897 = vmatprep.subr.mxu0 0.0
    %1898 = vmatpush1.msra.mxu0 0.0
    %1899 = vmatprep.subr.mxu0 0.0
    %1900 = vmatpush1.msra.mxu0 0.0
    %1901 = vmatprep.subr.mxu0 0.0
    %1902 = vmatpush1.msra.mxu0 0.0
    %1903 = vmatprep.subr.mxu0 0.0
    %1904 = vmatpush1.msra.mxu0 0.0
    %1905 = vmatprep.subr.mxu0 0.0
    %1906 = vmatpush1.msra.mxu0 0.0
    %1907 = vmatprep.subr.mxu0 0.0
    %1908 = vmatpush1.msra.mxu0 0.0
    %1909 = vmatprep.subr.mxu0 0.0
    %1910 = vmatpush1.msra.mxu0 0.0
    %1911 = vmatprep.subr.mxu0 0.0
    %1912 = vmatpush1.msra.mxu0 0.0
    %1913 = vmatprep.mubr.f32.mxu0 0.0
    %v1914 = vand.u32 %v1372, 4294901760
    %v1915 = vsub.f32 %v1372, %v1914
    %v1916 = vand.u32 %v1915, 4294901760
    %1917 = vmatmul.mubr.f32.gmra.mrb[0].mxu0 %v1916
    %v1918 = vpop.f32.mrb[0].mxu0
    %v1919 = vadd.f32 %v1830, %v1918
    %v1920 = vpop.f32.mrb[0].mxu0
    %1921 = vdwg.mxu0
    %1922 = vmatprep.subr.mxu0 0.0
    %v1923 = vand.u32 %v90, 4294901760
    %v1924 = vsub.f32 %v90, %v1923
    %v1925 = vand.u32 %v1924, 4294901760
    %1926 = vmatpush1.msra.mxu0 %v1925
    %1927 = vmatprep.subr.mxu0 0.0
    %v1928 = vand.u32 %v91, 4294901760
    %v1929 = vsub.f32 %v91, %v1928
    %v1930 = vand.u32 %v1929, 4294901760
    %1931 = vmatpush1.msra.mxu0 %v1930
    %1932 = vmatprep.subr.mxu0 0.0
    %v1933 = vand.u32 %v92, 4294901760
    %v1934 = vsub.f32 %v92, %v1933
    %v1935 = vand.u32 %v1934, 4294901760
    %1936 = vmatpush1.msra.mxu0 %v1935
    %1937 = vmatprep.subr.mxu0 0.0
    %v1938 = vand.u32 %v93, 4294901760
    %v1939 = vsub.f32 %v93, %v1938
    %v1940 = vand.u32 %v1939, 4294901760
    %1941 = vmatpush1.msra.mxu0 %v1940
    %1942 = vmatprep.subr.mxu0 0.0
    %v1943 = vand.u32 %v94, 4294901760
    %v1944 = vsub.f32 %v94, %v1943
    %v1945 = vand.u32 %v1944, 4294901760
    %1946 = vmatpush1.msra.mxu0 %v1945
    %1947 = vmatprep.subr.mxu0 0.0
    %v1948 = vand.u32 %v95, 4294901760
    %v1949 = vsub.f32 %v95, %v1948
    %v1950 = vand.u32 %v1949, 4294901760
    %1951 = vmatpush1.msra.mxu0 %v1950
    %1952 = vmatprep.subr.mxu0 0.0
    %v1953 = vand.u32 %v96, 4294901760
    %v1954 = vsub.f32 %v96, %v1953
    %v1955 = vand.u32 %v1954, 4294901760
    %1956 = vmatpush1.msra.mxu0 %v1955
    %1957 = vmatprep.subr.mxu0 0.0
    %v1958 = vand.u32 %v97, 4294901760
    %v1959 = vsub.f32 %v97, %v1958
    %v1960 = vand.u32 %v1959, 4294901760
    %1961 = vmatpush1.msra.mxu0 %v1960
    %1962 = vmatprep.subr.mxu0 0.0
    %v1963 = vand.u32 %v98, 4294901760
    %v1964 = vsub.f32 %v98, %v1963
    %v1965 = vand.u32 %v1964, 4294901760
    %1966 = vmatpush1.msra.mxu0 %v1965
    %1967 = vmatprep.subr.mxu0 0.0
    %v1968 = vand.u32 %v99, 4294901760
    %v1969 = vsub.f32 %v99, %v1968
    %v1970 = vand.u32 %v1969, 4294901760
    %1971 = vmatpush1.msra.mxu0 %v1970
    %1972 = vmatprep.subr.mxu0 0.0
    %v1973 = vand.u32 %v100, 4294901760
    %v1974 = vsub.f32 %v100, %v1973
    %v1975 = vand.u32 %v1974, 4294901760
    %1976 = vmatpush1.msra.mxu0 %v1975
    %1977 = vmatprep.subr.mxu0 0.0
    %v1978 = vand.u32 %v101, 4294901760
    %v1979 = vsub.f32 %v101, %v1978
    %v1980 = vand.u32 %v1979, 4294901760
    %1981 = vmatpush1.msra.mxu0 %v1980
    %1982 = vmatprep.subr.mxu0 0.0
    %v1983 = vand.u32 %v102, 4294901760
    %v1984 = vsub.f32 %v102, %v1983
    %v1985 = vand.u32 %v1984, 4294901760
    %1986 = vmatpush1.msra.mxu0 %v1985
    %1987 = vmatprep.subr.mxu0 0.0
    %v1988 = vand.u32 %v103, 4294901760
    %v1989 = vsub.f32 %v103, %v1988
    %v1990 = vand.u32 %v1989, 4294901760
    %1991 = vmatpush1.msra.mxu0 %v1990
    %1992 = vmatprep.subr.mxu0 0.0
    %v1993 = vand.u32 %v104, 4294901760
    %v1994 = vsub.f32 %v104, %v1993
    %v1995 = vand.u32 %v1994, 4294901760
    %1996 = vmatpush1.msra.mxu0 %v1995
    %1997 = vmatprep.subr.mxu0 0.0
    %v1998 = vand.u32 %v105, 4294901760
    %v1999 = vsub.f32 %v105, %v1998
    %v2000 = vand.u32 %v1999, 4294901760
    %2001 = vmatpush1.msra.mxu0 %v2000
    %2002 = vmatprep.subr.mxu0 0.0
    %2003 = vmatpush1.msra.mxu0 0.0
    %2004 = vmatprep.subr.mxu0 0.0
    %2005 = vmatpush1.msra.mxu0 0.0
    %2006 = vmatprep.subr.mxu0 0.0
    %2007 = vmatpush1.msra.mxu0 0.0
    %2008 = vmatprep.subr.mxu0 0.0
    %2009 = vmatpush1.msra.mxu0 0.0
    %2010 = vmatprep.subr.mxu0 0.0
    %2011 = vmatpush1.msra.mxu0 0.0
    %2012 = vmatprep.subr.mxu0 0.0
    %2013 = vmatpush1.msra.mxu0 0.0
    %2014 = vmatprep.subr.mxu0 0.0
    %2015 = vmatpush1.msra.mxu0 0.0
    %2016 = vmatprep.subr.mxu0 0.0
    %2017 = vmatpush1.msra.mxu0 0.0
    %2018 = vmatprep.subr.mxu0 0.0
    %2019 = vmatpush1.msra.mxu0 0.0
    %2020 = vmatprep.subr.mxu0 0.0
    %2021 = vmatpush1.msra.mxu0 0.0
    %2022 = vmatprep.subr.mxu0 0.0
    %2023 = vmatpush1.msra.mxu0 0.0
    %2024 = vmatprep.subr.mxu0 0.0
    %2025 = vmatpush1.msra.mxu0 0.0
    %2026 = vmatprep.subr.mxu0 0.0
    %2027 = vmatpush1.msra.mxu0 0.0
    %2028 = vmatprep.subr.mxu0 0.0
    %2029 = vmatpush1.msra.mxu0 0.0
    %2030 = vmatprep.subr.mxu0 0.0
    %2031 = vmatpush1.msra.mxu0 0.0
    %2032 = vmatprep.subr.mxu0 0.0
    %2033 = vmatpush1.msra.mxu0 0.0
    %2034 = vmatprep.mubr.f32.mxu0 0.0
    %v2035 = vand.u32 %v1372, 4294901760
    %2036 = vmatmul.mubr.f32.gmra.mrb[0].mxu0 %v2035
    %v2037 = vpop.f32.mrb[0].mxu0
    %v2038 = vadd.f32 %v1919, %v2037
    %v2039 = vpop.f32.mrb[0].mxu0
    %2040 = vdwg.mxu0
    %2041 = vmatprep.subr.mxu0 0.0
    %v2042 = vand.u32 %v90, 4294901760
    %2043 = vmatpush1.msra.mxu0 %v2042
    %2044 = vmatprep.subr.mxu0 0.0
    %v2045 = vand.u32 %v91, 4294901760
    %2046 = vmatpush1.msra.mxu0 %v2045
    %2047 = vmatprep.subr.mxu0 0.0
    %v2048 = vand.u32 %v92, 4294901760
    %2049 = vmatpush1.msra.mxu0 %v2048
    %2050 = vmatprep.subr.mxu0 0.0
    %v2051 = vand.u32 %v93, 4294901760
    %2052 = vmatpush1.msra.mxu0 %v2051
    %2053 = vmatprep.subr.mxu0 0.0
    %v2054 = vand.u32 %v94, 4294901760
    %2055 = vmatpush1.msra.mxu0 %v2054
    %2056 = vmatprep.subr.mxu0 0.0
    %v2057 = vand.u32 %v95, 4294901760
    %2058 = vmatpush1.msra.mxu0 %v2057
    %2059 = vmatprep.subr.mxu0 0.0
    %v2060 = vand.u32 %v96, 4294901760
    %2061 = vmatpush1.msra.mxu0 %v2060
    %2062 = vmatprep.subr.mxu0 0.0
    %v2063 = vand.u32 %v97, 4294901760
    %2064 = vmatpush1.msra.mxu0 %v2063
    %2065 = vmatprep.subr.mxu0 0.0
    %v2066 = vand.u32 %v98, 4294901760
    %2067 = vmatpush1.msra.mxu0 %v2066
    %2068 = vmatprep.subr.mxu0 0.0
    %v2069 = vand.u32 %v99, 4294901760
    %2070 = vmatpush1.msra.mxu0 %v2069
    %2071 = vmatprep.subr.mxu0 0.0
    %v2072 = vand.u32 %v100, 4294901760
    %2073 = vmatpush1.msra.mxu0 %v2072
    %2074 = vmatprep.subr.mxu0 0.0
    %v2075 = vand.u32 %v101, 4294901760
    %2076 = vmatpush1.msra.mxu0 %v2075
    %2077 = vmatprep.subr.mxu0 0.0
    %v2078 = vand.u32 %v102, 4294901760
    %2079 = vmatpush1.msra.mxu0 %v2078
    %2080 = vmatprep.subr.mxu0 0.0
    %v2081 = vand.u32 %v103, 4294901760
    %2082 = vmatpush1.msra.mxu0 %v2081
    %2083 = vmatprep.subr.mxu0 0.0
    %v2084 = vand.u32 %v104, 4294901760
    %2085 = vmatpush1.msra.mxu0 %v2084
    %2086 = vmatprep.subr.mxu0 0.0
    %v2087 = vand.u32 %v105, 4294901760
    %2088 = vmatpush1.msra.mxu0 %v2087
    %2089 = vmatprep.subr.mxu0 0.0
    %2090 = vmatpush1.msra.mxu0 0.0
    %2091 = vmatprep.subr.mxu0 0.0
    %2092 = vmatpush1.msra.mxu0 0.0
    %2093 = vmatprep.subr.mxu0 0.0
    %2094 = vmatpush1.msra.mxu0 0.0
    %2095 = vmatprep.subr.mxu0 0.0
    %2096 = vmatpush1.msra.mxu0 0.0
    %2097 = vmatprep.subr.mxu0 0.0
    %2098 = vmatpush1.msra.mxu0 0.0
    %2099 = vmatprep.subr.mxu0 0.0
    %2100 = vmatpush1.msra.mxu0 0.0
    %2101 = vmatprep.subr.mxu0 0.0
    %2102 = vmatpush1.msra.mxu0 0.0
    %2103 = vmatprep.subr.mxu0 0.0
    %2104 = vmatpush1.msra.mxu0 0.0
    %2105 = vmatprep.subr.mxu0 0.0
    %2106 = vmatpush1.msra.mxu0 0.0
    %2107 = vmatprep.subr.mxu0 0.0
    %2108 = vmatpush1.msra.mxu0 0.0
    %2109 = vmatprep.subr.mxu0 0.0
    %2110 = vmatpush1.msra.mxu0 0.0
    %2111 = vmatprep.subr.mxu0 0.0
    %2112 = vmatpush1.msra.mxu0 0.0
    %2113 = vmatprep.subr.mxu0 0.0
    %2114 = vmatpush1.msra.mxu0 0.0
    %2115 = vmatprep.subr.mxu0 0.0
    %2116 = vmatpush1.msra.mxu0 0.0
    %2117 = vmatprep.subr.mxu0 0.0
    %2118 = vmatpush1.msra.mxu0 0.0
    %2119 = vmatprep.subr.mxu0 0.0
    %2120 = vmatpush1.msra.mxu0 0.0
    %2121 = vmatprep.mubr.f32.mxu0 0.0
    %v2122 = vand.u32 %v1372, 4294901760
    %2123 = vmatmul.mubr.f32.gmra.mrb[0].mxu0 %v2122
    %v2124 = vpop.f32.mrb[0].mxu0
    %v2125 = vadd.f32 %v2038, %v2124
    %v2126 = vpop.f32.mrb[0].mxu0
    %2127 = vdwg.mxu0
    %v2129 = vsel %vm921, %v2125, 0
    %2131 = vmatprep.subr.mxu0 0.0
    %v2132 = vand.u32 %v106, 4294901760
    %2133 = vmatpush1.msra.mxu0 %v2132
    %2134 = vmatprep.subr.mxu0 0.0
    %2135 = vmatpush1.msra.mxu0 0.0
    %2136 = vmatprep.subr.mxu0 0.0
    %2137 = vmatpush1.msra.mxu0 0.0
    %2138 = vmatprep.subr.mxu0 0.0
    %2139 = vmatpush1.msra.mxu0 0.0
    %2140 = vmatprep.subr.mxu0 0.0
    %2141 = vmatpush1.msra.mxu0 0.0
    %2142 = vmatprep.subr.mxu0 0.0
    %2143 = vmatpush1.msra.mxu0 0.0
    %2144 = vmatprep.subr.mxu0 0.0
    %2145 = vmatpush1.msra.mxu0 0.0
    %2146 = vmatprep.subr.mxu0 0.0
    %2147 = vmatpush1.msra.mxu0 0.0
    %2148 = vmatprep.subr.mxu0 0.0
    %2149 = vmatpush1.msra.mxu0 0.0
    %2150 = vmatprep.subr.mxu0 0.0
    %2151 = vmatpush1.msra.mxu0 0.0
    %2152 = vmatprep.subr.mxu0 0.0
    %2153 = vmatpush1.msra.mxu0 0.0
    %2154 = vmatprep.subr.mxu0 0.0
    %2155 = vmatpush1.msra.mxu0 0.0
    %2156 = vmatprep.subr.mxu0 0.0
    %2157 = vmatpush1.msra.mxu0 0.0
    %2158 = vmatprep.subr.mxu0 0.0
    %2159 = vmatpush1.msra.mxu0 0.0
    %2160 = vmatprep.subr.mxu0 0.0
    %2161 = vmatpush1.msra.mxu0 0.0
    %2162 = vmatprep.subr.mxu0 0.0
    %2163 = vmatpush1.msra.mxu0 0.0
    %2164 = vmatprep.subr.mxu0 0.0
    %2165 = vmatpush1.msra.mxu0 0.0
    %2166 = vmatprep.subr.mxu0 0.0
    %2167 = vmatpush1.msra.mxu0 0.0
    %2168 = vmatprep.subr.mxu0 0.0
    %2169 = vmatpush1.msra.mxu0 0.0
    %2170 = vmatprep.subr.mxu0 0.0
    %2171 = vmatpush1.msra.mxu0 0.0
    %2172 = vmatprep.subr.mxu0 0.0
    %2173 = vmatpush1.msra.mxu0 0.0
    %2174 = vmatprep.subr.mxu0 0.0
    %2175 = vmatpush1.msra.mxu0 0.0
    %2176 = vmatprep.subr.mxu0 0.0
    %2177 = vmatpush1.msra.mxu0 0.0
    %2178 = vmatprep.subr.mxu0 0.0
    %2179 = vmatpush1.msra.mxu0 0.0
    %2180 = vmatprep.subr.mxu0 0.0
    %2181 = vmatpush1.msra.mxu0 0.0
    %2182 = vmatprep.subr.mxu0 0.0
    %2183 = vmatpush1.msra.mxu0 0.0
    %2184 = vmatprep.subr.mxu0 0.0
    %2185 = vmatpush1.msra.mxu0 0.0
    %2186 = vmatprep.subr.mxu0 0.0
    %2187 = vmatpush1.msra.mxu0 0.0
    %2188 = vmatprep.subr.mxu0 0.0
    %2189 = vmatpush1.msra.mxu0 0.0
    %2190 = vmatprep.subr.mxu0 0.0
    %2191 = vmatpush1.msra.mxu0 0.0
    %2192 = vmatprep.subr.mxu0 0.0
    %2193 = vmatpush1.msra.mxu0 0.0
    %2194 = vmatprep.subr.mxu0 0.0
    %2195 = vmatpush1.msra.mxu0 0.0
    %2196 = vmatprep.mubr.f32.mxu0 0.0
    %v2197 = vand.u32 %v2129, 4294901760
    %v2198 = vsub.f32 %v2129, %v2197
    %v2199 = vand.u32 %v2198, 4294901760
    %v2200 = vsub.f32 %v2198, %v2199
    %v2201 = vand.u32 %v2200, 4294901760
    %2202 = vmatmul.mubr.f32.gmra.mrb[0].mxu0 %v2201
    %v2203 = vpop.f32.mrb[0].mxu0
    %v2204 = vadd.f32 0.0, %v2203
    %v2205 = vpop.f32.mrb[0].mxu0
    %2206 = vdwg.mxu0
    %2207 = vmatprep.subr.mxu0 0.0
    %v2208 = vand.u32 %v106, 4294901760
    %v2209 = vsub.f32 %v106, %v2208
    %v2210 = vand.u32 %v2209, 4294901760
    %v2211 = vsub.f32 %v2209, %v2210
    %v2212 = vand.u32 %v2211, 4294901760
    %2213 = vmatpush1.msra.mxu0 %v2212
    %2214 = vmatprep.subr.mxu0 0.0
    %2215 = vmatpush1.msra.mxu0 0.0
    %2216 = vmatprep.subr.mxu0 0.0
    %2217 = vmatpush1.msra.mxu0 0.0
    %2218 = vmatprep.subr.mxu0 0.0
    %2219 = vmatpush1.msra.mxu0 0.0
    %2220 = vmatprep.subr.mxu0 0.0
    %2221 = vmatpush1.msra.mxu0 0.0
    %2222 = vmatprep.subr.mxu0 0.0
    %2223 = vmatpush1.msra.mxu0 0.0
    %2224 = vmatprep.subr.mxu0 0.0
    %2225 = vmatpush1.msra.mxu0 0.0
    %2226 = vmatprep.subr.mxu0 0.0
    %2227 = vmatpush1.msra.mxu0 0.0
    %2228 = vmatprep.subr.mxu0 0.0
    %2229 = vmatpush1.msra.mxu0 0.0
    %2230 = vmatprep.subr.mxu0 0.0
    %2231 = vmatpush1.msra.mxu0 0.0
    %2232 = vmatprep.subr.mxu0 0.0
    %2233 = vmatpush1.msra.mxu0 0.0
    %2234 = vmatprep.subr.mxu0 0.0
    %2235 = vmatpush1.msra.mxu0 0.0
    %2236 = vmatprep.subr.mxu0 0.0
    %2237 = vmatpush1.msra.mxu0 0.0
    %2238 = vmatprep.subr.mxu0 0.0
    %2239 = vmatpush1.msra.mxu0 0.0
    %2240 = vmatprep.subr.mxu0 0.0
    %2241 = vmatpush1.msra.mxu0 0.0
    %2242 = vmatprep.subr.mxu0 0.0
    %2243 = vmatpush1.msra.mxu0 0.0
    %2244 = vmatprep.subr.mxu0 0.0
    %2245 = vmatpush1.msra.mxu0 0.0
    %2246 = vmatprep.subr.mxu0 0.0
    %2247 = vmatpush1.msra.mxu0 0.0
    %2248 = vmatprep.subr.mxu0 0.0
    %2249 = vmatpush1.msra.mxu0 0.0
    %2250 = vmatprep.subr.mxu0 0.0
    %2251 = vmatpush1.msra.mxu0 0.0
    %2252 = vmatprep.subr.mxu0 0.0
    %2253 = vmatpush1.msra.mxu0 0.0
    %2254 = vmatprep.subr.mxu0 0.0
    %2255 = vmatpush1.msra.mxu0 0.0
    %2256 = vmatprep.subr.mxu0 0.0
    %2257 = vmatpush1.msra.mxu0 0.0
    %2258 = vmatprep.subr.mxu0 0.0
    %2259 = vmatpush1.msra.mxu0 0.0
    %2260 = vmatprep.subr.mxu0 0.0
    %2261 = vmatpush1.msra.mxu0 0.0
    %2262 = vmatprep.subr.mxu0 0.0
    %2263 = vmatpush1.msra.mxu0 0.0
    %2264 = vmatprep.subr.mxu0 0.0
    %2265 = vmatpush1.msra.mxu0 0.0
    %2266 = vmatprep.subr.mxu0 0.0
    %2267 = vmatpush1.msra.mxu0 0.0
    %2268 = vmatprep.subr.mxu0 0.0
    %2269 = vmatpush1.msra.mxu0 0.0
    %2270 = vmatprep.subr.mxu0 0.0
    %2271 = vmatpush1.msra.mxu0 0.0
    %2272 = vmatprep.subr.mxu0 0.0
    %2273 = vmatpush1.msra.mxu0 0.0
    %2274 = vmatprep.subr.mxu0 0.0
    %2275 = vmatpush1.msra.mxu0 0.0
    %2276 = vmatprep.mubr.f32.mxu0 0.0
    %v2277 = vand.u32 %v2129, 4294901760
    %2278 = vmatmul.mubr.f32.gmra.mrb[0].mxu0 %v2277
    %v2279 = vpop.f32.mrb[0].mxu0
    %v2280 = vadd.f32 %v2204, %v2279
    %v2281 = vpop.f32.mrb[0].mxu0
    %2282 = vdwg.mxu0
    %2283 = vmatprep.subr.mxu0 0.0
    %v2284 = vand.u32 %v106, 4294901760
    %v2285 = vsub.f32 %v106, %v2284
    %2286 = vmatpush1.msra.mxu0 %v2285
    %2287 = vmatprep.subr.mxu0 0.0
    %2288 = vmatpush1.msra.mxu0 0.0
    %2289 = vmatprep.subr.mxu0 0.0
    %2290 = vmatpush1.msra.mxu0 0.0
    %2291 = vmatprep.subr.mxu0 0.0
    %2292 = vmatpush1.msra.mxu0 0.0
    %2293 = vmatprep.subr.mxu0 0.0
    %2294 = vmatpush1.msra.mxu0 0.0
    %2295 = vmatprep.subr.mxu0 0.0
    %2296 = vmatpush1.msra.mxu0 0.0
    %2297 = vmatprep.subr.mxu0 0.0
    %2298 = vmatpush1.msra.mxu0 0.0
    %2299 = vmatprep.subr.mxu0 0.0
    %2300 = vmatpush1.msra.mxu0 0.0
    %2301 = vmatprep.subr.mxu0 0.0
    %2302 = vmatpush1.msra.mxu0 0.0
    %2303 = vmatprep.subr.mxu0 0.0
    %2304 = vmatpush1.msra.mxu0 0.0
    %2305 = vmatprep.subr.mxu0 0.0
    %2306 = vmatpush1.msra.mxu0 0.0
    %2307 = vmatprep.subr.mxu0 0.0
    %2308 = vmatpush1.msra.mxu0 0.0
    %2309 = vmatprep.subr.mxu0 0.0
    %2310 = vmatpush1.msra.mxu0 0.0
    %2311 = vmatprep.subr.mxu0 0.0
    %2312 = vmatpush1.msra.mxu0 0.0
    %2313 = vmatprep.subr.mxu0 0.0
    %2314 = vmatpush1.msra.mxu0 0.0
    %2315 = vmatprep.subr.mxu0 0.0
    %2316 = vmatpush1.msra.mxu0 0.0
    %2317 = vmatprep.subr.mxu0 0.0
    %2318 = vmatpush1.msra.mxu0 0.0
    %2319 = vmatprep.subr.mxu0 0.0
    %2320 = vmatpush1.msra.mxu0 0.0
    %2321 = vmatprep.subr.mxu0 0.0
    %2322 = vmatpush1.msra.mxu0 0.0
    %2323 = vmatprep.subr.mxu0 0.0
    %2324 = vmatpush1.msra.mxu0 0.0
    %2325 = vmatprep.subr.mxu0 0.0
    %2326 = vmatpush1.msra.mxu0 0.0
    %2327 = vmatprep.subr.mxu0 0.0
    %2328 = vmatpush1.msra.mxu0 0.0
    %2329 = vmatprep.subr.mxu0 0.0
    %2330 = vmatpush1.msra.mxu0 0.0
    %2331 = vmatprep.subr.mxu0 0.0
    %2332 = vmatpush1.msra.mxu0 0.0
    %2333 = vmatprep.subr.mxu0 0.0
    %2334 = vmatpush1.msra.mxu0 0.0
    %2335 = vmatprep.subr.mxu0 0.0
    %2336 = vmatpush1.msra.mxu0 0.0
    %2337 = vmatprep.subr.mxu0 0.0
    %2338 = vmatpush1.msra.mxu0 0.0
    %2339 = vmatprep.subr.mxu0 0.0
    %2340 = vmatpush1.msra.mxu0 0.0
    %2341 = vmatprep.subr.mxu0 0.0
    %2342 = vmatpush1.msra.mxu0 0.0
    %2343 = vmatprep.subr.mxu0 0.0
    %2344 = vmatpush1.msra.mxu0 0.0
    %2345 = vmatprep.subr.mxu0 0.0
    %2346 = vmatpush1.msra.mxu0 0.0
    %2347 = vmatprep.subr.mxu0 0.0
    %2348 = vmatpush1.msra.mxu0 0.0
    %2349 = vmatprep.mubr.f32.mxu0 0.0
    %v2350 = vand.u32 %v2129, 4294901760
    %v2351 = vsub.f32 %v2129, %v2350
    %2352 = vmatmul.mubr.f32.gmra.mrb[0].mxu0 %v2351
    %v2353 = vpop.f32.mrb[0].mxu0
    %v2354 = vadd.f32 %v2280, %v2353
    %v2355 = vpop.f32.mrb[0].mxu0
    %2356 = vdwg.mxu0
    %2357 = vmatprep.subr.mxu0 0.0
    %v2358 = vand.u32 %v106, 4294901760
    %2359 = vmatpush1.msra.mxu0 %v2358
    %2360 = vmatprep.subr.mxu0 0.0
    %2361 = vmatpush1.msra.mxu0 0.0
    %2362 = vmatprep.subr.mxu0 0.0
    %2363 = vmatpush1.msra.mxu0 0.0
    %2364 = vmatprep.subr.mxu0 0.0
    %2365 = vmatpush1.msra.mxu0 0.0
    %2366 = vmatprep.subr.mxu0 0.0
    %2367 = vmatpush1.msra.mxu0 0.0
    %2368 = vmatprep.subr.mxu0 0.0
    %2369 = vmatpush1.msra.mxu0 0.0
    %2370 = vmatprep.subr.mxu0 0.0
    %2371 = vmatpush1.msra.mxu0 0.0
    %2372 = vmatprep.subr.mxu0 0.0
    %2373 = vmatpush1.msra.mxu0 0.0
    %2374 = vmatprep.subr.mxu0 0.0
    %2375 = vmatpush1.msra.mxu0 0.0
    %2376 = vmatprep.subr.mxu0 0.0
    %2377 = vmatpush1.msra.mxu0 0.0
    %2378 = vmatprep.subr.mxu0 0.0
    %2379 = vmatpush1.msra.mxu0 0.0
    %2380 = vmatprep.subr.mxu0 0.0
    %2381 = vmatpush1.msra.mxu0 0.0
    %2382 = vmatprep.subr.mxu0 0.0
    %2383 = vmatpush1.msra.mxu0 0.0
    %2384 = vmatprep.subr.mxu0 0.0
    %2385 = vmatpush1.msra.mxu0 0.0
    %2386 = vmatprep.subr.mxu0 0.0
    %2387 = vmatpush1.msra.mxu0 0.0
    %2388 = vmatprep.subr.mxu0 0.0
    %2389 = vmatpush1.msra.mxu0 0.0
    %2390 = vmatprep.subr.mxu0 0.0
    %2391 = vmatpush1.msra.mxu0 0.0
    %2392 = vmatprep.subr.mxu0 0.0
    %2393 = vmatpush1.msra.mxu0 0.0
    %2394 = vmatprep.subr.mxu0 0.0
    %2395 = vmatpush1.msra.mxu0 0.0
    %2396 = vmatprep.subr.mxu0 0.0
    %2397 = vmatpush1.msra.mxu0 0.0
    %2398 = vmatprep.subr.mxu0 0.0
    %2399 = vmatpush1.msra.mxu0 0.0
    %2400 = vmatprep.subr.mxu0 0.0
    %2401 = vmatpush1.msra.mxu0 0.0
    %2402 = vmatprep.subr.mxu0 0.0
    %2403 = vmatpush1.msra.mxu0 0.0
    %2404 = vmatprep.subr.mxu0 0.0
    %2405 = vmatpush1.msra.mxu0 0.0
    %2406 = vmatprep.subr.mxu0 0.0
    %2407 = vmatpush1.msra.mxu0 0.0
    %2408 = vmatprep.subr.mxu0 0.0
    %2409 = vmatpush1.msra.mxu0 0.0
    %2410 = vmatprep.subr.mxu0 0.0
    %2411 = vmatpush1.msra.mxu0 0.0
    %2412 = vmatprep.subr.mxu0 0.0
    %2413 = vmatpush1.msra.mxu0 0.0
    %2414 = vmatprep.subr.mxu0 0.0
    %2415 = vmatpush1.msra.mxu0 0.0
    %2416 = vmatprep.subr.mxu0 0.0
    %2417 = vmatpush1.msra.mxu0 0.0
    %2418 = vmatprep.subr.mxu0 0.0
    %2419 = vmatpush1.msra.mxu0 0.0
    %2420 = vmatprep.subr.mxu0 0.0
    %2421 = vmatpush1.msra.mxu0 0.0
    %2422 = vmatprep.mubr.f32.mxu0 0.0
    %v2423 = vand.u32 %v2129, 4294901760
    %v2424 = vsub.f32 %v2129, %v2423
    %v2425 = vand.u32 %v2424, 4294901760
    %2426 = vmatmul.mubr.f32.gmra.mrb[0].mxu0 %v2425
    %v2427 = vpop.f32.mrb[0].mxu0
    %v2428 = vadd.f32 %v2354, %v2427
    %v2429 = vpop.f32.mrb[0].mxu0
    %2430 = vdwg.mxu0
    %2431 = vmatprep.subr.mxu0 0.0
    %v2432 = vand.u32 %v106, 4294901760
    %v2433 = vsub.f32 %v106, %v2432
    %v2434 = vand.u32 %v2433, 4294901760
    %2435 = vmatpush1.msra.mxu0 %v2434
    %2436 = vmatprep.subr.mxu0 0.0
    %2437 = vmatpush1.msra.mxu0 0.0
    %2438 = vmatprep.subr.mxu0 0.0
    %2439 = vmatpush1.msra.mxu0 0.0
    %2440 = vmatprep.subr.mxu0 0.0
    %2441 = vmatpush1.msra.mxu0 0.0
    %2442 = vmatprep.subr.mxu0 0.0
    %2443 = vmatpush1.msra.mxu0 0.0
    %2444 = vmatprep.subr.mxu0 0.0
    %2445 = vmatpush1.msra.mxu0 0.0
    %2446 = vmatprep.subr.mxu0 0.0
    %2447 = vmatpush1.msra.mxu0 0.0
    %2448 = vmatprep.subr.mxu0 0.0
    %2449 = vmatpush1.msra.mxu0 0.0
    %2450 = vmatprep.subr.mxu0 0.0
    %2451 = vmatpush1.msra.mxu0 0.0
    %2452 = vmatprep.subr.mxu0 0.0
    %2453 = vmatpush1.msra.mxu0 0.0
    %2454 = vmatprep.subr.mxu0 0.0
    %2455 = vmatpush1.msra.mxu0 0.0
    %2456 = vmatprep.subr.mxu0 0.0
    %2457 = vmatpush1.msra.mxu0 0.0
    %2458 = vmatprep.subr.mxu0 0.0
    %2459 = vmatpush1.msra.mxu0 0.0
    %2460 = vmatprep.subr.mxu0 0.0
    %2461 = vmatpush1.msra.mxu0 0.0
    %2462 = vmatprep.subr.mxu0 0.0
    %2463 = vmatpush1.msra.mxu0 0.0
    %2464 = vmatprep.subr.mxu0 0.0
    %2465 = vmatpush1.msra.mxu0 0.0
    %2466 = vmatprep.subr.mxu0 0.0
    %2467 = vmatpush1.msra.mxu0 0.0
    %2468 = vmatprep.subr.mxu0 0.0
    %2469 = vmatpush1.msra.mxu0 0.0
    %2470 = vmatprep.subr.mxu0 0.0
    %2471 = vmatpush1.msra.mxu0 0.0
    %2472 = vmatprep.subr.mxu0 0.0
    %2473 = vmatpush1.msra.mxu0 0.0
    %2474 = vmatprep.subr.mxu0 0.0
    %2475 = vmatpush1.msra.mxu0 0.0
    %2476 = vmatprep.subr.mxu0 0.0
    %2477 = vmatpush1.msra.mxu0 0.0
    %2478 = vmatprep.subr.mxu0 0.0
    %2479 = vmatpush1.msra.mxu0 0.0
    %2480 = vmatprep.subr.mxu0 0.0
    %2481 = vmatpush1.msra.mxu0 0.0
    %2482 = vmatprep.subr.mxu0 0.0
    %2483 = vmatpush1.msra.mxu0 0.0
    %2484 = vmatprep.subr.mxu0 0.0
    %2485 = vmatpush1.msra.mxu0 0.0
    %2486 = vmatprep.subr.mxu0 0.0
    %2487 = vmatpush1.msra.mxu0 0.0
    %2488 = vmatprep.subr.mxu0 0.0
    %2489 = vmatpush1.msra.mxu0 0.0
    %2490 = vmatprep.subr.mxu0 0.0
    %2491 = vmatpush1.msra.mxu0 0.0
    %2492 = vmatprep.subr.mxu0 0.0
    %2493 = vmatpush1.msra.mxu0 0.0
    %2494 = vmatprep.subr.mxu0 0.0
    %2495 = vmatpush1.msra.mxu0 0.0
    %2496 = vmatprep.subr.mxu0 0.0
    %2497 = vmatpush1.msra.mxu0 0.0
    %2498 = vmatprep.mubr.f32.mxu0 0.0
    %v2499 = vand.u32 %v2129, 4294901760
    %2500 = vmatmul.mubr.f32.gmra.mrb[0].mxu0 %v2499
    %v2501 = vpop.f32.mrb[0].mxu0
    %v2502 = vadd.f32 %v2428, %v2501
    %v2503 = vpop.f32.mrb[0].mxu0
    %2504 = vdwg.mxu0
    %2505 = vmatprep.subr.mxu0 0.0
    %v2506 = vand.u32 %v106, 4294901760
    %2507 = vmatpush1.msra.mxu0 %v2506
    %2508 = vmatprep.subr.mxu0 0.0
    %2509 = vmatpush1.msra.mxu0 0.0
    %2510 = vmatprep.subr.mxu0 0.0
    %2511 = vmatpush1.msra.mxu0 0.0
    %2512 = vmatprep.subr.mxu0 0.0
    %2513 = vmatpush1.msra.mxu0 0.0
    %2514 = vmatprep.subr.mxu0 0.0
    %2515 = vmatpush1.msra.mxu0 0.0
    %2516 = vmatprep.subr.mxu0 0.0
    %2517 = vmatpush1.msra.mxu0 0.0
    %2518 = vmatprep.subr.mxu0 0.0
    %2519 = vmatpush1.msra.mxu0 0.0
    %2520 = vmatprep.subr.mxu0 0.0
    %2521 = vmatpush1.msra.mxu0 0.0
    %2522 = vmatprep.subr.mxu0 0.0
    %2523 = vmatpush1.msra.mxu0 0.0
    %2524 = vmatprep.subr.mxu0 0.0
    %2525 = vmatpush1.msra.mxu0 0.0
    %2526 = vmatprep.subr.mxu0 0.0
    %2527 = vmatpush1.msra.mxu0 0.0
    %2528 = vmatprep.subr.mxu0 0.0
    %2529 = vmatpush1.msra.mxu0 0.0
    %2530 = vmatprep.subr.mxu0 0.0
    %2531 = vmatpush1.msra.mxu0 0.0
    %2532 = vmatprep.subr.mxu0 0.0
    %2533 = vmatpush1.msra.mxu0 0.0
    %2534 = vmatprep.subr.mxu0 0.0
    %2535 = vmatpush1.msra.mxu0 0.0
    %2536 = vmatprep.subr.mxu0 0.0
    %2537 = vmatpush1.msra.mxu0 0.0
    %2538 = vmatprep.subr.mxu0 0.0
    %2539 = vmatpush1.msra.mxu0 0.0
    %2540 = vmatprep.subr.mxu0 0.0
    %2541 = vmatpush1.msra.mxu0 0.0
    %2542 = vmatprep.subr.mxu0 0.0
    %2543 = vmatpush1.msra.mxu0 0.0
    %2544 = vmatprep.subr.mxu0 0.0
    %2545 = vmatpush1.msra.mxu0 0.0
    %2546 = vmatprep.subr.mxu0 0.0
    %2547 = vmatpush1.msra.mxu0 0.0
    %2548 = vmatprep.subr.mxu0 0.0
    %2549 = vmatpush1.msra.mxu0 0.0
    %2550 = vmatprep.subr.mxu0 0.0
    %2551 = vmatpush1.msra.mxu0 0.0
    %2552 = vmatprep.subr.mxu0 0.0
    %2553 = vmatpush1.msra.mxu0 0.0
    %2554 = vmatprep.subr.mxu0 0.0
    %2555 = vmatpush1.msra.mxu0 0.0
    %2556 = vmatprep.subr.mxu0 0.0
    %2557 = vmatpush1.msra.mxu0 0.0
    %2558 = vmatprep.subr.mxu0 0.0
    %2559 = vmatpush1.msra.mxu0 0.0
    %2560 = vmatprep.subr.mxu0 0.0
    %2561 = vmatpush1.msra.mxu0 0.0
    %2562 = vmatprep.subr.mxu0 0.0
    %2563 = vmatpush1.msra.mxu0 0.0
    %2564 = vmatprep.subr.mxu0 0.0
    %2565 = vmatpush1.msra.mxu0 0.0
    %2566 = vmatprep.subr.mxu0 0.0
    %2567 = vmatpush1.msra.mxu0 0.0
    %2568 = vmatprep.subr.mxu0 0.0
    %2569 = vmatpush1.msra.mxu0 0.0
    %2570 = vmatprep.mubr.f32.mxu0 0.0
    %v2571 = vand.u32 %v2129, 4294901760
    %2572 = vmatmul.mubr.f32.gmra.mrb[0].mxu0 %v2571
    %v2573 = vpop.f32.mrb[0].mxu0
    %v2574 = vadd.f32 %v2502, %v2573
    %v2575 = vpop.f32.mrb[0].mxu0
    %2576 = vdwg.mxu0
    %v2577 = vadd.f32 %v1486, %v2574
    %v2578 = vsel %vm89, %v2577, 0.0
    %2579 = vrot.lane.b32.xlu0 %v2578, 1
    %v2580 = vpop.permute.xlu0 %2579
    %2581 = vrot.lane.b32.xlu0 %v2578, 127
    %v2582 = vpop.permute.xlu0 %2581
    %v2583 = vmul.f32 %v113, %v2580
    %v2584 = vmul.f32 %v115, %v2578
    %v2585 = vadd.f32 %v2583, %v2584
    %v2586 = vmul.f32 %v118, %v2582
    %v2587 = vadd.f32 %v2585, %v2586
    %v2588 = vadd.f32 %v2587, %v121
    %v2589 = vmax.f32 %v2588, 0.0
    %v2590 = vmul.f32 %v124, %v2589
    %v2591 = vmul.f32 %v126, %v2589
    %v2592 = vmul.f32 %v128, %v2589
    %v2593 = vmul.f32 %v130, %v2580
    %v2594 = vmul.f32 %v132, %v2578
    %v2595 = vadd.f32 %v2593, %v2594
    %v2596 = vmul.f32 %v135, %v2582
    %v2597 = vadd.f32 %v2595, %v2596
    %v2598 = vadd.f32 %v2597, %v138
    %v2599 = vmax.f32 %v2598, 0.0
    %v2600 = vmul.f32 %v141, %v2599
    %v2601 = vadd.f32 %v2590, %v2600
    %v2602 = vmul.f32 %v144, %v2599
    %v2603 = vadd.f32 %v2591, %v2602
    %v2604 = vmul.f32 %v147, %v2599
    %v2605 = vadd.f32 %v2592, %v2604
    %v2606 = vmul.f32 %v150, %v2580
    %v2607 = vmul.f32 %v152, %v2578
    %v2608 = vadd.f32 %v2606, %v2607
    %v2609 = vmul.f32 %v155, %v2582
    %v2610 = vadd.f32 %v2608, %v2609
    %v2611 = vadd.f32 %v2610, %v158
    %v2612 = vmax.f32 %v2611, 0.0
    %v2613 = vmul.f32 %v161, %v2612
    %v2614 = vadd.f32 %v2601, %v2613
    %v2615 = vmul.f32 %v164, %v2612
    %v2616 = vadd.f32 %v2603, %v2615
    %v2617 = vmul.f32 %v167, %v2612
    %v2618 = vadd.f32 %v2605, %v2617
    %v2619 = vmul.f32 %v170, %v2580
    %v2620 = vmul.f32 %v172, %v2578
    %v2621 = vadd.f32 %v2619, %v2620
    %v2622 = vmul.f32 %v175, %v2582
    %v2623 = vadd.f32 %v2621, %v2622
    %v2624 = vadd.f32 %v2623, %v178
    %v2625 = vmax.f32 %v2624, 0.0
    %v2626 = vmul.f32 %v181, %v2625
    %v2627 = vadd.f32 %v2614, %v2626
    %v2628 = vmul.f32 %v184, %v2625
    %v2629 = vadd.f32 %v2616, %v2628
    %v2630 = vmul.f32 %v187, %v2625
    %v2631 = vadd.f32 %v2618, %v2630
    %v2632 = vmul.f32 %v190, %v2580
    %v2633 = vmul.f32 %v192, %v2578
    %v2634 = vadd.f32 %v2632, %v2633
    %v2635 = vmul.f32 %v195, %v2582
    %v2636 = vadd.f32 %v2634, %v2635
    %v2637 = vadd.f32 %v2636, %v198
    %v2638 = vmax.f32 %v2637, 0.0
    %v2639 = vmul.f32 %v201, %v2638
    %v2640 = vadd.f32 %v2627, %v2639
    %v2641 = vmul.f32 %v204, %v2638
    %v2642 = vadd.f32 %v2629, %v2641
    %v2643 = vmul.f32 %v207, %v2638
    %v2644 = vadd.f32 %v2631, %v2643
    %v2645 = vmul.f32 %v210, %v2580
    %v2646 = vmul.f32 %v212, %v2578
    %v2647 = vadd.f32 %v2645, %v2646
    %v2648 = vmul.f32 %v215, %v2582
    %v2649 = vadd.f32 %v2647, %v2648
    %v2650 = vadd.f32 %v2649, %v218
    %v2651 = vmax.f32 %v2650, 0.0
    %v2652 = vmul.f32 %v221, %v2651
    %v2653 = vadd.f32 %v2640, %v2652
    %v2654 = vmul.f32 %v224, %v2651
    %v2655 = vadd.f32 %v2642, %v2654
    %v2656 = vmul.f32 %v227, %v2651
    %v2657 = vadd.f32 %v2644, %v2656
    %v2658 = vmul.f32 %v230, %v2580
    %v2659 = vmul.f32 %v232, %v2578
    %v2660 = vadd.f32 %v2658, %v2659
    %v2661 = vmul.f32 %v235, %v2582
    %v2662 = vadd.f32 %v2660, %v2661
    %v2663 = vadd.f32 %v2662, %v238
    %v2664 = vmax.f32 %v2663, 0.0
    %v2665 = vmul.f32 %v241, %v2664
    %v2666 = vadd.f32 %v2653, %v2665
    %v2667 = vmul.f32 %v244, %v2664
    %v2668 = vadd.f32 %v2655, %v2667
    %v2669 = vmul.f32 %v247, %v2664
    %v2670 = vadd.f32 %v2657, %v2669
    %v2671 = vmul.f32 %v250, %v2580
    %v2672 = vmul.f32 %v252, %v2578
    %v2673 = vadd.f32 %v2671, %v2672
    %v2674 = vmul.f32 %v255, %v2582
    %v2675 = vadd.f32 %v2673, %v2674
    %v2676 = vadd.f32 %v2675, %v258
    %v2677 = vmax.f32 %v2676, 0.0
    %v2678 = vmul.f32 %v261, %v2677
    %v2679 = vadd.f32 %v2666, %v2678
    %v2680 = vmul.f32 %v264, %v2677
    %v2681 = vadd.f32 %v2668, %v2680
    %v2682 = vmul.f32 %v267, %v2677
    %v2683 = vadd.f32 %v2670, %v2682
    %v2684 = vsel %vm89, %v2679, 0.0
    %v2685 = vsel %vm89, %v2683, 0.0
    %2686 = vrot.lane.b32.xlu0 %v2684, 1
    %v2687 = vpop.permute.xlu0 %2686
    %v2688 = vadd.f32 %v2687, %v2681
    %2689 = vrot.lane.b32.xlu0 %v2685, 127
    %v2690 = vpop.permute.xlu0 %2689
    %v2691 = vadd.f32 %v2688, %v2690
    %v2692 = vadd.f32 %v2691, %v278
    %2693 = vmatprep.subr.mxu0 0.0
    %v2694 = vand.u32 %v90, 4294901760
    %2695 = vmatpush1.msra.mxu0 %v2694
    %2696 = vmatprep.subr.mxu0 0.0
    %v2697 = vand.u32 %v91, 4294901760
    %2698 = vmatpush1.msra.mxu0 %v2697
    %2699 = vmatprep.subr.mxu0 0.0
    %v2700 = vand.u32 %v92, 4294901760
    %2701 = vmatpush1.msra.mxu0 %v2700
    %2702 = vmatprep.subr.mxu0 0.0
    %v2703 = vand.u32 %v93, 4294901760
    %2704 = vmatpush1.msra.mxu0 %v2703
    %2705 = vmatprep.subr.mxu0 0.0
    %v2706 = vand.u32 %v94, 4294901760
    %2707 = vmatpush1.msra.mxu0 %v2706
    %2708 = vmatprep.subr.mxu0 0.0
    %v2709 = vand.u32 %v95, 4294901760
    %2710 = vmatpush1.msra.mxu0 %v2709
    %2711 = vmatprep.subr.mxu0 0.0
    %v2712 = vand.u32 %v96, 4294901760
    %2713 = vmatpush1.msra.mxu0 %v2712
    %2714 = vmatprep.subr.mxu0 0.0
    %v2715 = vand.u32 %v97, 4294901760
    %2716 = vmatpush1.msra.mxu0 %v2715
    %2717 = vmatprep.subr.mxu0 0.0
    %v2718 = vand.u32 %v98, 4294901760
    %2719 = vmatpush1.msra.mxu0 %v2718
    %2720 = vmatprep.subr.mxu0 0.0
    %v2721 = vand.u32 %v99, 4294901760
    %2722 = vmatpush1.msra.mxu0 %v2721
    %2723 = vmatprep.subr.mxu0 0.0
    %v2724 = vand.u32 %v100, 4294901760
    %2725 = vmatpush1.msra.mxu0 %v2724
    %2726 = vmatprep.subr.mxu0 0.0
    %v2727 = vand.u32 %v101, 4294901760
    %2728 = vmatpush1.msra.mxu0 %v2727
    %2729 = vmatprep.subr.mxu0 0.0
    %v2730 = vand.u32 %v102, 4294901760
    %2731 = vmatpush1.msra.mxu0 %v2730
    %2732 = vmatprep.subr.mxu0 0.0
    %v2733 = vand.u32 %v103, 4294901760
    %2734 = vmatpush1.msra.mxu0 %v2733
    %2735 = vmatprep.subr.mxu0 0.0
    %v2736 = vand.u32 %v104, 4294901760
    %2737 = vmatpush1.msra.mxu0 %v2736
    %2738 = vmatprep.subr.mxu0 0.0
    %v2739 = vand.u32 %v105, 4294901760
    %2740 = vmatpush1.msra.mxu0 %v2739
    %2741 = vmatprep.subr.mxu0 0.0
    %2742 = vmatpush1.msra.mxu0 0.0
    %2743 = vmatprep.subr.mxu0 0.0
    %2744 = vmatpush1.msra.mxu0 0.0
    %2745 = vmatprep.subr.mxu0 0.0
    %2746 = vmatpush1.msra.mxu0 0.0
    %2747 = vmatprep.subr.mxu0 0.0
    %2748 = vmatpush1.msra.mxu0 0.0
    %2749 = vmatprep.subr.mxu0 0.0
    %2750 = vmatpush1.msra.mxu0 0.0
    %2751 = vmatprep.subr.mxu0 0.0
    %2752 = vmatpush1.msra.mxu0 0.0
    %2753 = vmatprep.subr.mxu0 0.0
    %2754 = vmatpush1.msra.mxu0 0.0
    %2755 = vmatprep.subr.mxu0 0.0
    %2756 = vmatpush1.msra.mxu0 0.0
    %2757 = vmatprep.subr.mxu0 0.0
    %2758 = vmatpush1.msra.mxu0 0.0
    %2759 = vmatprep.subr.mxu0 0.0
    %2760 = vmatpush1.msra.mxu0 0.0
    %2761 = vmatprep.subr.mxu0 0.0
    %2762 = vmatpush1.msra.mxu0 0.0
    %2763 = vmatprep.subr.mxu0 0.0
    %2764 = vmatpush1.msra.mxu0 0.0
    %2765 = vmatprep.subr.mxu0 0.0
    %2766 = vmatpush1.msra.mxu0 0.0
    %2767 = vmatprep.subr.mxu0 0.0
    %2768 = vmatpush1.msra.mxu0 0.0
    %2769 = vmatprep.subr.mxu0 0.0
    %2770 = vmatpush1.msra.mxu0 0.0
    %2771 = vmatprep.subr.mxu0 0.0
    %2772 = vmatpush1.msra.mxu0 0.0
    %2773 = vmatprep.mubr.f32.mxu0 0.0
    %v2774 = vand.u32 %v2578, 4294901760
    %v2775 = vsub.f32 %v2578, %v2774
    %v2776 = vand.u32 %v2775, 4294901760
    %v2777 = vsub.f32 %v2775, %v2776
    %v2778 = vand.u32 %v2777, 4294901760
    %2779 = vmatmul.mubr.f32.gmra.mrb[0].mxu0 %v2778
    %v2780 = vpop.f32.mrb[0].mxu0
    %v2781 = vadd.f32 0.0, %v2780
    %v2782 = vpop.f32.mrb[0].mxu0
    %2783 = vdwg.mxu0
    %2784 = vmatprep.subr.mxu0 0.0
    %v2785 = vand.u32 %v90, 4294901760
    %v2786 = vsub.f32 %v90, %v2785
    %v2787 = vand.u32 %v2786, 4294901760
    %v2788 = vsub.f32 %v2786, %v2787
    %v2789 = vand.u32 %v2788, 4294901760
    %2790 = vmatpush1.msra.mxu0 %v2789
    %2791 = vmatprep.subr.mxu0 0.0
    %v2792 = vand.u32 %v91, 4294901760
    %v2793 = vsub.f32 %v91, %v2792
    %v2794 = vand.u32 %v2793, 4294901760
    %v2795 = vsub.f32 %v2793, %v2794
    %v2796 = vand.u32 %v2795, 4294901760
    %2797 = vmatpush1.msra.mxu0 %v2796
    %2798 = vmatprep.subr.mxu0 0.0
    %v2799 = vand.u32 %v92, 4294901760
    %v2800 = vsub.f32 %v92, %v2799
    %v2801 = vand.u32 %v2800, 4294901760
    %v2802 = vsub.f32 %v2800, %v2801
    %v2803 = vand.u32 %v2802, 4294901760
    %2804 = vmatpush1.msra.mxu0 %v2803
    %2805 = vmatprep.subr.mxu0 0.0
    %v2806 = vand.u32 %v93, 4294901760
    %v2807 = vsub.f32 %v93, %v2806
    %v2808 = vand.u32 %v2807, 4294901760
    %v2809 = vsub.f32 %v2807, %v2808
    %v2810 = vand.u32 %v2809, 4294901760
    %2811 = vmatpush1.msra.mxu0 %v2810
    %2812 = vmatprep.subr.mxu0 0.0
    %v2813 = vand.u32 %v94, 4294901760
    %v2814 = vsub.f32 %v94, %v2813
    %v2815 = vand.u32 %v2814, 4294901760
    %v2816 = vsub.f32 %v2814, %v2815
    %v2817 = vand.u32 %v2816, 4294901760
    %2818 = vmatpush1.msra.mxu0 %v2817
    %2819 = vmatprep.subr.mxu0 0.0
    %v2820 = vand.u32 %v95, 4294901760
    %v2821 = vsub.f32 %v95, %v2820
    %v2822 = vand.u32 %v2821, 4294901760
    %v2823 = vsub.f32 %v2821, %v2822
    %v2824 = vand.u32 %v2823, 4294901760
    %2825 = vmatpush1.msra.mxu0 %v2824
    %2826 = vmatprep.subr.mxu0 0.0
    %v2827 = vand.u32 %v96, 4294901760
    %v2828 = vsub.f32 %v96, %v2827
    %v2829 = vand.u32 %v2828, 4294901760
    %v2830 = vsub.f32 %v2828, %v2829
    %v2831 = vand.u32 %v2830, 4294901760
    %2832 = vmatpush1.msra.mxu0 %v2831
    %2833 = vmatprep.subr.mxu0 0.0
    %v2834 = vand.u32 %v97, 4294901760
    %v2835 = vsub.f32 %v97, %v2834
    %v2836 = vand.u32 %v2835, 4294901760
    %v2837 = vsub.f32 %v2835, %v2836
    %v2838 = vand.u32 %v2837, 4294901760
    %2839 = vmatpush1.msra.mxu0 %v2838
    %2840 = vmatprep.subr.mxu0 0.0
    %v2841 = vand.u32 %v98, 4294901760
    %v2842 = vsub.f32 %v98, %v2841
    %v2843 = vand.u32 %v2842, 4294901760
    %v2844 = vsub.f32 %v2842, %v2843
    %v2845 = vand.u32 %v2844, 4294901760
    %2846 = vmatpush1.msra.mxu0 %v2845
    %2847 = vmatprep.subr.mxu0 0.0
    %v2848 = vand.u32 %v99, 4294901760
    %v2849 = vsub.f32 %v99, %v2848
    %v2850 = vand.u32 %v2849, 4294901760
    %v2851 = vsub.f32 %v2849, %v2850
    %v2852 = vand.u32 %v2851, 4294901760
    %2853 = vmatpush1.msra.mxu0 %v2852
    %2854 = vmatprep.subr.mxu0 0.0
    %v2855 = vand.u32 %v100, 4294901760
    %v2856 = vsub.f32 %v100, %v2855
    %v2857 = vand.u32 %v2856, 4294901760
    %v2858 = vsub.f32 %v2856, %v2857
    %v2859 = vand.u32 %v2858, 4294901760
    %2860 = vmatpush1.msra.mxu0 %v2859
    %2861 = vmatprep.subr.mxu0 0.0
    %v2862 = vand.u32 %v101, 4294901760
    %v2863 = vsub.f32 %v101, %v2862
    %v2864 = vand.u32 %v2863, 4294901760
    %v2865 = vsub.f32 %v2863, %v2864
    %v2866 = vand.u32 %v2865, 4294901760
    %2867 = vmatpush1.msra.mxu0 %v2866
    %2868 = vmatprep.subr.mxu0 0.0
    %v2869 = vand.u32 %v102, 4294901760
    %v2870 = vsub.f32 %v102, %v2869
    %v2871 = vand.u32 %v2870, 4294901760
    %v2872 = vsub.f32 %v2870, %v2871
    %v2873 = vand.u32 %v2872, 4294901760
    %2874 = vmatpush1.msra.mxu0 %v2873
    %2875 = vmatprep.subr.mxu0 0.0
    %v2876 = vand.u32 %v103, 4294901760
    %v2877 = vsub.f32 %v103, %v2876
    %v2878 = vand.u32 %v2877, 4294901760
    %v2879 = vsub.f32 %v2877, %v2878
    %v2880 = vand.u32 %v2879, 4294901760
    %2881 = vmatpush1.msra.mxu0 %v2880
    %2882 = vmatprep.subr.mxu0 0.0
    %v2883 = vand.u32 %v104, 4294901760
    %v2884 = vsub.f32 %v104, %v2883
    %v2885 = vand.u32 %v2884, 4294901760
    %v2886 = vsub.f32 %v2884, %v2885
    %v2887 = vand.u32 %v2886, 4294901760
    %2888 = vmatpush1.msra.mxu0 %v2887
    %2889 = vmatprep.subr.mxu0 0.0
    %v2890 = vand.u32 %v105, 4294901760
    %v2891 = vsub.f32 %v105, %v2890
    %v2892 = vand.u32 %v2891, 4294901760
    %v2893 = vsub.f32 %v2891, %v2892
    %v2894 = vand.u32 %v2893, 4294901760
    %2895 = vmatpush1.msra.mxu0 %v2894
    %2896 = vmatprep.subr.mxu0 0.0
    %2897 = vmatpush1.msra.mxu0 0.0
    %2898 = vmatprep.subr.mxu0 0.0
    %2899 = vmatpush1.msra.mxu0 0.0
    %2900 = vmatprep.subr.mxu0 0.0
    %2901 = vmatpush1.msra.mxu0 0.0
    %2902 = vmatprep.subr.mxu0 0.0
    %2903 = vmatpush1.msra.mxu0 0.0
    %2904 = vmatprep.subr.mxu0 0.0
    %2905 = vmatpush1.msra.mxu0 0.0
    %2906 = vmatprep.subr.mxu0 0.0
    %2907 = vmatpush1.msra.mxu0 0.0
    %2908 = vmatprep.subr.mxu0 0.0
    %2909 = vmatpush1.msra.mxu0 0.0
    %2910 = vmatprep.subr.mxu0 0.0
    %2911 = vmatpush1.msra.mxu0 0.0
    %2912 = vmatprep.subr.mxu0 0.0
    %2913 = vmatpush1.msra.mxu0 0.0
    %2914 = vmatprep.subr.mxu0 0.0
    %2915 = vmatpush1.msra.mxu0 0.0
    %2916 = vmatprep.subr.mxu0 0.0
    %2917 = vmatpush1.msra.mxu0 0.0
    %2918 = vmatprep.subr.mxu0 0.0
    %2919 = vmatpush1.msra.mxu0 0.0
    %2920 = vmatprep.subr.mxu0 0.0
    %2921 = vmatpush1.msra.mxu0 0.0
    %2922 = vmatprep.subr.mxu0 0.0
    %2923 = vmatpush1.msra.mxu0 0.0
    %2924 = vmatprep.subr.mxu0 0.0
    %2925 = vmatpush1.msra.mxu0 0.0
    %2926 = vmatprep.subr.mxu0 0.0
    %2927 = vmatpush1.msra.mxu0 0.0
    %2928 = vmatprep.mubr.f32.mxu0 0.0
    %v2929 = vand.u32 %v2578, 4294901760
    %2930 = vmatmul.mubr.f32.gmra.mrb[0].mxu0 %v2929
    %v2931 = vpop.f32.mrb[0].mxu0
    %v2932 = vadd.f32 %v2781, %v2931
    %v2933 = vpop.f32.mrb[0].mxu0
    %2934 = vdwg.mxu0
    %2935 = vmatprep.subr.mxu0 0.0
    %v2936 = vand.u32 %v90, 4294901760
    %v2937 = vsub.f32 %v90, %v2936
    %2938 = vmatpush1.msra.mxu0 %v2937
    %2939 = vmatprep.subr.mxu0 0.0
    %v2940 = vand.u32 %v91, 4294901760
    %v2941 = vsub.f32 %v91, %v2940
    %2942 = vmatpush1.msra.mxu0 %v2941
    %2943 = vmatprep.subr.mxu0 0.0
    %v2944 = vand.u32 %v92, 4294901760
    %v2945 = vsub.f32 %v92, %v2944
    %2946 = vmatpush1.msra.mxu0 %v2945
    %2947 = vmatprep.subr.mxu0 0.0
    %v2948 = vand.u32 %v93, 4294901760
    %v2949 = vsub.f32 %v93, %v2948
    %2950 = vmatpush1.msra.mxu0 %v2949
    %2951 = vmatprep.subr.mxu0 0.0
    %v2952 = vand.u32 %v94, 4294901760
    %v2953 = vsub.f32 %v94, %v2952
    %2954 = vmatpush1.msra.mxu0 %v2953
    %2955 = vmatprep.subr.mxu0 0.0
    %v2956 = vand.u32 %v95, 4294901760
    %v2957 = vsub.f32 %v95, %v2956
    %2958 = vmatpush1.msra.mxu0 %v2957
    %2959 = vmatprep.subr.mxu0 0.0
    %v2960 = vand.u32 %v96, 4294901760
    %v2961 = vsub.f32 %v96, %v2960
    %2962 = vmatpush1.msra.mxu0 %v2961
    %2963 = vmatprep.subr.mxu0 0.0
    %v2964 = vand.u32 %v97, 4294901760
    %v2965 = vsub.f32 %v97, %v2964
    %2966 = vmatpush1.msra.mxu0 %v2965
    %2967 = vmatprep.subr.mxu0 0.0
    %v2968 = vand.u32 %v98, 4294901760
    %v2969 = vsub.f32 %v98, %v2968
    %2970 = vmatpush1.msra.mxu0 %v2969
    %2971 = vmatprep.subr.mxu0 0.0
    %v2972 = vand.u32 %v99, 4294901760
    %v2973 = vsub.f32 %v99, %v2972
    %2974 = vmatpush1.msra.mxu0 %v2973
    %2975 = vmatprep.subr.mxu0 0.0
    %v2976 = vand.u32 %v100, 4294901760
    %v2977 = vsub.f32 %v100, %v2976
    %2978 = vmatpush1.msra.mxu0 %v2977
    %2979 = vmatprep.subr.mxu0 0.0
    %v2980 = vand.u32 %v101, 4294901760
    %v2981 = vsub.f32 %v101, %v2980
    %2982 = vmatpush1.msra.mxu0 %v2981
    %2983 = vmatprep.subr.mxu0 0.0
    %v2984 = vand.u32 %v102, 4294901760
    %v2985 = vsub.f32 %v102, %v2984
    %2986 = vmatpush1.msra.mxu0 %v2985
    %2987 = vmatprep.subr.mxu0 0.0
    %v2988 = vand.u32 %v103, 4294901760
    %v2989 = vsub.f32 %v103, %v2988
    %2990 = vmatpush1.msra.mxu0 %v2989
    %2991 = vmatprep.subr.mxu0 0.0
    %v2992 = vand.u32 %v104, 4294901760
    %v2993 = vsub.f32 %v104, %v2992
    %2994 = vmatpush1.msra.mxu0 %v2993
    %2995 = vmatprep.subr.mxu0 0.0
    %v2996 = vand.u32 %v105, 4294901760
    %v2997 = vsub.f32 %v105, %v2996
    %2998 = vmatpush1.msra.mxu0 %v2997
    %2999 = vmatprep.subr.mxu0 0.0
    %3000 = vmatpush1.msra.mxu0 0.0
    %3001 = vmatprep.subr.mxu0 0.0
    %3002 = vmatpush1.msra.mxu0 0.0
    %3003 = vmatprep.subr.mxu0 0.0
    %3004 = vmatpush1.msra.mxu0 0.0
    %3005 = vmatprep.subr.mxu0 0.0
    %3006 = vmatpush1.msra.mxu0 0.0
    %3007 = vmatprep.subr.mxu0 0.0
    %3008 = vmatpush1.msra.mxu0 0.0
    %3009 = vmatprep.subr.mxu0 0.0
    %3010 = vmatpush1.msra.mxu0 0.0
    %3011 = vmatprep.subr.mxu0 0.0
    %3012 = vmatpush1.msra.mxu0 0.0
    %3013 = vmatprep.subr.mxu0 0.0
    %3014 = vmatpush1.msra.mxu0 0.0
    %3015 = vmatprep.subr.mxu0 0.0
    %3016 = vmatpush1.msra.mxu0 0.0
    %3017 = vmatprep.subr.mxu0 0.0
    %3018 = vmatpush1.msra.mxu0 0.0
    %3019 = vmatprep.subr.mxu0 0.0
    %3020 = vmatpush1.msra.mxu0 0.0
    %3021 = vmatprep.subr.mxu0 0.0
    %3022 = vmatpush1.msra.mxu0 0.0
    %3023 = vmatprep.subr.mxu0 0.0
    %3024 = vmatpush1.msra.mxu0 0.0
    %3025 = vmatprep.subr.mxu0 0.0
    %3026 = vmatpush1.msra.mxu0 0.0
    %3027 = vmatprep.subr.mxu0 0.0
    %3028 = vmatpush1.msra.mxu0 0.0
    %3029 = vmatprep.subr.mxu0 0.0
    %3030 = vmatpush1.msra.mxu0 0.0
    %3031 = vmatprep.mubr.f32.mxu0 0.0
    %v3032 = vand.u32 %v2578, 4294901760
    %v3033 = vsub.f32 %v2578, %v3032
    %3034 = vmatmul.mubr.f32.gmra.mrb[0].mxu0 %v3033
    %v3035 = vpop.f32.mrb[0].mxu0
    %v3036 = vadd.f32 %v2932, %v3035
    %v3037 = vpop.f32.mrb[0].mxu0
    %3038 = vdwg.mxu0
    %3039 = vmatprep.subr.mxu0 0.0
    %v3040 = vand.u32 %v90, 4294901760
    %3041 = vmatpush1.msra.mxu0 %v3040
    %3042 = vmatprep.subr.mxu0 0.0
    %v3043 = vand.u32 %v91, 4294901760
    %3044 = vmatpush1.msra.mxu0 %v3043
    %3045 = vmatprep.subr.mxu0 0.0
    %v3046 = vand.u32 %v92, 4294901760
    %3047 = vmatpush1.msra.mxu0 %v3046
    %3048 = vmatprep.subr.mxu0 0.0
    %v3049 = vand.u32 %v93, 4294901760
    %3050 = vmatpush1.msra.mxu0 %v3049
    %3051 = vmatprep.subr.mxu0 0.0
    %v3052 = vand.u32 %v94, 4294901760
    %3053 = vmatpush1.msra.mxu0 %v3052
    %3054 = vmatprep.subr.mxu0 0.0
    %v3055 = vand.u32 %v95, 4294901760
    %3056 = vmatpush1.msra.mxu0 %v3055
    %3057 = vmatprep.subr.mxu0 0.0
    %v3058 = vand.u32 %v96, 4294901760
    %3059 = vmatpush1.msra.mxu0 %v3058
    %3060 = vmatprep.subr.mxu0 0.0
    %v3061 = vand.u32 %v97, 4294901760
    %3062 = vmatpush1.msra.mxu0 %v3061
    %3063 = vmatprep.subr.mxu0 0.0
    %v3064 = vand.u32 %v98, 4294901760
    %3065 = vmatpush1.msra.mxu0 %v3064
    %3066 = vmatprep.subr.mxu0 0.0
    %v3067 = vand.u32 %v99, 4294901760
    %3068 = vmatpush1.msra.mxu0 %v3067
    %3069 = vmatprep.subr.mxu0 0.0
    %v3070 = vand.u32 %v100, 4294901760
    %3071 = vmatpush1.msra.mxu0 %v3070
    %3072 = vmatprep.subr.mxu0 0.0
    %v3073 = vand.u32 %v101, 4294901760
    %3074 = vmatpush1.msra.mxu0 %v3073
    %3075 = vmatprep.subr.mxu0 0.0
    %v3076 = vand.u32 %v102, 4294901760
    %3077 = vmatpush1.msra.mxu0 %v3076
    %3078 = vmatprep.subr.mxu0 0.0
    %v3079 = vand.u32 %v103, 4294901760
    %3080 = vmatpush1.msra.mxu0 %v3079
    %3081 = vmatprep.subr.mxu0 0.0
    %v3082 = vand.u32 %v104, 4294901760
    %3083 = vmatpush1.msra.mxu0 %v3082
    %3084 = vmatprep.subr.mxu0 0.0
    %v3085 = vand.u32 %v105, 4294901760
    %3086 = vmatpush1.msra.mxu0 %v3085
    %3087 = vmatprep.subr.mxu0 0.0
    %3088 = vmatpush1.msra.mxu0 0.0
    %3089 = vmatprep.subr.mxu0 0.0
    %3090 = vmatpush1.msra.mxu0 0.0
    %3091 = vmatprep.subr.mxu0 0.0
    %3092 = vmatpush1.msra.mxu0 0.0
    %3093 = vmatprep.subr.mxu0 0.0
    %3094 = vmatpush1.msra.mxu0 0.0
    %3095 = vmatprep.subr.mxu0 0.0
    %3096 = vmatpush1.msra.mxu0 0.0
    %3097 = vmatprep.subr.mxu0 0.0
    %3098 = vmatpush1.msra.mxu0 0.0
    %3099 = vmatprep.subr.mxu0 0.0
    %3100 = vmatpush1.msra.mxu0 0.0
    %3101 = vmatprep.subr.mxu0 0.0
    %3102 = vmatpush1.msra.mxu0 0.0
    %3103 = vmatprep.subr.mxu0 0.0
    %3104 = vmatpush1.msra.mxu0 0.0
    %3105 = vmatprep.subr.mxu0 0.0
    %3106 = vmatpush1.msra.mxu0 0.0
    %3107 = vmatprep.subr.mxu0 0.0
    %3108 = vmatpush1.msra.mxu0 0.0
    %3109 = vmatprep.subr.mxu0 0.0
    %3110 = vmatpush1.msra.mxu0 0.0
    %3111 = vmatprep.subr.mxu0 0.0
    %3112 = vmatpush1.msra.mxu0 0.0
    %3113 = vmatprep.subr.mxu0 0.0
    %3114 = vmatpush1.msra.mxu0 0.0
    %3115 = vmatprep.subr.mxu0 0.0
    %3116 = vmatpush1.msra.mxu0 0.0
    %3117 = vmatprep.subr.mxu0 0.0
    %3118 = vmatpush1.msra.mxu0 0.0
    %3119 = vmatprep.mubr.f32.mxu0 0.0
    %v3120 = vand.u32 %v2578, 4294901760
    %v3121 = vsub.f32 %v2578, %v3120
    %v3122 = vand.u32 %v3121, 4294901760
    %3123 = vmatmul.mubr.f32.gmra.mrb[0].mxu0 %v3122
    %v3124 = vpop.f32.mrb[0].mxu0
    %v3125 = vadd.f32 %v3036, %v3124
    %v3126 = vpop.f32.mrb[0].mxu0
    %3127 = vdwg.mxu0
    %3128 = vmatprep.subr.mxu0 0.0
    %v3129 = vand.u32 %v90, 4294901760
    %v3130 = vsub.f32 %v90, %v3129
    %v3131 = vand.u32 %v3130, 4294901760
    %3132 = vmatpush1.msra.mxu0 %v3131
    %3133 = vmatprep.subr.mxu0 0.0
    %v3134 = vand.u32 %v91, 4294901760
    %v3135 = vsub.f32 %v91, %v3134
    %v3136 = vand.u32 %v3135, 4294901760
    %3137 = vmatpush1.msra.mxu0 %v3136
    %3138 = vmatprep.subr.mxu0 0.0
    %v3139 = vand.u32 %v92, 4294901760
    %v3140 = vsub.f32 %v92, %v3139
    %v3141 = vand.u32 %v3140, 4294901760
    %3142 = vmatpush1.msra.mxu0 %v3141
    %3143 = vmatprep.subr.mxu0 0.0
    %v3144 = vand.u32 %v93, 4294901760
    %v3145 = vsub.f32 %v93, %v3144
    %v3146 = vand.u32 %v3145, 4294901760
    %3147 = vmatpush1.msra.mxu0 %v3146
    %3148 = vmatprep.subr.mxu0 0.0
    %v3149 = vand.u32 %v94, 4294901760
    %v3150 = vsub.f32 %v94, %v3149
    %v3151 = vand.u32 %v3150, 4294901760
    %3152 = vmatpush1.msra.mxu0 %v3151
    %3153 = vmatprep.subr.mxu0 0.0
    %v3154 = vand.u32 %v95, 4294901760
    %v3155 = vsub.f32 %v95, %v3154
    %v3156 = vand.u32 %v3155, 4294901760
    %3157 = vmatpush1.msra.mxu0 %v3156
    %3158 = vmatprep.subr.mxu0 0.0
    %v3159 = vand.u32 %v96, 4294901760
    %v3160 = vsub.f32 %v96, %v3159
    %v3161 = vand.u32 %v3160, 4294901760
    %3162 = vmatpush1.msra.mxu0 %v3161
    %3163 = vmatprep.subr.mxu0 0.0
    %v3164 = vand.u32 %v97, 4294901760
    %v3165 = vsub.f32 %v97, %v3164
    %v3166 = vand.u32 %v3165, 4294901760
    %3167 = vmatpush1.msra.mxu0 %v3166
    %3168 = vmatprep.subr.mxu0 0.0
    %v3169 = vand.u32 %v98, 4294901760
    %v3170 = vsub.f32 %v98, %v3169
    %v3171 = vand.u32 %v3170, 4294901760
    %3172 = vmatpush1.msra.mxu0 %v3171
    %3173 = vmatprep.subr.mxu0 0.0
    %v3174 = vand.u32 %v99, 4294901760
    %v3175 = vsub.f32 %v99, %v3174
    %v3176 = vand.u32 %v3175, 4294901760
    %3177 = vmatpush1.msra.mxu0 %v3176
    %3178 = vmatprep.subr.mxu0 0.0
    %v3179 = vand.u32 %v100, 4294901760
    %v3180 = vsub.f32 %v100, %v3179
    %v3181 = vand.u32 %v3180, 4294901760
    %3182 = vmatpush1.msra.mxu0 %v3181
    %3183 = vmatprep.subr.mxu0 0.0
    %v3184 = vand.u32 %v101, 4294901760
    %v3185 = vsub.f32 %v101, %v3184
    %v3186 = vand.u32 %v3185, 4294901760
    %3187 = vmatpush1.msra.mxu0 %v3186
    %3188 = vmatprep.subr.mxu0 0.0
    %v3189 = vand.u32 %v102, 4294901760
    %v3190 = vsub.f32 %v102, %v3189
    %v3191 = vand.u32 %v3190, 4294901760
    %3192 = vmatpush1.msra.mxu0 %v3191
    %3193 = vmatprep.subr.mxu0 0.0
    %v3194 = vand.u32 %v103, 4294901760
    %v3195 = vsub.f32 %v103, %v3194
    %v3196 = vand.u32 %v3195, 4294901760
    %3197 = vmatpush1.msra.mxu0 %v3196
    %3198 = vmatprep.subr.mxu0 0.0
    %v3199 = vand.u32 %v104, 4294901760
    %v3200 = vsub.f32 %v104, %v3199
    %v3201 = vand.u32 %v3200, 4294901760
    %3202 = vmatpush1.msra.mxu0 %v3201
    %3203 = vmatprep.subr.mxu0 0.0
    %v3204 = vand.u32 %v105, 4294901760
    %v3205 = vsub.f32 %v105, %v3204
    %v3206 = vand.u32 %v3205, 4294901760
    %3207 = vmatpush1.msra.mxu0 %v3206
    %3208 = vmatprep.subr.mxu0 0.0
    %3209 = vmatpush1.msra.mxu0 0.0
    %3210 = vmatprep.subr.mxu0 0.0
    %3211 = vmatpush1.msra.mxu0 0.0
    %3212 = vmatprep.subr.mxu0 0.0
    %3213 = vmatpush1.msra.mxu0 0.0
    %3214 = vmatprep.subr.mxu0 0.0
    %3215 = vmatpush1.msra.mxu0 0.0
    %3216 = vmatprep.subr.mxu0 0.0
    %3217 = vmatpush1.msra.mxu0 0.0
    %3218 = vmatprep.subr.mxu0 0.0
    %3219 = vmatpush1.msra.mxu0 0.0
    %3220 = vmatprep.subr.mxu0 0.0
    %3221 = vmatpush1.msra.mxu0 0.0
    %3222 = vmatprep.subr.mxu0 0.0
    %3223 = vmatpush1.msra.mxu0 0.0
    %3224 = vmatprep.subr.mxu0 0.0
    %3225 = vmatpush1.msra.mxu0 0.0
    %3226 = vmatprep.subr.mxu0 0.0
    %3227 = vmatpush1.msra.mxu0 0.0
    %3228 = vmatprep.subr.mxu0 0.0
    %3229 = vmatpush1.msra.mxu0 0.0
    %3230 = vmatprep.subr.mxu0 0.0
    %3231 = vmatpush1.msra.mxu0 0.0
    %3232 = vmatprep.subr.mxu0 0.0
    %3233 = vmatpush1.msra.mxu0 0.0
    %3234 = vmatprep.subr.mxu0 0.0
    %3235 = vmatpush1.msra.mxu0 0.0
    %3236 = vmatprep.subr.mxu0 0.0
    %3237 = vmatpush1.msra.mxu0 0.0
    %3238 = vmatprep.subr.mxu0 0.0
    %3239 = vmatpush1.msra.mxu0 0.0
    %3240 = vmatprep.mubr.f32.mxu0 0.0
    %v3241 = vand.u32 %v2578, 4294901760
    %3242 = vmatmul.mubr.f32.gmra.mrb[0].mxu0 %v3241
    %v3243 = vpop.f32.mrb[0].mxu0
    %v3244 = vadd.f32 %v3125, %v3243
    %v3245 = vpop.f32.mrb[0].mxu0
    %3246 = vdwg.mxu0
    %3247 = vmatprep.subr.mxu0 0.0
    %v3248 = vand.u32 %v90, 4294901760
    %3249 = vmatpush1.msra.mxu0 %v3248
    %3250 = vmatprep.subr.mxu0 0.0
    %v3251 = vand.u32 %v91, 4294901760
    %3252 = vmatpush1.msra.mxu0 %v3251
    %3253 = vmatprep.subr.mxu0 0.0
    %v3254 = vand.u32 %v92, 4294901760
    %3255 = vmatpush1.msra.mxu0 %v3254
    %3256 = vmatprep.subr.mxu0 0.0
    %v3257 = vand.u32 %v93, 4294901760
    %3258 = vmatpush1.msra.mxu0 %v3257
    %3259 = vmatprep.subr.mxu0 0.0
    %v3260 = vand.u32 %v94, 4294901760
    %3261 = vmatpush1.msra.mxu0 %v3260
    %3262 = vmatprep.subr.mxu0 0.0
    %v3263 = vand.u32 %v95, 4294901760
    %3264 = vmatpush1.msra.mxu0 %v3263
    %3265 = vmatprep.subr.mxu0 0.0
    %v3266 = vand.u32 %v96, 4294901760
    %3267 = vmatpush1.msra.mxu0 %v3266
    %3268 = vmatprep.subr.mxu0 0.0
    %v3269 = vand.u32 %v97, 4294901760
    %3270 = vmatpush1.msra.mxu0 %v3269
    %3271 = vmatprep.subr.mxu0 0.0
    %v3272 = vand.u32 %v98, 4294901760
    %3273 = vmatpush1.msra.mxu0 %v3272
    %3274 = vmatprep.subr.mxu0 0.0
    %v3275 = vand.u32 %v99, 4294901760
    %3276 = vmatpush1.msra.mxu0 %v3275
    %3277 = vmatprep.subr.mxu0 0.0
    %v3278 = vand.u32 %v100, 4294901760
    %3279 = vmatpush1.msra.mxu0 %v3278
    %3280 = vmatprep.subr.mxu0 0.0
    %v3281 = vand.u32 %v101, 4294901760
    %3282 = vmatpush1.msra.mxu0 %v3281
    %3283 = vmatprep.subr.mxu0 0.0
    %v3284 = vand.u32 %v102, 4294901760
    %3285 = vmatpush1.msra.mxu0 %v3284
    %3286 = vmatprep.subr.mxu0 0.0
    %v3287 = vand.u32 %v103, 4294901760
    %3288 = vmatpush1.msra.mxu0 %v3287
    %3289 = vmatprep.subr.mxu0 0.0
    %v3290 = vand.u32 %v104, 4294901760
    %3291 = vmatpush1.msra.mxu0 %v3290
    %3292 = vmatprep.subr.mxu0 0.0
    %v3293 = vand.u32 %v105, 4294901760
    %3294 = vmatpush1.msra.mxu0 %v3293
    %3295 = vmatprep.subr.mxu0 0.0
    %3296 = vmatpush1.msra.mxu0 0.0
    %3297 = vmatprep.subr.mxu0 0.0
    %3298 = vmatpush1.msra.mxu0 0.0
    %3299 = vmatprep.subr.mxu0 0.0
    %3300 = vmatpush1.msra.mxu0 0.0
    %3301 = vmatprep.subr.mxu0 0.0
    %3302 = vmatpush1.msra.mxu0 0.0
    %3303 = vmatprep.subr.mxu0 0.0
    %3304 = vmatpush1.msra.mxu0 0.0
    %3305 = vmatprep.subr.mxu0 0.0
    %3306 = vmatpush1.msra.mxu0 0.0
    %3307 = vmatprep.subr.mxu0 0.0
    %3308 = vmatpush1.msra.mxu0 0.0
    %3309 = vmatprep.subr.mxu0 0.0
    %3310 = vmatpush1.msra.mxu0 0.0
    %3311 = vmatprep.subr.mxu0 0.0
    %3312 = vmatpush1.msra.mxu0 0.0
    %3313 = vmatprep.subr.mxu0 0.0
    %3314 = vmatpush1.msra.mxu0 0.0
    %3315 = vmatprep.subr.mxu0 0.0
    %3316 = vmatpush1.msra.mxu0 0.0
    %3317 = vmatprep.subr.mxu0 0.0
    %3318 = vmatpush1.msra.mxu0 0.0
    %3319 = vmatprep.subr.mxu0 0.0
    %3320 = vmatpush1.msra.mxu0 0.0
    %3321 = vmatprep.subr.mxu0 0.0
    %3322 = vmatpush1.msra.mxu0 0.0
    %3323 = vmatprep.subr.mxu0 0.0
    %3324 = vmatpush1.msra.mxu0 0.0
    %3325 = vmatprep.subr.mxu0 0.0
    %3326 = vmatpush1.msra.mxu0 0.0
    %3327 = vmatprep.mubr.f32.mxu0 0.0
    %v3328 = vand.u32 %v2578, 4294901760
    %3329 = vmatmul.mubr.f32.gmra.mrb[0].mxu0 %v3328
    %v3330 = vpop.f32.mrb[0].mxu0
    %v3331 = vadd.f32 %v3244, %v3330
    %v3332 = vpop.f32.mrb[0].mxu0
    %3333 = vdwg.mxu0
    %v3335 = vsel %vm921, %v3331, 0
    %3337 = vmatprep.subr.mxu0 0.0
    %v3338 = vand.u32 %v106, 4294901760
    %3339 = vmatpush1.msra.mxu0 %v3338
    %3340 = vmatprep.subr.mxu0 0.0
    %3341 = vmatpush1.msra.mxu0 0.0
    %3342 = vmatprep.subr.mxu0 0.0
    %3343 = vmatpush1.msra.mxu0 0.0
    %3344 = vmatprep.subr.mxu0 0.0
    %3345 = vmatpush1.msra.mxu0 0.0
    %3346 = vmatprep.subr.mxu0 0.0
    %3347 = vmatpush1.msra.mxu0 0.0
    %3348 = vmatprep.subr.mxu0 0.0
    %3349 = vmatpush1.msra.mxu0 0.0
    %3350 = vmatprep.subr.mxu0 0.0
    %3351 = vmatpush1.msra.mxu0 0.0
    %3352 = vmatprep.subr.mxu0 0.0
    %3353 = vmatpush1.msra.mxu0 0.0
    %3354 = vmatprep.subr.mxu0 0.0
    %3355 = vmatpush1.msra.mxu0 0.0
    %3356 = vmatprep.subr.mxu0 0.0
    %3357 = vmatpush1.msra.mxu0 0.0
    %3358 = vmatprep.subr.mxu0 0.0
    %3359 = vmatpush1.msra.mxu0 0.0
    %3360 = vmatprep.subr.mxu0 0.0
    %3361 = vmatpush1.msra.mxu0 0.0
    %3362 = vmatprep.subr.mxu0 0.0
    %3363 = vmatpush1.msra.mxu0 0.0
    %3364 = vmatprep.subr.mxu0 0.0
    %3365 = vmatpush1.msra.mxu0 0.0
    %3366 = vmatprep.subr.mxu0 0.0
    %3367 = vmatpush1.msra.mxu0 0.0
    %3368 = vmatprep.subr.mxu0 0.0
    %3369 = vmatpush1.msra.mxu0 0.0
    %3370 = vmatprep.subr.mxu0 0.0
    %3371 = vmatpush1.msra.mxu0 0.0
    %3372 = vmatprep.subr.mxu0 0.0
    %3373 = vmatpush1.msra.mxu0 0.0
    %3374 = vmatprep.subr.mxu0 0.0
    %3375 = vmatpush1.msra.mxu0 0.0
    %3376 = vmatprep.subr.mxu0 0.0
    %3377 = vmatpush1.msra.mxu0 0.0
    %3378 = vmatprep.subr.mxu0 0.0
    %3379 = vmatpush1.msra.mxu0 0.0
    %3380 = vmatprep.subr.mxu0 0.0
    %3381 = vmatpush1.msra.mxu0 0.0
    %3382 = vmatprep.subr.mxu0 0.0
    %3383 = vmatpush1.msra.mxu0 0.0
    %3384 = vmatprep.subr.mxu0 0.0
    %3385 = vmatpush1.msra.mxu0 0.0
    %3386 = vmatprep.subr.mxu0 0.0
    %3387 = vmatpush1.msra.mxu0 0.0
    %3388 = vmatprep.subr.mxu0 0.0
    %3389 = vmatpush1.msra.mxu0 0.0
    %3390 = vmatprep.subr.mxu0 0.0
    %3391 = vmatpush1.msra.mxu0 0.0
    %3392 = vmatprep.subr.mxu0 0.0
    %3393 = vmatpush1.msra.mxu0 0.0
    %3394 = vmatprep.subr.mxu0 0.0
    %3395 = vmatpush1.msra.mxu0 0.0
    %3396 = vmatprep.subr.mxu0 0.0
    %3397 = vmatpush1.msra.mxu0 0.0
    %3398 = vmatprep.subr.mxu0 0.0
    %3399 = vmatpush1.msra.mxu0 0.0
    %3400 = vmatprep.subr.mxu0 0.0
    %3401 = vmatpush1.msra.mxu0 0.0
    %3402 = vmatprep.mubr.f32.mxu0 0.0
    %v3403 = vand.u32 %v3335, 4294901760
    %v3404 = vsub.f32 %v3335, %v3403
    %v3405 = vand.u32 %v3404, 4294901760
    %v3406 = vsub.f32 %v3404, %v3405
    %v3407 = vand.u32 %v3406, 4294901760
    %3408 = vmatmul.mubr.f32.gmra.mrb[0].mxu0 %v3407
    %v3409 = vpop.f32.mrb[0].mxu0
    %v3410 = vadd.f32 0.0, %v3409
    %v3411 = vpop.f32.mrb[0].mxu0
    %3412 = vdwg.mxu0
    %3413 = vmatprep.subr.mxu0 0.0
    %v3414 = vand.u32 %v106, 4294901760
    %v3415 = vsub.f32 %v106, %v3414
    %v3416 = vand.u32 %v3415, 4294901760
    %v3417 = vsub.f32 %v3415, %v3416
    %v3418 = vand.u32 %v3417, 4294901760
    %3419 = vmatpush1.msra.mxu0 %v3418
    %3420 = vmatprep.subr.mxu0 0.0
    %3421 = vmatpush1.msra.mxu0 0.0
    %3422 = vmatprep.subr.mxu0 0.0
    %3423 = vmatpush1.msra.mxu0 0.0
    %3424 = vmatprep.subr.mxu0 0.0
    %3425 = vmatpush1.msra.mxu0 0.0
    %3426 = vmatprep.subr.mxu0 0.0
    %3427 = vmatpush1.msra.mxu0 0.0
    %3428 = vmatprep.subr.mxu0 0.0
    %3429 = vmatpush1.msra.mxu0 0.0
    %3430 = vmatprep.subr.mxu0 0.0
    %3431 = vmatpush1.msra.mxu0 0.0
    %3432 = vmatprep.subr.mxu0 0.0
    %3433 = vmatpush1.msra.mxu0 0.0
    %3434 = vmatprep.subr.mxu0 0.0
    %3435 = vmatpush1.msra.mxu0 0.0
    %3436 = vmatprep.subr.mxu0 0.0
    %3437 = vmatpush1.msra.mxu0 0.0
    %3438 = vmatprep.subr.mxu0 0.0
    %3439 = vmatpush1.msra.mxu0 0.0
    %3440 = vmatprep.subr.mxu0 0.0
    %3441 = vmatpush1.msra.mxu0 0.0
    %3442 = vmatprep.subr.mxu0 0.0
    %3443 = vmatpush1.msra.mxu0 0.0
    %3444 = vmatprep.subr.mxu0 0.0
    %3445 = vmatpush1.msra.mxu0 0.0
    %3446 = vmatprep.subr.mxu0 0.0
    %3447 = vmatpush1.msra.mxu0 0.0
    %3448 = vmatprep.subr.mxu0 0.0
    %3449 = vmatpush1.msra.mxu0 0.0
    %3450 = vmatprep.subr.mxu0 0.0
    %3451 = vmatpush1.msra.mxu0 0.0
    %3452 = vmatprep.subr.mxu0 0.0
    %3453 = vmatpush1.msra.mxu0 0.0
    %3454 = vmatprep.subr.mxu0 0.0
    %3455 = vmatpush1.msra.mxu0 0.0
    %3456 = vmatprep.subr.mxu0 0.0
    %3457 = vmatpush1.msra.mxu0 0.0
    %3458 = vmatprep.subr.mxu0 0.0
    %3459 = vmatpush1.msra.mxu0 0.0
    %3460 = vmatprep.subr.mxu0 0.0
    %3461 = vmatpush1.msra.mxu0 0.0
    %3462 = vmatprep.subr.mxu0 0.0
    %3463 = vmatpush1.msra.mxu0 0.0
    %3464 = vmatprep.subr.mxu0 0.0
    %3465 = vmatpush1.msra.mxu0 0.0
    %3466 = vmatprep.subr.mxu0 0.0
    %3467 = vmatpush1.msra.mxu0 0.0
    %3468 = vmatprep.subr.mxu0 0.0
    %3469 = vmatpush1.msra.mxu0 0.0
    %3470 = vmatprep.subr.mxu0 0.0
    %3471 = vmatpush1.msra.mxu0 0.0
    %3472 = vmatprep.subr.mxu0 0.0
    %3473 = vmatpush1.msra.mxu0 0.0
    %3474 = vmatprep.subr.mxu0 0.0
    %3475 = vmatpush1.msra.mxu0 0.0
    %3476 = vmatprep.subr.mxu0 0.0
    %3477 = vmatpush1.msra.mxu0 0.0
    %3478 = vmatprep.subr.mxu0 0.0
    %3479 = vmatpush1.msra.mxu0 0.0
    %3480 = vmatprep.subr.mxu0 0.0
    %3481 = vmatpush1.msra.mxu0 0.0
    %3482 = vmatprep.mubr.f32.mxu0 0.0
    %v3483 = vand.u32 %v3335, 4294901760
    %3484 = vmatmul.mubr.f32.gmra.mrb[0].mxu0 %v3483
    %v3485 = vpop.f32.mrb[0].mxu0
    %v3486 = vadd.f32 %v3410, %v3485
    %v3487 = vpop.f32.mrb[0].mxu0
    %3488 = vdwg.mxu0
    %3489 = vmatprep.subr.mxu0 0.0
    %v3490 = vand.u32 %v106, 4294901760
    %v3491 = vsub.f32 %v106, %v3490
    %3492 = vmatpush1.msra.mxu0 %v3491
    %3493 = vmatprep.subr.mxu0 0.0
    %3494 = vmatpush1.msra.mxu0 0.0
    %3495 = vmatprep.subr.mxu0 0.0
    %3496 = vmatpush1.msra.mxu0 0.0
    %3497 = vmatprep.subr.mxu0 0.0
    %3498 = vmatpush1.msra.mxu0 0.0
    %3499 = vmatprep.subr.mxu0 0.0
    %3500 = vmatpush1.msra.mxu0 0.0
    %3501 = vmatprep.subr.mxu0 0.0
    %3502 = vmatpush1.msra.mxu0 0.0
    %3503 = vmatprep.subr.mxu0 0.0
    %3504 = vmatpush1.msra.mxu0 0.0
    %3505 = vmatprep.subr.mxu0 0.0
    %3506 = vmatpush1.msra.mxu0 0.0
    %3507 = vmatprep.subr.mxu0 0.0
    %3508 = vmatpush1.msra.mxu0 0.0
    %3509 = vmatprep.subr.mxu0 0.0
    %3510 = vmatpush1.msra.mxu0 0.0
    %3511 = vmatprep.subr.mxu0 0.0
    %3512 = vmatpush1.msra.mxu0 0.0
    %3513 = vmatprep.subr.mxu0 0.0
    %3514 = vmatpush1.msra.mxu0 0.0
    %3515 = vmatprep.subr.mxu0 0.0
    %3516 = vmatpush1.msra.mxu0 0.0
    %3517 = vmatprep.subr.mxu0 0.0
    %3518 = vmatpush1.msra.mxu0 0.0
    %3519 = vmatprep.subr.mxu0 0.0
    %3520 = vmatpush1.msra.mxu0 0.0
    %3521 = vmatprep.subr.mxu0 0.0
    %3522 = vmatpush1.msra.mxu0 0.0
    %3523 = vmatprep.subr.mxu0 0.0
    %3524 = vmatpush1.msra.mxu0 0.0
    %3525 = vmatprep.subr.mxu0 0.0
    %3526 = vmatpush1.msra.mxu0 0.0
    %3527 = vmatprep.subr.mxu0 0.0
    %3528 = vmatpush1.msra.mxu0 0.0
    %3529 = vmatprep.subr.mxu0 0.0
    %3530 = vmatpush1.msra.mxu0 0.0
    %3531 = vmatprep.subr.mxu0 0.0
    %3532 = vmatpush1.msra.mxu0 0.0
    %3533 = vmatprep.subr.mxu0 0.0
    %3534 = vmatpush1.msra.mxu0 0.0
    %3535 = vmatprep.subr.mxu0 0.0
    %3536 = vmatpush1.msra.mxu0 0.0
    %3537 = vmatprep.subr.mxu0 0.0
    %3538 = vmatpush1.msra.mxu0 0.0
    %3539 = vmatprep.subr.mxu0 0.0
    %3540 = vmatpush1.msra.mxu0 0.0
    %3541 = vmatprep.subr.mxu0 0.0
    %3542 = vmatpush1.msra.mxu0 0.0
    %3543 = vmatprep.subr.mxu0 0.0
    %3544 = vmatpush1.msra.mxu0 0.0
    %3545 = vmatprep.subr.mxu0 0.0
    %3546 = vmatpush1.msra.mxu0 0.0
    %3547 = vmatprep.subr.mxu0 0.0
    %3548 = vmatpush1.msra.mxu0 0.0
    %3549 = vmatprep.subr.mxu0 0.0
    %3550 = vmatpush1.msra.mxu0 0.0
    %3551 = vmatprep.subr.mxu0 0.0
    %3552 = vmatpush1.msra.mxu0 0.0
    %3553 = vmatprep.subr.mxu0 0.0
    %3554 = vmatpush1.msra.mxu0 0.0
    %3555 = vmatprep.mubr.f32.mxu0 0.0
    %v3556 = vand.u32 %v3335, 4294901760
    %v3557 = vsub.f32 %v3335, %v3556
    %3558 = vmatmul.mubr.f32.gmra.mrb[0].mxu0 %v3557
    %v3559 = vpop.f32.mrb[0].mxu0
    %v3560 = vadd.f32 %v3486, %v3559
    %v3561 = vpop.f32.mrb[0].mxu0
    %3562 = vdwg.mxu0
    %3563 = vmatprep.subr.mxu0 0.0
    %v3564 = vand.u32 %v106, 4294901760
    %3565 = vmatpush1.msra.mxu0 %v3564
    %3566 = vmatprep.subr.mxu0 0.0
    %3567 = vmatpush1.msra.mxu0 0.0
    %3568 = vmatprep.subr.mxu0 0.0
    %3569 = vmatpush1.msra.mxu0 0.0
    %3570 = vmatprep.subr.mxu0 0.0
    %3571 = vmatpush1.msra.mxu0 0.0
    %3572 = vmatprep.subr.mxu0 0.0
    %3573 = vmatpush1.msra.mxu0 0.0
    %3574 = vmatprep.subr.mxu0 0.0
    %3575 = vmatpush1.msra.mxu0 0.0
    %3576 = vmatprep.subr.mxu0 0.0
    %3577 = vmatpush1.msra.mxu0 0.0
    %3578 = vmatprep.subr.mxu0 0.0
    %3579 = vmatpush1.msra.mxu0 0.0
    %3580 = vmatprep.subr.mxu0 0.0
    %3581 = vmatpush1.msra.mxu0 0.0
    %3582 = vmatprep.subr.mxu0 0.0
    %3583 = vmatpush1.msra.mxu0 0.0
    %3584 = vmatprep.subr.mxu0 0.0
    %3585 = vmatpush1.msra.mxu0 0.0
    %3586 = vmatprep.subr.mxu0 0.0
    %3587 = vmatpush1.msra.mxu0 0.0
    %3588 = vmatprep.subr.mxu0 0.0
    %3589 = vmatpush1.msra.mxu0 0.0
    %3590 = vmatprep.subr.mxu0 0.0
    %3591 = vmatpush1.msra.mxu0 0.0
    %3592 = vmatprep.subr.mxu0 0.0
    %3593 = vmatpush1.msra.mxu0 0.0
    %3594 = vmatprep.subr.mxu0 0.0
    %3595 = vmatpush1.msra.mxu0 0.0
    %3596 = vmatprep.subr.mxu0 0.0
    %3597 = vmatpush1.msra.mxu0 0.0
    %3598 = vmatprep.subr.mxu0 0.0
    %3599 = vmatpush1.msra.mxu0 0.0
    %3600 = vmatprep.subr.mxu0 0.0
    %3601 = vmatpush1.msra.mxu0 0.0
    %3602 = vmatprep.subr.mxu0 0.0
    %3603 = vmatpush1.msra.mxu0 0.0
    %3604 = vmatprep.subr.mxu0 0.0
    %3605 = vmatpush1.msra.mxu0 0.0
    %3606 = vmatprep.subr.mxu0 0.0
    %3607 = vmatpush1.msra.mxu0 0.0
    %3608 = vmatprep.subr.mxu0 0.0
    %3609 = vmatpush1.msra.mxu0 0.0
    %3610 = vmatprep.subr.mxu0 0.0
    %3611 = vmatpush1.msra.mxu0 0.0
    %3612 = vmatprep.subr.mxu0 0.0
    %3613 = vmatpush1.msra.mxu0 0.0
    %3614 = vmatprep.subr.mxu0 0.0
    %3615 = vmatpush1.msra.mxu0 0.0
    %3616 = vmatprep.subr.mxu0 0.0
    %3617 = vmatpush1.msra.mxu0 0.0
    %3618 = vmatprep.subr.mxu0 0.0
    %3619 = vmatpush1.msra.mxu0 0.0
    %3620 = vmatprep.subr.mxu0 0.0
    %3621 = vmatpush1.msra.mxu0 0.0
    %3622 = vmatprep.subr.mxu0 0.0
    %3623 = vmatpush1.msra.mxu0 0.0
    %3624 = vmatprep.subr.mxu0 0.0
    %3625 = vmatpush1.msra.mxu0 0.0
    %3626 = vmatprep.subr.mxu0 0.0
    %3627 = vmatpush1.msra.mxu0 0.0
    %3628 = vmatprep.mubr.f32.mxu0 0.0
    %v3629 = vand.u32 %v3335, 4294901760
    %v3630 = vsub.f32 %v3335, %v3629
    %v3631 = vand.u32 %v3630, 4294901760
    %3632 = vmatmul.mubr.f32.gmra.mrb[0].mxu0 %v3631
    %v3633 = vpop.f32.mrb[0].mxu0
    %v3634 = vadd.f32 %v3560, %v3633
    %v3635 = vpop.f32.mrb[0].mxu0
    %3636 = vdwg.mxu0
    %3637 = vmatprep.subr.mxu0 0.0
    %v3638 = vand.u32 %v106, 4294901760
    %v3639 = vsub.f32 %v106, %v3638
    %v3640 = vand.u32 %v3639, 4294901760
    %3641 = vmatpush1.msra.mxu0 %v3640
    %3642 = vmatprep.subr.mxu0 0.0
    %3643 = vmatpush1.msra.mxu0 0.0
    %3644 = vmatprep.subr.mxu0 0.0
    %3645 = vmatpush1.msra.mxu0 0.0
    %3646 = vmatprep.subr.mxu0 0.0
    %3647 = vmatpush1.msra.mxu0 0.0
    %3648 = vmatprep.subr.mxu0 0.0
    %3649 = vmatpush1.msra.mxu0 0.0
    %3650 = vmatprep.subr.mxu0 0.0
    %3651 = vmatpush1.msra.mxu0 0.0
    %3652 = vmatprep.subr.mxu0 0.0
    %3653 = vmatpush1.msra.mxu0 0.0
    %3654 = vmatprep.subr.mxu0 0.0
    %3655 = vmatpush1.msra.mxu0 0.0
    %3656 = vmatprep.subr.mxu0 0.0
    %3657 = vmatpush1.msra.mxu0 0.0
    %3658 = vmatprep.subr.mxu0 0.0
    %3659 = vmatpush1.msra.mxu0 0.0
    %3660 = vmatprep.subr.mxu0 0.0
    %3661 = vmatpush1.msra.mxu0 0.0
    %3662 = vmatprep.subr.mxu0 0.0
    %3663 = vmatpush1.msra.mxu0 0.0
    %3664 = vmatprep.subr.mxu0 0.0
    %3665 = vmatpush1.msra.mxu0 0.0
    %3666 = vmatprep.subr.mxu0 0.0
    %3667 = vmatpush1.msra.mxu0 0.0
    %3668 = vmatprep.subr.mxu0 0.0
    %3669 = vmatpush1.msra.mxu0 0.0
    %3670 = vmatprep.subr.mxu0 0.0
    %3671 = vmatpush1.msra.mxu0 0.0
    %3672 = vmatprep.subr.mxu0 0.0
    %3673 = vmatpush1.msra.mxu0 0.0
    %3674 = vmatprep.subr.mxu0 0.0
    %3675 = vmatpush1.msra.mxu0 0.0
    %3676 = vmatprep.subr.mxu0 0.0
    %3677 = vmatpush1.msra.mxu0 0.0
    %3678 = vmatprep.subr.mxu0 0.0
    %3679 = vmatpush1.msra.mxu0 0.0
    %3680 = vmatprep.subr.mxu0 0.0
    %3681 = vmatpush1.msra.mxu0 0.0
    %3682 = vmatprep.subr.mxu0 0.0
    %3683 = vmatpush1.msra.mxu0 0.0
    %3684 = vmatprep.subr.mxu0 0.0
    %3685 = vmatpush1.msra.mxu0 0.0
    %3686 = vmatprep.subr.mxu0 0.0
    %3687 = vmatpush1.msra.mxu0 0.0
    %3688 = vmatprep.subr.mxu0 0.0
    %3689 = vmatpush1.msra.mxu0 0.0
    %3690 = vmatprep.subr.mxu0 0.0
    %3691 = vmatpush1.msra.mxu0 0.0
    %3692 = vmatprep.subr.mxu0 0.0
    %3693 = vmatpush1.msra.mxu0 0.0
    %3694 = vmatprep.subr.mxu0 0.0
    %3695 = vmatpush1.msra.mxu0 0.0
    %3696 = vmatprep.subr.mxu0 0.0
    %3697 = vmatpush1.msra.mxu0 0.0
    %3698 = vmatprep.subr.mxu0 0.0
    %3699 = vmatpush1.msra.mxu0 0.0
    %3700 = vmatprep.subr.mxu0 0.0
    %3701 = vmatpush1.msra.mxu0 0.0
    %3702 = vmatprep.subr.mxu0 0.0
    %3703 = vmatpush1.msra.mxu0 0.0
    %3704 = vmatprep.mubr.f32.mxu0 0.0
    %v3705 = vand.u32 %v3335, 4294901760
    %3706 = vmatmul.mubr.f32.gmra.mrb[0].mxu0 %v3705
    %v3707 = vpop.f32.mrb[0].mxu0
    %v3708 = vadd.f32 %v3634, %v3707
    %v3709 = vpop.f32.mrb[0].mxu0
    %3710 = vdwg.mxu0
    %3711 = vmatprep.subr.mxu0 0.0
    %v3712 = vand.u32 %v106, 4294901760
    %3713 = vmatpush1.msra.mxu0 %v3712
    %3714 = vmatprep.subr.mxu0 0.0
    %3715 = vmatpush1.msra.mxu0 0.0
    %3716 = vmatprep.subr.mxu0 0.0
    %3717 = vmatpush1.msra.mxu0 0.0
    %3718 = vmatprep.subr.mxu0 0.0
    %3719 = vmatpush1.msra.mxu0 0.0
    %3720 = vmatprep.subr.mxu0 0.0
    %3721 = vmatpush1.msra.mxu0 0.0
    %3722 = vmatprep.subr.mxu0 0.0
    %3723 = vmatpush1.msra.mxu0 0.0
    %3724 = vmatprep.subr.mxu0 0.0
    %3725 = vmatpush1.msra.mxu0 0.0
    %3726 = vmatprep.subr.mxu0 0.0
    %3727 = vmatpush1.msra.mxu0 0.0
    %3728 = vmatprep.subr.mxu0 0.0
    %3729 = vmatpush1.msra.mxu0 0.0
    %3730 = vmatprep.subr.mxu0 0.0
    %3731 = vmatpush1.msra.mxu0 0.0
    %3732 = vmatprep.subr.mxu0 0.0
    %3733 = vmatpush1.msra.mxu0 0.0
    %3734 = vmatprep.subr.mxu0 0.0
    %3735 = vmatpush1.msra.mxu0 0.0
    %3736 = vmatprep.subr.mxu0 0.0
    %3737 = vmatpush1.msra.mxu0 0.0
    %3738 = vmatprep.subr.mxu0 0.0
    %3739 = vmatpush1.msra.mxu0 0.0
    %3740 = vmatprep.subr.mxu0 0.0
    %3741 = vmatpush1.msra.mxu0 0.0
    %3742 = vmatprep.subr.mxu0 0.0
    %3743 = vmatpush1.msra.mxu0 0.0
    %3744 = vmatprep.subr.mxu0 0.0
    %3745 = vmatpush1.msra.mxu0 0.0
    %3746 = vmatprep.subr.mxu0 0.0
    %3747 = vmatpush1.msra.mxu0 0.0
    %3748 = vmatprep.subr.mxu0 0.0
    %3749 = vmatpush1.msra.mxu0 0.0
    %3750 = vmatprep.subr.mxu0 0.0
    %3751 = vmatpush1.msra.mxu0 0.0
    %3752 = vmatprep.subr.mxu0 0.0
    %3753 = vmatpush1.msra.mxu0 0.0
    %3754 = vmatprep.subr.mxu0 0.0
    %3755 = vmatpush1.msra.mxu0 0.0
    %3756 = vmatprep.subr.mxu0 0.0
    %3757 = vmatpush1.msra.mxu0 0.0
    %3758 = vmatprep.subr.mxu0 0.0
    %3759 = vmatpush1.msra.mxu0 0.0
    %3760 = vmatprep.subr.mxu0 0.0
    %3761 = vmatpush1.msra.mxu0 0.0
    %3762 = vmatprep.subr.mxu0 0.0
    %3763 = vmatpush1.msra.mxu0 0.0
    %3764 = vmatprep.subr.mxu0 0.0
    %3765 = vmatpush1.msra.mxu0 0.0
    %3766 = vmatprep.subr.mxu0 0.0
    %3767 = vmatpush1.msra.mxu0 0.0
    %3768 = vmatprep.subr.mxu0 0.0
    %3769 = vmatpush1.msra.mxu0 0.0
    %3770 = vmatprep.subr.mxu0 0.0
    %3771 = vmatpush1.msra.mxu0 0.0
    %3772 = vmatprep.subr.mxu0 0.0
    %3773 = vmatpush1.msra.mxu0 0.0
    %3774 = vmatprep.subr.mxu0 0.0
    %3775 = vmatpush1.msra.mxu0 0.0
    %3776 = vmatprep.mubr.f32.mxu0 0.0
    %v3777 = vand.u32 %v3335, 4294901760
    %3778 = vmatmul.mubr.f32.gmra.mrb[0].mxu0 %v3777
    %v3779 = vpop.f32.mrb[0].mxu0
    %v3780 = vadd.f32 %v3708, %v3779
    %v3781 = vpop.f32.mrb[0].mxu0
    %3782 = vdwg.mxu0
    %v3783 = vadd.f32 %v2692, %v3780
    %v3784 = vsel %vm89, %v3783, 0.0
    %3785 = vrot.lane.b32.xlu0 %v3784, 1
    %v3786 = vpop.permute.xlu0 %3785
    %3787 = vrot.lane.b32.xlu0 %v3784, 127
    %v3788 = vpop.permute.xlu0 %3787
    %v3789 = vmul.f32 %v113, %v3786
    %v3790 = vmul.f32 %v115, %v3784
    %v3791 = vadd.f32 %v3789, %v3790
    %v3792 = vmul.f32 %v118, %v3788
    %v3793 = vadd.f32 %v3791, %v3792
    %v3794 = vadd.f32 %v3793, %v121
    %v3795 = vmax.f32 %v3794, 0.0
    %v3796 = vmul.f32 %v124, %v3795
    %v3797 = vmul.f32 %v126, %v3795
    %v3798 = vmul.f32 %v128, %v3795
    %v3799 = vmul.f32 %v130, %v3786
    %v3800 = vmul.f32 %v132, %v3784
    %v3801 = vadd.f32 %v3799, %v3800
    %v3802 = vmul.f32 %v135, %v3788
    %v3803 = vadd.f32 %v3801, %v3802
    %v3804 = vadd.f32 %v3803, %v138
    %v3805 = vmax.f32 %v3804, 0.0
    %v3806 = vmul.f32 %v141, %v3805
    %v3807 = vadd.f32 %v3796, %v3806
    %v3808 = vmul.f32 %v144, %v3805
    %v3809 = vadd.f32 %v3797, %v3808
    %v3810 = vmul.f32 %v147, %v3805
    %v3811 = vadd.f32 %v3798, %v3810
    %v3812 = vmul.f32 %v150, %v3786
    %v3813 = vmul.f32 %v152, %v3784
    %v3814 = vadd.f32 %v3812, %v3813
    %v3815 = vmul.f32 %v155, %v3788
    %v3816 = vadd.f32 %v3814, %v3815
    %v3817 = vadd.f32 %v3816, %v158
    %v3818 = vmax.f32 %v3817, 0.0
    %v3819 = vmul.f32 %v161, %v3818
    %v3820 = vadd.f32 %v3807, %v3819
    %v3821 = vmul.f32 %v164, %v3818
    %v3822 = vadd.f32 %v3809, %v3821
    %v3823 = vmul.f32 %v167, %v3818
    %v3824 = vadd.f32 %v3811, %v3823
    %v3825 = vmul.f32 %v170, %v3786
    %v3826 = vmul.f32 %v172, %v3784
    %v3827 = vadd.f32 %v3825, %v3826
    %v3828 = vmul.f32 %v175, %v3788
    %v3829 = vadd.f32 %v3827, %v3828
    %v3830 = vadd.f32 %v3829, %v178
    %v3831 = vmax.f32 %v3830, 0.0
    %v3832 = vmul.f32 %v181, %v3831
    %v3833 = vadd.f32 %v3820, %v3832
    %v3834 = vmul.f32 %v184, %v3831
    %v3835 = vadd.f32 %v3822, %v3834
    %v3836 = vmul.f32 %v187, %v3831
    %v3837 = vadd.f32 %v3824, %v3836
    %v3838 = vmul.f32 %v190, %v3786
    %v3839 = vmul.f32 %v192, %v3784
    %v3840 = vadd.f32 %v3838, %v3839
    %v3841 = vmul.f32 %v195, %v3788
    %v3842 = vadd.f32 %v3840, %v3841
    %v3843 = vadd.f32 %v3842, %v198
    %v3844 = vmax.f32 %v3843, 0.0
    %v3845 = vmul.f32 %v201, %v3844
    %v3846 = vadd.f32 %v3833, %v3845
    %v3847 = vmul.f32 %v204, %v3844
    %v3848 = vadd.f32 %v3835, %v3847
    %v3849 = vmul.f32 %v207, %v3844
    %v3850 = vadd.f32 %v3837, %v3849
    %v3851 = vmul.f32 %v210, %v3786
    %v3852 = vmul.f32 %v212, %v3784
    %v3853 = vadd.f32 %v3851, %v3852
    %v3854 = vmul.f32 %v215, %v3788
    %v3855 = vadd.f32 %v3853, %v3854
    %v3856 = vadd.f32 %v3855, %v218
    %v3857 = vmax.f32 %v3856, 0.0
    %v3858 = vmul.f32 %v221, %v3857
    %v3859 = vadd.f32 %v3846, %v3858
    %v3860 = vmul.f32 %v224, %v3857
    %v3861 = vadd.f32 %v3848, %v3860
    %v3862 = vmul.f32 %v227, %v3857
    %v3863 = vadd.f32 %v3850, %v3862
    %v3864 = vmul.f32 %v230, %v3786
    %v3865 = vmul.f32 %v232, %v3784
    %v3866 = vadd.f32 %v3864, %v3865
    %v3867 = vmul.f32 %v235, %v3788
    %v3868 = vadd.f32 %v3866, %v3867
    %v3869 = vadd.f32 %v3868, %v238
    %v3870 = vmax.f32 %v3869, 0.0
    %v3871 = vmul.f32 %v241, %v3870
    %v3872 = vadd.f32 %v3859, %v3871
    %v3873 = vmul.f32 %v244, %v3870
    %v3874 = vadd.f32 %v3861, %v3873
    %v3875 = vmul.f32 %v247, %v3870
    %v3876 = vadd.f32 %v3863, %v3875
    %v3877 = vmul.f32 %v250, %v3786
    %v3878 = vmul.f32 %v252, %v3784
    %v3879 = vadd.f32 %v3877, %v3878
    %v3880 = vmul.f32 %v255, %v3788
    %v3881 = vadd.f32 %v3879, %v3880
    %v3882 = vadd.f32 %v3881, %v258
    %v3883 = vmax.f32 %v3882, 0.0
    %v3884 = vmul.f32 %v261, %v3883
    %v3885 = vadd.f32 %v3872, %v3884
    %v3886 = vmul.f32 %v264, %v3883
    %v3887 = vadd.f32 %v3874, %v3886
    %v3888 = vmul.f32 %v267, %v3883
    %v3889 = vadd.f32 %v3876, %v3888
    %v3890 = vsel %vm89, %v3885, 0.0
    %v3891 = vsel %vm89, %v3889, 0.0
    %3892 = vrot.lane.b32.xlu0 %v3890, 1
    %v3893 = vpop.permute.xlu0 %3892
    %v3894 = vadd.f32 %v3893, %v3887
    %3895 = vrot.lane.b32.xlu0 %v3891, 127
    %v3896 = vpop.permute.xlu0 %3895
    %v3897 = vadd.f32 %v3894, %v3896
    %v3898 = vadd.f32 %v3897, %v278
    %3899 = vmatprep.subr.mxu0 0.0
    %v3900 = vand.u32 %v90, 4294901760
    %3901 = vmatpush1.msra.mxu0 %v3900
    %3902 = vmatprep.subr.mxu0 0.0
    %v3903 = vand.u32 %v91, 4294901760
    %3904 = vmatpush1.msra.mxu0 %v3903
    %3905 = vmatprep.subr.mxu0 0.0
    %v3906 = vand.u32 %v92, 4294901760
    %3907 = vmatpush1.msra.mxu0 %v3906
    %3908 = vmatprep.subr.mxu0 0.0
    %v3909 = vand.u32 %v93, 4294901760
    %3910 = vmatpush1.msra.mxu0 %v3909
    %3911 = vmatprep.subr.mxu0 0.0
    %v3912 = vand.u32 %v94, 4294901760
    %3913 = vmatpush1.msra.mxu0 %v3912
    %3914 = vmatprep.subr.mxu0 0.0
    %v3915 = vand.u32 %v95, 4294901760
    %3916 = vmatpush1.msra.mxu0 %v3915
    %3917 = vmatprep.subr.mxu0 0.0
    %v3918 = vand.u32 %v96, 4294901760
    %3919 = vmatpush1.msra.mxu0 %v3918
    %3920 = vmatprep.subr.mxu0 0.0
    %v3921 = vand.u32 %v97, 4294901760
    %3922 = vmatpush1.msra.mxu0 %v3921
    %3923 = vmatprep.subr.mxu0 0.0
    %v3924 = vand.u32 %v98, 4294901760
    %3925 = vmatpush1.msra.mxu0 %v3924
    %3926 = vmatprep.subr.mxu0 0.0
    %v3927 = vand.u32 %v99, 4294901760
    %3928 = vmatpush1.msra.mxu0 %v3927
    %3929 = vmatprep.subr.mxu0 0.0
    %v3930 = vand.u32 %v100, 4294901760
    %3931 = vmatpush1.msra.mxu0 %v3930
    %3932 = vmatprep.subr.mxu0 0.0
    %v3933 = vand.u32 %v101, 4294901760
    %3934 = vmatpush1.msra.mxu0 %v3933
    %3935 = vmatprep.subr.mxu0 0.0
    %v3936 = vand.u32 %v102, 4294901760
    %3937 = vmatpush1.msra.mxu0 %v3936
    %3938 = vmatprep.subr.mxu0 0.0
    %v3939 = vand.u32 %v103, 4294901760
    %3940 = vmatpush1.msra.mxu0 %v3939
    %3941 = vmatprep.subr.mxu0 0.0
    %v3942 = vand.u32 %v104, 4294901760
    %3943 = vmatpush1.msra.mxu0 %v3942
    %3944 = vmatprep.subr.mxu0 0.0
    %v3945 = vand.u32 %v105, 4294901760
    %3946 = vmatpush1.msra.mxu0 %v3945
    %3947 = vmatprep.subr.mxu0 0.0
    %3948 = vmatpush1.msra.mxu0 0.0
    %3949 = vmatprep.subr.mxu0 0.0
    %3950 = vmatpush1.msra.mxu0 0.0
    %3951 = vmatprep.subr.mxu0 0.0
    %3952 = vmatpush1.msra.mxu0 0.0
    %3953 = vmatprep.subr.mxu0 0.0
    %3954 = vmatpush1.msra.mxu0 0.0
    %3955 = vmatprep.subr.mxu0 0.0
    %3956 = vmatpush1.msra.mxu0 0.0
    %3957 = vmatprep.subr.mxu0 0.0
    %3958 = vmatpush1.msra.mxu0 0.0
    %3959 = vmatprep.subr.mxu0 0.0
    %3960 = vmatpush1.msra.mxu0 0.0
    %3961 = vmatprep.subr.mxu0 0.0
    %3962 = vmatpush1.msra.mxu0 0.0
    %3963 = vmatprep.subr.mxu0 0.0
    %3964 = vmatpush1.msra.mxu0 0.0
    %3965 = vmatprep.subr.mxu0 0.0
    %3966 = vmatpush1.msra.mxu0 0.0
    %3967 = vmatprep.subr.mxu0 0.0
    %3968 = vmatpush1.msra.mxu0 0.0
    %3969 = vmatprep.subr.mxu0 0.0
    %3970 = vmatpush1.msra.mxu0 0.0
    %3971 = vmatprep.subr.mxu0 0.0
    %3972 = vmatpush1.msra.mxu0 0.0
    %3973 = vmatprep.subr.mxu0 0.0
    %3974 = vmatpush1.msra.mxu0 0.0
    %3975 = vmatprep.subr.mxu0 0.0
    %3976 = vmatpush1.msra.mxu0 0.0
    %3977 = vmatprep.subr.mxu0 0.0
    %3978 = vmatpush1.msra.mxu0 0.0
    %3979 = vmatprep.mubr.f32.mxu0 0.0
    %v3980 = vand.u32 %v3784, 4294901760
    %v3981 = vsub.f32 %v3784, %v3980
    %v3982 = vand.u32 %v3981, 4294901760
    %v3983 = vsub.f32 %v3981, %v3982
    %v3984 = vand.u32 %v3983, 4294901760
    %3985 = vmatmul.mubr.f32.gmra.mrb[0].mxu0 %v3984
    %v3986 = vpop.f32.mrb[0].mxu0
    %v3987 = vadd.f32 0.0, %v3986
    %v3988 = vpop.f32.mrb[0].mxu0
    %3989 = vdwg.mxu0
    %3990 = vmatprep.subr.mxu0 0.0
    %v3991 = vand.u32 %v90, 4294901760
    %v3992 = vsub.f32 %v90, %v3991
    %v3993 = vand.u32 %v3992, 4294901760
    %v3994 = vsub.f32 %v3992, %v3993
    %v3995 = vand.u32 %v3994, 4294901760
    %3996 = vmatpush1.msra.mxu0 %v3995
    %3997 = vmatprep.subr.mxu0 0.0
    %v3998 = vand.u32 %v91, 4294901760
    %v3999 = vsub.f32 %v91, %v3998
    %v4000 = vand.u32 %v3999, 4294901760
    %v4001 = vsub.f32 %v3999, %v4000
    %v4002 = vand.u32 %v4001, 4294901760
    %4003 = vmatpush1.msra.mxu0 %v4002
    %4004 = vmatprep.subr.mxu0 0.0
    %v4005 = vand.u32 %v92, 4294901760
    %v4006 = vsub.f32 %v92, %v4005
    %v4007 = vand.u32 %v4006, 4294901760
    %v4008 = vsub.f32 %v4006, %v4007
    %v4009 = vand.u32 %v4008, 4294901760
    %4010 = vmatpush1.msra.mxu0 %v4009
    %4011 = vmatprep.subr.mxu0 0.0
    %v4012 = vand.u32 %v93, 4294901760
    %v4013 = vsub.f32 %v93, %v4012
    %v4014 = vand.u32 %v4013, 4294901760
    %v4015 = vsub.f32 %v4013, %v4014
    %v4016 = vand.u32 %v4015, 4294901760
    %4017 = vmatpush1.msra.mxu0 %v4016
    %4018 = vmatprep.subr.mxu0 0.0
    %v4019 = vand.u32 %v94, 4294901760
    %v4020 = vsub.f32 %v94, %v4019
    %v4021 = vand.u32 %v4020, 4294901760
    %v4022 = vsub.f32 %v4020, %v4021
    %v4023 = vand.u32 %v4022, 4294901760
    %4024 = vmatpush1.msra.mxu0 %v4023
    %4025 = vmatprep.subr.mxu0 0.0
    %v4026 = vand.u32 %v95, 4294901760
    %v4027 = vsub.f32 %v95, %v4026
    %v4028 = vand.u32 %v4027, 4294901760
    %v4029 = vsub.f32 %v4027, %v4028
    %v4030 = vand.u32 %v4029, 4294901760
    %4031 = vmatpush1.msra.mxu0 %v4030
    %4032 = vmatprep.subr.mxu0 0.0
    %v4033 = vand.u32 %v96, 4294901760
    %v4034 = vsub.f32 %v96, %v4033
    %v4035 = vand.u32 %v4034, 4294901760
    %v4036 = vsub.f32 %v4034, %v4035
    %v4037 = vand.u32 %v4036, 4294901760
    %4038 = vmatpush1.msra.mxu0 %v4037
    %4039 = vmatprep.subr.mxu0 0.0
    %v4040 = vand.u32 %v97, 4294901760
    %v4041 = vsub.f32 %v97, %v4040
    %v4042 = vand.u32 %v4041, 4294901760
    %v4043 = vsub.f32 %v4041, %v4042
    %v4044 = vand.u32 %v4043, 4294901760
    %4045 = vmatpush1.msra.mxu0 %v4044
    %4046 = vmatprep.subr.mxu0 0.0
    %v4047 = vand.u32 %v98, 4294901760
    %v4048 = vsub.f32 %v98, %v4047
    %v4049 = vand.u32 %v4048, 4294901760
    %v4050 = vsub.f32 %v4048, %v4049
    %v4051 = vand.u32 %v4050, 4294901760
    %4052 = vmatpush1.msra.mxu0 %v4051
    %4053 = vmatprep.subr.mxu0 0.0
    %v4054 = vand.u32 %v99, 4294901760
    %v4055 = vsub.f32 %v99, %v4054
    %v4056 = vand.u32 %v4055, 4294901760
    %v4057 = vsub.f32 %v4055, %v4056
    %v4058 = vand.u32 %v4057, 4294901760
    %4059 = vmatpush1.msra.mxu0 %v4058
    %4060 = vmatprep.subr.mxu0 0.0
    %v4061 = vand.u32 %v100, 4294901760
    %v4062 = vsub.f32 %v100, %v4061
    %v4063 = vand.u32 %v4062, 4294901760
    %v4064 = vsub.f32 %v4062, %v4063
    %v4065 = vand.u32 %v4064, 4294901760
    %4066 = vmatpush1.msra.mxu0 %v4065
    %4067 = vmatprep.subr.mxu0 0.0
    %v4068 = vand.u32 %v101, 4294901760
    %v4069 = vsub.f32 %v101, %v4068
    %v4070 = vand.u32 %v4069, 4294901760
    %v4071 = vsub.f32 %v4069, %v4070
    %v4072 = vand.u32 %v4071, 4294901760
    %4073 = vmatpush1.msra.mxu0 %v4072
    %4074 = vmatprep.subr.mxu0 0.0
    %v4075 = vand.u32 %v102, 4294901760
    %v4076 = vsub.f32 %v102, %v4075
    %v4077 = vand.u32 %v4076, 4294901760
    %v4078 = vsub.f32 %v4076, %v4077
    %v4079 = vand.u32 %v4078, 4294901760
    %4080 = vmatpush1.msra.mxu0 %v4079
    %4081 = vmatprep.subr.mxu0 0.0
    %v4082 = vand.u32 %v103, 4294901760
    %v4083 = vsub.f32 %v103, %v4082
    %v4084 = vand.u32 %v4083, 4294901760
    %v4085 = vsub.f32 %v4083, %v4084
    %v4086 = vand.u32 %v4085, 4294901760
    %4087 = vmatpush1.msra.mxu0 %v4086
    %4088 = vmatprep.subr.mxu0 0.0
    %v4089 = vand.u32 %v104, 4294901760
    %v4090 = vsub.f32 %v104, %v4089
    %v4091 = vand.u32 %v4090, 4294901760
    %v4092 = vsub.f32 %v4090, %v4091
    %v4093 = vand.u32 %v4092, 4294901760
    %4094 = vmatpush1.msra.mxu0 %v4093
    %4095 = vmatprep.subr.mxu0 0.0
    %v4096 = vand.u32 %v105, 4294901760
    %v4097 = vsub.f32 %v105, %v4096
    %v4098 = vand.u32 %v4097, 4294901760
    %v4099 = vsub.f32 %v4097, %v4098
    %v4100 = vand.u32 %v4099, 4294901760
    %4101 = vmatpush1.msra.mxu0 %v4100
    %4102 = vmatprep.subr.mxu0 0.0
    %4103 = vmatpush1.msra.mxu0 0.0
    %4104 = vmatprep.subr.mxu0 0.0
    %4105 = vmatpush1.msra.mxu0 0.0
    %4106 = vmatprep.subr.mxu0 0.0
    %4107 = vmatpush1.msra.mxu0 0.0
    %4108 = vmatprep.subr.mxu0 0.0
    %4109 = vmatpush1.msra.mxu0 0.0
    %4110 = vmatprep.subr.mxu0 0.0
    %4111 = vmatpush1.msra.mxu0 0.0
    %4112 = vmatprep.subr.mxu0 0.0
    %4113 = vmatpush1.msra.mxu0 0.0
    %4114 = vmatprep.subr.mxu0 0.0
    %4115 = vmatpush1.msra.mxu0 0.0
    %4116 = vmatprep.subr.mxu0 0.0
    %4117 = vmatpush1.msra.mxu0 0.0
    %4118 = vmatprep.subr.mxu0 0.0
    %4119 = vmatpush1.msra.mxu0 0.0
    %4120 = vmatprep.subr.mxu0 0.0
    %4121 = vmatpush1.msra.mxu0 0.0
    %4122 = vmatprep.subr.mxu0 0.0
    %4123 = vmatpush1.msra.mxu0 0.0
    %4124 = vmatprep.subr.mxu0 0.0
    %4125 = vmatpush1.msra.mxu0 0.0
    %4126 = vmatprep.subr.mxu0 0.0
    %4127 = vmatpush1.msra.mxu0 0.0
    %4128 = vmatprep.subr.mxu0 0.0
    %4129 = vmatpush1.msra.mxu0 0.0
    %4130 = vmatprep.subr.mxu0 0.0
    %4131 = vmatpush1.msra.mxu0 0.0
    %4132 = vmatprep.subr.mxu0 0.0
    %4133 = vmatpush1.msra.mxu0 0.0
    %4134 = vmatprep.mubr.f32.mxu0 0.0
    %v4135 = vand.u32 %v3784, 4294901760
    %4136 = vmatmul.mubr.f32.gmra.mrb[0].mxu0 %v4135
    %v4137 = vpop.f32.mrb[0].mxu0
    %v4138 = vadd.f32 %v3987, %v4137
    %v4139 = vpop.f32.mrb[0].mxu0
    %4140 = vdwg.mxu0
    %4141 = vmatprep.subr.mxu0 0.0
    %v4142 = vand.u32 %v90, 4294901760
    %v4143 = vsub.f32 %v90, %v4142
    %4144 = vmatpush1.msra.mxu0 %v4143
    %4145 = vmatprep.subr.mxu0 0.0
    %v4146 = vand.u32 %v91, 4294901760
    %v4147 = vsub.f32 %v91, %v4146
    %4148 = vmatpush1.msra.mxu0 %v4147
    %4149 = vmatprep.subr.mxu0 0.0
    %v4150 = vand.u32 %v92, 4294901760
    %v4151 = vsub.f32 %v92, %v4150
    %4152 = vmatpush1.msra.mxu0 %v4151
    %4153 = vmatprep.subr.mxu0 0.0
    %v4154 = vand.u32 %v93, 4294901760
    %v4155 = vsub.f32 %v93, %v4154
    %4156 = vmatpush1.msra.mxu0 %v4155
    %4157 = vmatprep.subr.mxu0 0.0
    %v4158 = vand.u32 %v94, 4294901760
    %v4159 = vsub.f32 %v94, %v4158
    %4160 = vmatpush1.msra.mxu0 %v4159
    %4161 = vmatprep.subr.mxu0 0.0
    %v4162 = vand.u32 %v95, 4294901760
    %v4163 = vsub.f32 %v95, %v4162
    %4164 = vmatpush1.msra.mxu0 %v4163
    %4165 = vmatprep.subr.mxu0 0.0
    %v4166 = vand.u32 %v96, 4294901760
    %v4167 = vsub.f32 %v96, %v4166
    %4168 = vmatpush1.msra.mxu0 %v4167
    %4169 = vmatprep.subr.mxu0 0.0
    %v4170 = vand.u32 %v97, 4294901760
    %v4171 = vsub.f32 %v97, %v4170
    %4172 = vmatpush1.msra.mxu0 %v4171
    %4173 = vmatprep.subr.mxu0 0.0
    %v4174 = vand.u32 %v98, 4294901760
    %v4175 = vsub.f32 %v98, %v4174
    %4176 = vmatpush1.msra.mxu0 %v4175
    %4177 = vmatprep.subr.mxu0 0.0
    %v4178 = vand.u32 %v99, 4294901760
    %v4179 = vsub.f32 %v99, %v4178
    %4180 = vmatpush1.msra.mxu0 %v4179
    %4181 = vmatprep.subr.mxu0 0.0
    %v4182 = vand.u32 %v100, 4294901760
    %v4183 = vsub.f32 %v100, %v4182
    %4184 = vmatpush1.msra.mxu0 %v4183
    %4185 = vmatprep.subr.mxu0 0.0
    %v4186 = vand.u32 %v101, 4294901760
    %v4187 = vsub.f32 %v101, %v4186
    %4188 = vmatpush1.msra.mxu0 %v4187
    %4189 = vmatprep.subr.mxu0 0.0
    %v4190 = vand.u32 %v102, 4294901760
    %v4191 = vsub.f32 %v102, %v4190
    %4192 = vmatpush1.msra.mxu0 %v4191
    %4193 = vmatprep.subr.mxu0 0.0
    %v4194 = vand.u32 %v103, 4294901760
    %v4195 = vsub.f32 %v103, %v4194
    %4196 = vmatpush1.msra.mxu0 %v4195
    %4197 = vmatprep.subr.mxu0 0.0
    %v4198 = vand.u32 %v104, 4294901760
    %v4199 = vsub.f32 %v104, %v4198
    %4200 = vmatpush1.msra.mxu0 %v4199
    %4201 = vmatprep.subr.mxu0 0.0
    %v4202 = vand.u32 %v105, 4294901760
    %v4203 = vsub.f32 %v105, %v4202
    %4204 = vmatpush1.msra.mxu0 %v4203
    %4205 = vmatprep.subr.mxu0 0.0
    %4206 = vmatpush1.msra.mxu0 0.0
    %4207 = vmatprep.subr.mxu0 0.0
    %4208 = vmatpush1.msra.mxu0 0.0
    %4209 = vmatprep.subr.mxu0 0.0
    %4210 = vmatpush1.msra.mxu0 0.0
    %4211 = vmatprep.subr.mxu0 0.0
    %4212 = vmatpush1.msra.mxu0 0.0
    %4213 = vmatprep.subr.mxu0 0.0
    %4214 = vmatpush1.msra.mxu0 0.0
    %4215 = vmatprep.subr.mxu0 0.0
    %4216 = vmatpush1.msra.mxu0 0.0
    %4217 = vmatprep.subr.mxu0 0.0
    %4218 = vmatpush1.msra.mxu0 0.0
    %4219 = vmatprep.subr.mxu0 0.0
    %4220 = vmatpush1.msra.mxu0 0.0
    %4221 = vmatprep.subr.mxu0 0.0
    %4222 = vmatpush1.msra.mxu0 0.0
    %4223 = vmatprep.subr.mxu0 0.0
    %4224 = vmatpush1.msra.mxu0 0.0
    %4225 = vmatprep.subr.mxu0 0.0
    %4226 = vmatpush1.msra.mxu0 0.0
    %4227 = vmatprep.subr.mxu0 0.0
    %4228 = vmatpush1.msra.mxu0 0.0
    %4229 = vmatprep.subr.mxu0 0.0
    %4230 = vmatpush1.msra.mxu0 0.0
    %4231 = vmatprep.subr.mxu0 0.0
    %4232 = vmatpush1.msra.mxu0 0.0
    %4233 = vmatprep.subr.mxu0 0.0
    %4234 = vmatpush1.msra.mxu0 0.0
    %4235 = vmatprep.subr.mxu0 0.0
    %4236 = vmatpush1.msra.mxu0 0.0
    %4237 = vmatprep.mubr.f32.mxu0 0.0
    %v4238 = vand.u32 %v3784, 4294901760
    %v4239 = vsub.f32 %v3784, %v4238
    %4240 = vmatmul.mubr.f32.gmra.mrb[0].mxu0 %v4239
    %v4241 = vpop.f32.mrb[0].mxu0
    %v4242 = vadd.f32 %v4138, %v4241
    %v4243 = vpop.f32.mrb[0].mxu0
    %4244 = vdwg.mxu0
    %4245 = vmatprep.subr.mxu0 0.0
    %v4246 = vand.u32 %v90, 4294901760
    %4247 = vmatpush1.msra.mxu0 %v4246
    %4248 = vmatprep.subr.mxu0 0.0
    %v4249 = vand.u32 %v91, 4294901760
    %4250 = vmatpush1.msra.mxu0 %v4249
    %4251 = vmatprep.subr.mxu0 0.0
    %v4252 = vand.u32 %v92, 4294901760
    %4253 = vmatpush1.msra.mxu0 %v4252
    %4254 = vmatprep.subr.mxu0 0.0
    %v4255 = vand.u32 %v93, 4294901760
    %4256 = vmatpush1.msra.mxu0 %v4255
    %4257 = vmatprep.subr.mxu0 0.0
    %v4258 = vand.u32 %v94, 4294901760
    %4259 = vmatpush1.msra.mxu0 %v4258
    %4260 = vmatprep.subr.mxu0 0.0
    %v4261 = vand.u32 %v95, 4294901760
    %4262 = vmatpush1.msra.mxu0 %v4261
    %4263 = vmatprep.subr.mxu0 0.0
    %v4264 = vand.u32 %v96, 4294901760
    %4265 = vmatpush1.msra.mxu0 %v4264
    %4266 = vmatprep.subr.mxu0 0.0
    %v4267 = vand.u32 %v97, 4294901760
    %4268 = vmatpush1.msra.mxu0 %v4267
    %4269 = vmatprep.subr.mxu0 0.0
    %v4270 = vand.u32 %v98, 4294901760
    %4271 = vmatpush1.msra.mxu0 %v4270
    %4272 = vmatprep.subr.mxu0 0.0
    %v4273 = vand.u32 %v99, 4294901760
    %4274 = vmatpush1.msra.mxu0 %v4273
    %4275 = vmatprep.subr.mxu0 0.0
    %v4276 = vand.u32 %v100, 4294901760
    %4277 = vmatpush1.msra.mxu0 %v4276
    %4278 = vmatprep.subr.mxu0 0.0
    %v4279 = vand.u32 %v101, 4294901760
    %4280 = vmatpush1.msra.mxu0 %v4279
    %4281 = vmatprep.subr.mxu0 0.0
    %v4282 = vand.u32 %v102, 4294901760
    %4283 = vmatpush1.msra.mxu0 %v4282
    %4284 = vmatprep.subr.mxu0 0.0
    %v4285 = vand.u32 %v103, 4294901760
    %4286 = vmatpush1.msra.mxu0 %v4285
    %4287 = vmatprep.subr.mxu0 0.0
    %v4288 = vand.u32 %v104, 4294901760
    %4289 = vmatpush1.msra.mxu0 %v4288
    %4290 = vmatprep.subr.mxu0 0.0
    %v4291 = vand.u32 %v105, 4294901760
    %4292 = vmatpush1.msra.mxu0 %v4291
    %4293 = vmatprep.subr.mxu0 0.0
    %4294 = vmatpush1.msra.mxu0 0.0
    %4295 = vmatprep.subr.mxu0 0.0
    %4296 = vmatpush1.msra.mxu0 0.0
    %4297 = vmatprep.subr.mxu0 0.0
    %4298 = vmatpush1.msra.mxu0 0.0
    %4299 = vmatprep.subr.mxu0 0.0
    %4300 = vmatpush1.msra.mxu0 0.0
    %4301 = vmatprep.subr.mxu0 0.0
    %4302 = vmatpush1.msra.mxu0 0.0
    %4303 = vmatprep.subr.mxu0 0.0
    %4304 = vmatpush1.msra.mxu0 0.0
    %4305 = vmatprep.subr.mxu0 0.0
    %4306 = vmatpush1.msra.mxu0 0.0
    %4307 = vmatprep.subr.mxu0 0.0
    %4308 = vmatpush1.msra.mxu0 0.0
    %4309 = vmatprep.subr.mxu0 0.0
    %4310 = vmatpush1.msra.mxu0 0.0
    %4311 = vmatprep.subr.mxu0 0.0
    %4312 = vmatpush1.msra.mxu0 0.0
    %4313 = vmatprep.subr.mxu0 0.0
    %4314 = vmatpush1.msra.mxu0 0.0
    %4315 = vmatprep.subr.mxu0 0.0
    %4316 = vmatpush1.msra.mxu0 0.0
    %4317 = vmatprep.subr.mxu0 0.0
    %4318 = vmatpush1.msra.mxu0 0.0
    %4319 = vmatprep.subr.mxu0 0.0
    %4320 = vmatpush1.msra.mxu0 0.0
    %4321 = vmatprep.subr.mxu0 0.0
    %4322 = vmatpush1.msra.mxu0 0.0
    %4323 = vmatprep.subr.mxu0 0.0
    %4324 = vmatpush1.msra.mxu0 0.0
    %4325 = vmatprep.mubr.f32.mxu0 0.0
    %v4326 = vand.u32 %v3784, 4294901760
    %v4327 = vsub.f32 %v3784, %v4326
    %v4328 = vand.u32 %v4327, 4294901760
    %4329 = vmatmul.mubr.f32.gmra.mrb[0].mxu0 %v4328
    %v4330 = vpop.f32.mrb[0].mxu0
    %v4331 = vadd.f32 %v4242, %v4330
    %v4332 = vpop.f32.mrb[0].mxu0
    %4333 = vdwg.mxu0
    %4334 = vmatprep.subr.mxu0 0.0
    %v4335 = vand.u32 %v90, 4294901760
    %v4336 = vsub.f32 %v90, %v4335
    %v4337 = vand.u32 %v4336, 4294901760
    %4338 = vmatpush1.msra.mxu0 %v4337
    %4339 = vmatprep.subr.mxu0 0.0
    %v4340 = vand.u32 %v91, 4294901760
    %v4341 = vsub.f32 %v91, %v4340
    %v4342 = vand.u32 %v4341, 4294901760
    %4343 = vmatpush1.msra.mxu0 %v4342
    %4344 = vmatprep.subr.mxu0 0.0
    %v4345 = vand.u32 %v92, 4294901760
    %v4346 = vsub.f32 %v92, %v4345
    %v4347 = vand.u32 %v4346, 4294901760
    %4348 = vmatpush1.msra.mxu0 %v4347
    %4349 = vmatprep.subr.mxu0 0.0
    %v4350 = vand.u32 %v93, 4294901760
    %v4351 = vsub.f32 %v93, %v4350
    %v4352 = vand.u32 %v4351, 4294901760
    %4353 = vmatpush1.msra.mxu0 %v4352
    %4354 = vmatprep.subr.mxu0 0.0
    %v4355 = vand.u32 %v94, 4294901760
    %v4356 = vsub.f32 %v94, %v4355
    %v4357 = vand.u32 %v4356, 4294901760
    %4358 = vmatpush1.msra.mxu0 %v4357
    %4359 = vmatprep.subr.mxu0 0.0
    %v4360 = vand.u32 %v95, 4294901760
    %v4361 = vsub.f32 %v95, %v4360
    %v4362 = vand.u32 %v4361, 4294901760
    %4363 = vmatpush1.msra.mxu0 %v4362
    %4364 = vmatprep.subr.mxu0 0.0
    %v4365 = vand.u32 %v96, 4294901760
    %v4366 = vsub.f32 %v96, %v4365
    %v4367 = vand.u32 %v4366, 4294901760
    %4368 = vmatpush1.msra.mxu0 %v4367
    %4369 = vmatprep.subr.mxu0 0.0
    %v4370 = vand.u32 %v97, 4294901760
    %v4371 = vsub.f32 %v97, %v4370
    %v4372 = vand.u32 %v4371, 4294901760
    %4373 = vmatpush1.msra.mxu0 %v4372
    %4374 = vmatprep.subr.mxu0 0.0
    %v4375 = vand.u32 %v98, 4294901760
    %v4376 = vsub.f32 %v98, %v4375
    %v4377 = vand.u32 %v4376, 4294901760
    %4378 = vmatpush1.msra.mxu0 %v4377
    %4379 = vmatprep.subr.mxu0 0.0
    %v4380 = vand.u32 %v99, 4294901760
    %v4381 = vsub.f32 %v99, %v4380
    %v4382 = vand.u32 %v4381, 4294901760
    %4383 = vmatpush1.msra.mxu0 %v4382
    %4384 = vmatprep.subr.mxu0 0.0
    %v4385 = vand.u32 %v100, 4294901760
    %v4386 = vsub.f32 %v100, %v4385
    %v4387 = vand.u32 %v4386, 4294901760
    %4388 = vmatpush1.msra.mxu0 %v4387
    %4389 = vmatprep.subr.mxu0 0.0
    %v4390 = vand.u32 %v101, 4294901760
    %v4391 = vsub.f32 %v101, %v4390
    %v4392 = vand.u32 %v4391, 4294901760
    %4393 = vmatpush1.msra.mxu0 %v4392
    %4394 = vmatprep.subr.mxu0 0.0
    %v4395 = vand.u32 %v102, 4294901760
    %v4396 = vsub.f32 %v102, %v4395
    %v4397 = vand.u32 %v4396, 4294901760
    %4398 = vmatpush1.msra.mxu0 %v4397
    %4399 = vmatprep.subr.mxu0 0.0
    %v4400 = vand.u32 %v103, 4294901760
    %v4401 = vsub.f32 %v103, %v4400
    %v4402 = vand.u32 %v4401, 4294901760
    %4403 = vmatpush1.msra.mxu0 %v4402
    %4404 = vmatprep.subr.mxu0 0.0
    %v4405 = vand.u32 %v104, 4294901760
    %v4406 = vsub.f32 %v104, %v4405
    %v4407 = vand.u32 %v4406, 4294901760
    %4408 = vmatpush1.msra.mxu0 %v4407
    %4409 = vmatprep.subr.mxu0 0.0
    %v4410 = vand.u32 %v105, 4294901760
    %v4411 = vsub.f32 %v105, %v4410
    %v4412 = vand.u32 %v4411, 4294901760
    %4413 = vmatpush1.msra.mxu0 %v4412
    %4414 = vmatprep.subr.mxu0 0.0
    %4415 = vmatpush1.msra.mxu0 0.0
    %4416 = vmatprep.subr.mxu0 0.0
    %4417 = vmatpush1.msra.mxu0 0.0
    %4418 = vmatprep.subr.mxu0 0.0
    %4419 = vmatpush1.msra.mxu0 0.0
    %4420 = vmatprep.subr.mxu0 0.0
    %4421 = vmatpush1.msra.mxu0 0.0
    %4422 = vmatprep.subr.mxu0 0.0
    %4423 = vmatpush1.msra.mxu0 0.0
    %4424 = vmatprep.subr.mxu0 0.0
    %4425 = vmatpush1.msra.mxu0 0.0
    %4426 = vmatprep.subr.mxu0 0.0
    %4427 = vmatpush1.msra.mxu0 0.0
    %4428 = vmatprep.subr.mxu0 0.0
    %4429 = vmatpush1.msra.mxu0 0.0
    %4430 = vmatprep.subr.mxu0 0.0
    %4431 = vmatpush1.msra.mxu0 0.0
    %4432 = vmatprep.subr.mxu0 0.0
    %4433 = vmatpush1.msra.mxu0 0.0
    %4434 = vmatprep.subr.mxu0 0.0
    %4435 = vmatpush1.msra.mxu0 0.0
    %4436 = vmatprep.subr.mxu0 0.0
    %4437 = vmatpush1.msra.mxu0 0.0
    %4438 = vmatprep.subr.mxu0 0.0
    %4439 = vmatpush1.msra.mxu0 0.0
    %4440 = vmatprep.subr.mxu0 0.0
    %4441 = vmatpush1.msra.mxu0 0.0
    %4442 = vmatprep.subr.mxu0 0.0
    %4443 = vmatpush1.msra.mxu0 0.0
    %4444 = vmatprep.subr.mxu0 0.0
    %4445 = vmatpush1.msra.mxu0 0.0
    %4446 = vmatprep.mubr.f32.mxu0 0.0
    %v4447 = vand.u32 %v3784, 4294901760
    %4448 = vmatmul.mubr.f32.gmra.mrb[0].mxu0 %v4447
    %v4449 = vpop.f32.mrb[0].mxu0
    %v4450 = vadd.f32 %v4331, %v4449
    %v4451 = vpop.f32.mrb[0].mxu0
    %4452 = vdwg.mxu0
    %4453 = vmatprep.subr.mxu0 0.0
    %v4454 = vand.u32 %v90, 4294901760
    %4455 = vmatpush1.msra.mxu0 %v4454
    %4456 = vmatprep.subr.mxu0 0.0
    %v4457 = vand.u32 %v91, 4294901760
    %4458 = vmatpush1.msra.mxu0 %v4457
    %4459 = vmatprep.subr.mxu0 0.0
    %v4460 = vand.u32 %v92, 4294901760
    %4461 = vmatpush1.msra.mxu0 %v4460
    %4462 = vmatprep.subr.mxu0 0.0
    %v4463 = vand.u32 %v93, 4294901760
    %4464 = vmatpush1.msra.mxu0 %v4463
    %4465 = vmatprep.subr.mxu0 0.0
    %v4466 = vand.u32 %v94, 4294901760
    %4467 = vmatpush1.msra.mxu0 %v4466
    %4468 = vmatprep.subr.mxu0 0.0
    %v4469 = vand.u32 %v95, 4294901760
    %4470 = vmatpush1.msra.mxu0 %v4469
    %4471 = vmatprep.subr.mxu0 0.0
    %v4472 = vand.u32 %v96, 4294901760
    %4473 = vmatpush1.msra.mxu0 %v4472
    %4474 = vmatprep.subr.mxu0 0.0
    %v4475 = vand.u32 %v97, 4294901760
    %4476 = vmatpush1.msra.mxu0 %v4475
    %4477 = vmatprep.subr.mxu0 0.0
    %v4478 = vand.u32 %v98, 4294901760
    %4479 = vmatpush1.msra.mxu0 %v4478
    %4480 = vmatprep.subr.mxu0 0.0
    %v4481 = vand.u32 %v99, 4294901760
    %4482 = vmatpush1.msra.mxu0 %v4481
    %4483 = vmatprep.subr.mxu0 0.0
    %v4484 = vand.u32 %v100, 4294901760
    %4485 = vmatpush1.msra.mxu0 %v4484
    %4486 = vmatprep.subr.mxu0 0.0
    %v4487 = vand.u32 %v101, 4294901760
    %4488 = vmatpush1.msra.mxu0 %v4487
    %4489 = vmatprep.subr.mxu0 0.0
    %v4490 = vand.u32 %v102, 4294901760
    %4491 = vmatpush1.msra.mxu0 %v4490
    %4492 = vmatprep.subr.mxu0 0.0
    %v4493 = vand.u32 %v103, 4294901760
    %4494 = vmatpush1.msra.mxu0 %v4493
    %4495 = vmatprep.subr.mxu0 0.0
    %v4496 = vand.u32 %v104, 4294901760
    %4497 = vmatpush1.msra.mxu0 %v4496
    %4498 = vmatprep.subr.mxu0 0.0
    %v4499 = vand.u32 %v105, 4294901760
    %4500 = vmatpush1.msra.mxu0 %v4499
    %4501 = vmatprep.subr.mxu0 0.0
    %4502 = vmatpush1.msra.mxu0 0.0
    %4503 = vmatprep.subr.mxu0 0.0
    %4504 = vmatpush1.msra.mxu0 0.0
    %4505 = vmatprep.subr.mxu0 0.0
    %4506 = vmatpush1.msra.mxu0 0.0
    %4507 = vmatprep.subr.mxu0 0.0
    %4508 = vmatpush1.msra.mxu0 0.0
    %4509 = vmatprep.subr.mxu0 0.0
    %4510 = vmatpush1.msra.mxu0 0.0
    %4511 = vmatprep.subr.mxu0 0.0
    %4512 = vmatpush1.msra.mxu0 0.0
    %4513 = vmatprep.subr.mxu0 0.0
    %4514 = vmatpush1.msra.mxu0 0.0
    %4515 = vmatprep.subr.mxu0 0.0
    %4516 = vmatpush1.msra.mxu0 0.0
    %4517 = vmatprep.subr.mxu0 0.0
    %4518 = vmatpush1.msra.mxu0 0.0
    %4519 = vmatprep.subr.mxu0 0.0
    %4520 = vmatpush1.msra.mxu0 0.0
    %4521 = vmatprep.subr.mxu0 0.0
    %4522 = vmatpush1.msra.mxu0 0.0
    %4523 = vmatprep.subr.mxu0 0.0
    %4524 = vmatpush1.msra.mxu0 0.0
    %4525 = vmatprep.subr.mxu0 0.0
    %4526 = vmatpush1.msra.mxu0 0.0
    %4527 = vmatprep.subr.mxu0 0.0
    %4528 = vmatpush1.msra.mxu0 0.0
    %4529 = vmatprep.subr.mxu0 0.0
    %4530 = vmatpush1.msra.mxu0 0.0
    %4531 = vmatprep.subr.mxu0 0.0
    %4532 = vmatpush1.msra.mxu0 0.0
    %4533 = vmatprep.mubr.f32.mxu0 0.0
    %v4534 = vand.u32 %v3784, 4294901760
    %4535 = vmatmul.mubr.f32.gmra.mrb[0].mxu0 %v4534
    %v4536 = vpop.f32.mrb[0].mxu0
    %v4537 = vadd.f32 %v4450, %v4536
    %v4538 = vpop.f32.mrb[0].mxu0
    %4539 = vdwg.mxu0
    %v4541 = vsel %vm921, %v4537, 0
    %4543 = vmatprep.subr.mxu0 0.0
    %v4544 = vand.u32 %v106, 4294901760
    %4545 = vmatpush1.msra.mxu0 %v4544
    %4546 = vmatprep.subr.mxu0 0.0
    %4547 = vmatpush1.msra.mxu0 0.0
    %4548 = vmatprep.subr.mxu0 0.0
    %4549 = vmatpush1.msra.mxu0 0.0
    %4550 = vmatprep.subr.mxu0 0.0
    %4551 = vmatpush1.msra.mxu0 0.0
    %4552 = vmatprep.subr.mxu0 0.0
    %4553 = vmatpush1.msra.mxu0 0.0
    %4554 = vmatprep.subr.mxu0 0.0
    %4555 = vmatpush1.msra.mxu0 0.0
    %4556 = vmatprep.subr.mxu0 0.0
    %4557 = vmatpush1.msra.mxu0 0.0
    %4558 = vmatprep.subr.mxu0 0.0
    %4559 = vmatpush1.msra.mxu0 0.0
    %4560 = vmatprep.subr.mxu0 0.0
    %4561 = vmatpush1.msra.mxu0 0.0
    %4562 = vmatprep.subr.mxu0 0.0
    %4563 = vmatpush1.msra.mxu0 0.0
    %4564 = vmatprep.subr.mxu0 0.0
    %4565 = vmatpush1.msra.mxu0 0.0
    %4566 = vmatprep.subr.mxu0 0.0
    %4567 = vmatpush1.msra.mxu0 0.0
    %4568 = vmatprep.subr.mxu0 0.0
    %4569 = vmatpush1.msra.mxu0 0.0
    %4570 = vmatprep.subr.mxu0 0.0
    %4571 = vmatpush1.msra.mxu0 0.0
    %4572 = vmatprep.subr.mxu0 0.0
    %4573 = vmatpush1.msra.mxu0 0.0
    %4574 = vmatprep.subr.mxu0 0.0
    %4575 = vmatpush1.msra.mxu0 0.0
    %4576 = vmatprep.subr.mxu0 0.0
    %4577 = vmatpush1.msra.mxu0 0.0
    %4578 = vmatprep.subr.mxu0 0.0
    %4579 = vmatpush1.msra.mxu0 0.0
    %4580 = vmatprep.subr.mxu0 0.0
    %4581 = vmatpush1.msra.mxu0 0.0
    %4582 = vmatprep.subr.mxu0 0.0
    %4583 = vmatpush1.msra.mxu0 0.0
    %4584 = vmatprep.subr.mxu0 0.0
    %4585 = vmatpush1.msra.mxu0 0.0
    %4586 = vmatprep.subr.mxu0 0.0
    %4587 = vmatpush1.msra.mxu0 0.0
    %4588 = vmatprep.subr.mxu0 0.0
    %4589 = vmatpush1.msra.mxu0 0.0
    %4590 = vmatprep.subr.mxu0 0.0
    %4591 = vmatpush1.msra.mxu0 0.0
    %4592 = vmatprep.subr.mxu0 0.0
    %4593 = vmatpush1.msra.mxu0 0.0
    %4594 = vmatprep.subr.mxu0 0.0
    %4595 = vmatpush1.msra.mxu0 0.0
    %4596 = vmatprep.subr.mxu0 0.0
    %4597 = vmatpush1.msra.mxu0 0.0
    %4598 = vmatprep.subr.mxu0 0.0
    %4599 = vmatpush1.msra.mxu0 0.0
    %4600 = vmatprep.subr.mxu0 0.0
    %4601 = vmatpush1.msra.mxu0 0.0
    %4602 = vmatprep.subr.mxu0 0.0
    %4603 = vmatpush1.msra.mxu0 0.0
    %4604 = vmatprep.subr.mxu0 0.0
    %4605 = vmatpush1.msra.mxu0 0.0
    %4606 = vmatprep.subr.mxu0 0.0
    %4607 = vmatpush1.msra.mxu0 0.0
    %4608 = vmatprep.mubr.f32.mxu0 0.0
    %v4609 = vand.u32 %v4541, 4294901760
    %v4610 = vsub.f32 %v4541, %v4609
    %v4611 = vand.u32 %v4610, 4294901760
    %v4612 = vsub.f32 %v4610, %v4611
    %v4613 = vand.u32 %v4612, 4294901760
    %4614 = vmatmul.mubr.f32.gmra.mrb[0].mxu0 %v4613
    %v4615 = vpop.f32.mrb[0].mxu0
    %v4616 = vadd.f32 0.0, %v4615
    %v4617 = vpop.f32.mrb[0].mxu0
    %4618 = vdwg.mxu0
    %4619 = vmatprep.subr.mxu0 0.0
    %v4620 = vand.u32 %v106, 4294901760
    %v4621 = vsub.f32 %v106, %v4620
    %v4622 = vand.u32 %v4621, 4294901760
    %v4623 = vsub.f32 %v4621, %v4622
    %v4624 = vand.u32 %v4623, 4294901760
    %4625 = vmatpush1.msra.mxu0 %v4624
    %4626 = vmatprep.subr.mxu0 0.0
    %4627 = vmatpush1.msra.mxu0 0.0
    %4628 = vmatprep.subr.mxu0 0.0
    %4629 = vmatpush1.msra.mxu0 0.0
    %4630 = vmatprep.subr.mxu0 0.0
    %4631 = vmatpush1.msra.mxu0 0.0
    %4632 = vmatprep.subr.mxu0 0.0
    %4633 = vmatpush1.msra.mxu0 0.0
    %4634 = vmatprep.subr.mxu0 0.0
    %4635 = vmatpush1.msra.mxu0 0.0
    %4636 = vmatprep.subr.mxu0 0.0
    %4637 = vmatpush1.msra.mxu0 0.0
    %4638 = vmatprep.subr.mxu0 0.0
    %4639 = vmatpush1.msra.mxu0 0.0
    %4640 = vmatprep.subr.mxu0 0.0
    %4641 = vmatpush1.msra.mxu0 0.0
    %4642 = vmatprep.subr.mxu0 0.0
    %4643 = vmatpush1.msra.mxu0 0.0
    %4644 = vmatprep.subr.mxu0 0.0
    %4645 = vmatpush1.msra.mxu0 0.0
    %4646 = vmatprep.subr.mxu0 0.0
    %4647 = vmatpush1.msra.mxu0 0.0
    %4648 = vmatprep.subr.mxu0 0.0
    %4649 = vmatpush1.msra.mxu0 0.0
    %4650 = vmatprep.subr.mxu0 0.0
    %4651 = vmatpush1.msra.mxu0 0.0
    %4652 = vmatprep.subr.mxu0 0.0
    %4653 = vmatpush1.msra.mxu0 0.0
    %4654 = vmatprep.subr.mxu0 0.0
    %4655 = vmatpush1.msra.mxu0 0.0
    %4656 = vmatprep.subr.mxu0 0.0
    %4657 = vmatpush1.msra.mxu0 0.0
    %4658 = vmatprep.subr.mxu0 0.0
    %4659 = vmatpush1.msra.mxu0 0.0
    %4660 = vmatprep.subr.mxu0 0.0
    %4661 = vmatpush1.msra.mxu0 0.0
    %4662 = vmatprep.subr.mxu0 0.0
    %4663 = vmatpush1.msra.mxu0 0.0
    %4664 = vmatprep.subr.mxu0 0.0
    %4665 = vmatpush1.msra.mxu0 0.0
    %4666 = vmatprep.subr.mxu0 0.0
    %4667 = vmatpush1.msra.mxu0 0.0
    %4668 = vmatprep.subr.mxu0 0.0
    %4669 = vmatpush1.msra.mxu0 0.0
    %4670 = vmatprep.subr.mxu0 0.0
    %4671 = vmatpush1.msra.mxu0 0.0
    %4672 = vmatprep.subr.mxu0 0.0
    %4673 = vmatpush1.msra.mxu0 0.0
    %4674 = vmatprep.subr.mxu0 0.0
    %4675 = vmatpush1.msra.mxu0 0.0
    %4676 = vmatprep.subr.mxu0 0.0
    %4677 = vmatpush1.msra.mxu0 0.0
    %4678 = vmatprep.subr.mxu0 0.0
    %4679 = vmatpush1.msra.mxu0 0.0
    %4680 = vmatprep.subr.mxu0 0.0
    %4681 = vmatpush1.msra.mxu0 0.0
    %4682 = vmatprep.subr.mxu0 0.0
    %4683 = vmatpush1.msra.mxu0 0.0
    %4684 = vmatprep.subr.mxu0 0.0
    %4685 = vmatpush1.msra.mxu0 0.0
    %4686 = vmatprep.subr.mxu0 0.0
    %4687 = vmatpush1.msra.mxu0 0.0
    %4688 = vmatprep.mubr.f32.mxu0 0.0
    %v4689 = vand.u32 %v4541, 4294901760
    %4690 = vmatmul.mubr.f32.gmra.mrb[0].mxu0 %v4689
    %v4691 = vpop.f32.mrb[0].mxu0
    %v4692 = vadd.f32 %v4616, %v4691
    %v4693 = vpop.f32.mrb[0].mxu0
    %4694 = vdwg.mxu0
    %4695 = vmatprep.subr.mxu0 0.0
    %v4696 = vand.u32 %v106, 4294901760
    %v4697 = vsub.f32 %v106, %v4696
    %4698 = vmatpush1.msra.mxu0 %v4697
    %4699 = vmatprep.subr.mxu0 0.0
    %4700 = vmatpush1.msra.mxu0 0.0
    %4701 = vmatprep.subr.mxu0 0.0
    %4702 = vmatpush1.msra.mxu0 0.0
    %4703 = vmatprep.subr.mxu0 0.0
    %4704 = vmatpush1.msra.mxu0 0.0
    %4705 = vmatprep.subr.mxu0 0.0
    %4706 = vmatpush1.msra.mxu0 0.0
    %4707 = vmatprep.subr.mxu0 0.0
    %4708 = vmatpush1.msra.mxu0 0.0
    %4709 = vmatprep.subr.mxu0 0.0
    %4710 = vmatpush1.msra.mxu0 0.0
    %4711 = vmatprep.subr.mxu0 0.0
    %4712 = vmatpush1.msra.mxu0 0.0
    %4713 = vmatprep.subr.mxu0 0.0
    %4714 = vmatpush1.msra.mxu0 0.0
    %4715 = vmatprep.subr.mxu0 0.0
    %4716 = vmatpush1.msra.mxu0 0.0
    %4717 = vmatprep.subr.mxu0 0.0
    %4718 = vmatpush1.msra.mxu0 0.0
    %4719 = vmatprep.subr.mxu0 0.0
    %4720 = vmatpush1.msra.mxu0 0.0
    %4721 = vmatprep.subr.mxu0 0.0
    %4722 = vmatpush1.msra.mxu0 0.0
    %4723 = vmatprep.subr.mxu0 0.0
    %4724 = vmatpush1.msra.mxu0 0.0
    %4725 = vmatprep.subr.mxu0 0.0
    %4726 = vmatpush1.msra.mxu0 0.0
    %4727 = vmatprep.subr.mxu0 0.0
    %4728 = vmatpush1.msra.mxu0 0.0
    %4729 = vmatprep.subr.mxu0 0.0
    %4730 = vmatpush1.msra.mxu0 0.0
    %4731 = vmatprep.subr.mxu0 0.0
    %4732 = vmatpush1.msra.mxu0 0.0
    %4733 = vmatprep.subr.mxu0 0.0
    %4734 = vmatpush1.msra.mxu0 0.0
    %4735 = vmatprep.subr.mxu0 0.0
    %4736 = vmatpush1.msra.mxu0 0.0
    %4737 = vmatprep.subr.mxu0 0.0
    %4738 = vmatpush1.msra.mxu0 0.0
    %4739 = vmatprep.subr.mxu0 0.0
    %4740 = vmatpush1.msra.mxu0 0.0
    %4741 = vmatprep.subr.mxu0 0.0
    %4742 = vmatpush1.msra.mxu0 0.0
    %4743 = vmatprep.subr.mxu0 0.0
    %4744 = vmatpush1.msra.mxu0 0.0
    %4745 = vmatprep.subr.mxu0 0.0
    %4746 = vmatpush1.msra.mxu0 0.0
    %4747 = vmatprep.subr.mxu0 0.0
    %4748 = vmatpush1.msra.mxu0 0.0
    %4749 = vmatprep.subr.mxu0 0.0
    %4750 = vmatpush1.msra.mxu0 0.0
    %4751 = vmatprep.subr.mxu0 0.0
    %4752 = vmatpush1.msra.mxu0 0.0
    %4753 = vmatprep.subr.mxu0 0.0
    %4754 = vmatpush1.msra.mxu0 0.0
    %4755 = vmatprep.subr.mxu0 0.0
    %4756 = vmatpush1.msra.mxu0 0.0
    %4757 = vmatprep.subr.mxu0 0.0
    %4758 = vmatpush1.msra.mxu0 0.0
    %4759 = vmatprep.subr.mxu0 0.0
    %4760 = vmatpush1.msra.mxu0 0.0
    %4761 = vmatprep.mubr.f32.mxu0 0.0
    %v4762 = vand.u32 %v4541, 4294901760
    %v4763 = vsub.f32 %v4541, %v4762
    %4764 = vmatmul.mubr.f32.gmra.mrb[0].mxu0 %v4763
    %v4765 = vpop.f32.mrb[0].mxu0
    %v4766 = vadd.f32 %v4692, %v4765
    %v4767 = vpop.f32.mrb[0].mxu0
    %4768 = vdwg.mxu0
    %4769 = vmatprep.subr.mxu0 0.0
    %v4770 = vand.u32 %v106, 4294901760
    %4771 = vmatpush1.msra.mxu0 %v4770
    %4772 = vmatprep.subr.mxu0 0.0
    %4773 = vmatpush1.msra.mxu0 0.0
    %4774 = vmatprep.subr.mxu0 0.0
    %4775 = vmatpush1.msra.mxu0 0.0
    %4776 = vmatprep.subr.mxu0 0.0
    %4777 = vmatpush1.msra.mxu0 0.0
    %4778 = vmatprep.subr.mxu0 0.0
    %4779 = vmatpush1.msra.mxu0 0.0
    %4780 = vmatprep.subr.mxu0 0.0
    %4781 = vmatpush1.msra.mxu0 0.0
    %4782 = vmatprep.subr.mxu0 0.0
    %4783 = vmatpush1.msra.mxu0 0.0
    %4784 = vmatprep.subr.mxu0 0.0
    %4785 = vmatpush1.msra.mxu0 0.0
    %4786 = vmatprep.subr.mxu0 0.0
    %4787 = vmatpush1.msra.mxu0 0.0
    %4788 = vmatprep.subr.mxu0 0.0
    %4789 = vmatpush1.msra.mxu0 0.0
    %4790 = vmatprep.subr.mxu0 0.0
    %4791 = vmatpush1.msra.mxu0 0.0
    %4792 = vmatprep.subr.mxu0 0.0
    %4793 = vmatpush1.msra.mxu0 0.0
    %4794 = vmatprep.subr.mxu0 0.0
    %4795 = vmatpush1.msra.mxu0 0.0
    %4796 = vmatprep.subr.mxu0 0.0
    %4797 = vmatpush1.msra.mxu0 0.0
    %4798 = vmatprep.subr.mxu0 0.0
    %4799 = vmatpush1.msra.mxu0 0.0
    %4800 = vmatprep.subr.mxu0 0.0
    %4801 = vmatpush1.msra.mxu0 0.0
    %4802 = vmatprep.subr.mxu0 0.0
    %4803 = vmatpush1.msra.mxu0 0.0
    %4804 = vmatprep.subr.mxu0 0.0
    %4805 = vmatpush1.msra.mxu0 0.0
    %4806 = vmatprep.subr.mxu0 0.0
    %4807 = vmatpush1.msra.mxu0 0.0
    %4808 = vmatprep.subr.mxu0 0.0
    %4809 = vmatpush1.msra.mxu0 0.0
    %4810 = vmatprep.subr.mxu0 0.0
    %4811 = vmatpush1.msra.mxu0 0.0
    %4812 = vmatprep.subr.mxu0 0.0
    %4813 = vmatpush1.msra.mxu0 0.0
    %4814 = vmatprep.subr.mxu0 0.0
    %4815 = vmatpush1.msra.mxu0 0.0
    %4816 = vmatprep.subr.mxu0 0.0
    %4817 = vmatpush1.msra.mxu0 0.0
    %4818 = vmatprep.subr.mxu0 0.0
    %4819 = vmatpush1.msra.mxu0 0.0
    %4820 = vmatprep.subr.mxu0 0.0
    %4821 = vmatpush1.msra.mxu0 0.0
    %4822 = vmatprep.subr.mxu0 0.0
    %4823 = vmatpush1.msra.mxu0 0.0
    %4824 = vmatprep.subr.mxu0 0.0
    %4825 = vmatpush1.msra.mxu0 0.0
    %4826 = vmatprep.subr.mxu0 0.0
    %4827 = vmatpush1.msra.mxu0 0.0
    %4828 = vmatprep.subr.mxu0 0.0
    %4829 = vmatpush1.msra.mxu0 0.0
    %4830 = vmatprep.subr.mxu0 0.0
    %4831 = vmatpush1.msra.mxu0 0.0
    %4832 = vmatprep.subr.mxu0 0.0
    %4833 = vmatpush1.msra.mxu0 0.0
    %4834 = vmatprep.mubr.f32.mxu0 0.0
    %v4835 = vand.u32 %v4541, 4294901760
    %v4836 = vsub.f32 %v4541, %v4835
    %v4837 = vand.u32 %v4836, 4294901760
    %4838 = vmatmul.mubr.f32.gmra.mrb[0].mxu0 %v4837
    %v4839 = vpop.f32.mrb[0].mxu0
    %v4840 = vadd.f32 %v4766, %v4839
    %v4841 = vpop.f32.mrb[0].mxu0
    %4842 = vdwg.mxu0
    %4843 = vmatprep.subr.mxu0 0.0
    %v4844 = vand.u32 %v106, 4294901760
    %v4845 = vsub.f32 %v106, %v4844
    %v4846 = vand.u32 %v4845, 4294901760
    %4847 = vmatpush1.msra.mxu0 %v4846
    %4848 = vmatprep.subr.mxu0 0.0
    %4849 = vmatpush1.msra.mxu0 0.0
    %4850 = vmatprep.subr.mxu0 0.0
    %4851 = vmatpush1.msra.mxu0 0.0
    %4852 = vmatprep.subr.mxu0 0.0
    %4853 = vmatpush1.msra.mxu0 0.0
    %4854 = vmatprep.subr.mxu0 0.0
    %4855 = vmatpush1.msra.mxu0 0.0
    %4856 = vmatprep.subr.mxu0 0.0
    %4857 = vmatpush1.msra.mxu0 0.0
    %4858 = vmatprep.subr.mxu0 0.0
    %4859 = vmatpush1.msra.mxu0 0.0
    %4860 = vmatprep.subr.mxu0 0.0
    %4861 = vmatpush1.msra.mxu0 0.0
    %4862 = vmatprep.subr.mxu0 0.0
    %4863 = vmatpush1.msra.mxu0 0.0
    %4864 = vmatprep.subr.mxu0 0.0
    %4865 = vmatpush1.msra.mxu0 0.0
    %4866 = vmatprep.subr.mxu0 0.0
    %4867 = vmatpush1.msra.mxu0 0.0
    %4868 = vmatprep.subr.mxu0 0.0
    %4869 = vmatpush1.msra.mxu0 0.0
    %4870 = vmatprep.subr.mxu0 0.0
    %4871 = vmatpush1.msra.mxu0 0.0
    %4872 = vmatprep.subr.mxu0 0.0
    %4873 = vmatpush1.msra.mxu0 0.0
    %4874 = vmatprep.subr.mxu0 0.0
    %4875 = vmatpush1.msra.mxu0 0.0
    %4876 = vmatprep.subr.mxu0 0.0
    %4877 = vmatpush1.msra.mxu0 0.0
    %4878 = vmatprep.subr.mxu0 0.0
    %4879 = vmatpush1.msra.mxu0 0.0
    %4880 = vmatprep.subr.mxu0 0.0
    %4881 = vmatpush1.msra.mxu0 0.0
    %4882 = vmatprep.subr.mxu0 0.0
    %4883 = vmatpush1.msra.mxu0 0.0
    %4884 = vmatprep.subr.mxu0 0.0
    %4885 = vmatpush1.msra.mxu0 0.0
    %4886 = vmatprep.subr.mxu0 0.0
    %4887 = vmatpush1.msra.mxu0 0.0
    %4888 = vmatprep.subr.mxu0 0.0
    %4889 = vmatpush1.msra.mxu0 0.0
    %4890 = vmatprep.subr.mxu0 0.0
    %4891 = vmatpush1.msra.mxu0 0.0
    %4892 = vmatprep.subr.mxu0 0.0
    %4893 = vmatpush1.msra.mxu0 0.0
    %4894 = vmatprep.subr.mxu0 0.0
    %4895 = vmatpush1.msra.mxu0 0.0
    %4896 = vmatprep.subr.mxu0 0.0
    %4897 = vmatpush1.msra.mxu0 0.0
    %4898 = vmatprep.subr.mxu0 0.0
    %4899 = vmatpush1.msra.mxu0 0.0
    %4900 = vmatprep.subr.mxu0 0.0
    %4901 = vmatpush1.msra.mxu0 0.0
    %4902 = vmatprep.subr.mxu0 0.0
    %4903 = vmatpush1.msra.mxu0 0.0
    %4904 = vmatprep.subr.mxu0 0.0
    %4905 = vmatpush1.msra.mxu0 0.0
    %4906 = vmatprep.subr.mxu0 0.0
    %4907 = vmatpush1.msra.mxu0 0.0
    %4908 = vmatprep.subr.mxu0 0.0
    %4909 = vmatpush1.msra.mxu0 0.0
    %4910 = vmatprep.mubr.f32.mxu0 0.0
    %v4911 = vand.u32 %v4541, 4294901760
    %4912 = vmatmul.mubr.f32.gmra.mrb[0].mxu0 %v4911
    %v4913 = vpop.f32.mrb[0].mxu0
    %v4914 = vadd.f32 %v4840, %v4913
    %v4915 = vpop.f32.mrb[0].mxu0
    %4916 = vdwg.mxu0
    %4917 = vmatprep.subr.mxu0 0.0
    %v4918 = vand.u32 %v106, 4294901760
    %4919 = vmatpush1.msra.mxu0 %v4918
    %4920 = vmatprep.subr.mxu0 0.0
    %4921 = vmatpush1.msra.mxu0 0.0
    %4922 = vmatprep.subr.mxu0 0.0
    %4923 = vmatpush1.msra.mxu0 0.0
    %4924 = vmatprep.subr.mxu0 0.0
    %4925 = vmatpush1.msra.mxu0 0.0
    %4926 = vmatprep.subr.mxu0 0.0
    %4927 = vmatpush1.msra.mxu0 0.0
    %4928 = vmatprep.subr.mxu0 0.0
    %4929 = vmatpush1.msra.mxu0 0.0
    %4930 = vmatprep.subr.mxu0 0.0
    %4931 = vmatpush1.msra.mxu0 0.0
    %4932 = vmatprep.subr.mxu0 0.0
    %4933 = vmatpush1.msra.mxu0 0.0
    %4934 = vmatprep.subr.mxu0 0.0
    %4935 = vmatpush1.msra.mxu0 0.0
    %4936 = vmatprep.subr.mxu0 0.0
    %4937 = vmatpush1.msra.mxu0 0.0
    %4938 = vmatprep.subr.mxu0 0.0
    %4939 = vmatpush1.msra.mxu0 0.0
    %4940 = vmatprep.subr.mxu0 0.0
    %4941 = vmatpush1.msra.mxu0 0.0
    %4942 = vmatprep.subr.mxu0 0.0
    %4943 = vmatpush1.msra.mxu0 0.0
    %4944 = vmatprep.subr.mxu0 0.0
    %4945 = vmatpush1.msra.mxu0 0.0
    %4946 = vmatprep.subr.mxu0 0.0
    %4947 = vmatpush1.msra.mxu0 0.0
    %4948 = vmatprep.subr.mxu0 0.0
    %4949 = vmatpush1.msra.mxu0 0.0
    %4950 = vmatprep.subr.mxu0 0.0
    %4951 = vmatpush1.msra.mxu0 0.0
    %4952 = vmatprep.subr.mxu0 0.0
    %4953 = vmatpush1.msra.mxu0 0.0
    %4954 = vmatprep.subr.mxu0 0.0
    %4955 = vmatpush1.msra.mxu0 0.0
    %4956 = vmatprep.subr.mxu0 0.0
    %4957 = vmatpush1.msra.mxu0 0.0
    %4958 = vmatprep.subr.mxu0 0.0
    %4959 = vmatpush1.msra.mxu0 0.0
    %4960 = vmatprep.subr.mxu0 0.0
    %4961 = vmatpush1.msra.mxu0 0.0
    %4962 = vmatprep.subr.mxu0 0.0
    %4963 = vmatpush1.msra.mxu0 0.0
    %4964 = vmatprep.subr.mxu0 0.0
    %4965 = vmatpush1.msra.mxu0 0.0
    %4966 = vmatprep.subr.mxu0 0.0
    %4967 = vmatpush1.msra.mxu0 0.0
    %4968 = vmatprep.subr.mxu0 0.0
    %4969 = vmatpush1.msra.mxu0 0.0
    %4970 = vmatprep.subr.mxu0 0.0
    %4971 = vmatpush1.msra.mxu0 0.0
    %4972 = vmatprep.subr.mxu0 0.0
    %4973 = vmatpush1.msra.mxu0 0.0
    %4974 = vmatprep.subr.mxu0 0.0
    %4975 = vmatpush1.msra.mxu0 0.0
    %4976 = vmatprep.subr.mxu0 0.0
    %4977 = vmatpush1.msra.mxu0 0.0
    %4978 = vmatprep.subr.mxu0 0.0
    %4979 = vmatpush1.msra.mxu0 0.0
    %4980 = vmatprep.subr.mxu0 0.0
    %4981 = vmatpush1.msra.mxu0 0.0
    %4982 = vmatprep.mubr.f32.mxu0 0.0
    %v4983 = vand.u32 %v4541, 4294901760
    %4984 = vmatmul.mubr.f32.gmra.mrb[0].mxu0 %v4983
    %v4985 = vpop.f32.mrb[0].mxu0
    %v4986 = vadd.f32 %v4914, %v4985
    %v4987 = vpop.f32.mrb[0].mxu0
    %4988 = vdwg.mxu0
    %v4989 = vadd.f32 %v3898, %v4986
    %v4990 = vsel %vm89, %v4989, 0.0
    %4991 = vst [vmem:[%s4] sm:$0x3] %v4990
    // Predicated region
    $region22: #{ml1d_forward.1} parent=1 // pred_check
      _
    $region23: #{ml1d_forward.1} parent=1 // pred_check_branch
      %4993 = sbr.rel (0) target = $region25
    $region24: #{ml1d_forward.1} parent=1 // pred_region
      _
    $region25: #{ml1d_forward.1} parent=1 // pred_fallthru
      _
    // Predicated region
    $region26: #{ml1d_forward.1} parent=1 // pred_check
      _
    $region27: #{ml1d_forward.1} parent=1 // pred_check_branch
      %4995 = sbr.rel (0) target = $region29
    $region28: #{ml1d_forward.1} parent=1 // pred_region
      _
    $region29: #{ml1d_forward.1} parent=1 // pred_fallthru
      _
    %4996 = vsyncpa [#allocation3], 1

</llo_original>
